<compile_context>
chip_gen: v7x
topology: tpu7x:2x2x1
jax: 0.10.0
libtpu: 0.0.40
codegen_flags: <defaults>
</compile_context>

<pallas_src>
import functools
import math

import jax
import jax.numpy as jnp
from jax import lax
from jax.experimental import pallas as pl
from jax.experimental.pallas import tpu as pltpu


_TAPS = tuple((dy, dx) for dy in (-1, 0, 1) for dx in (-1, 0, 1))  # t = (dy+1)*3+(dx+1) = kh*3+kw


def _gelu(x):
    # exact erf-based GELU (nn.GELU default)
    return 0.5 * x * (1.0 + lax.erf(x * (1.0 / math.sqrt(2.0))))


def _make_tap_masks(H, W):
    """(1, P) validity mask per 3x3 tap (None for the centre tap).  Built ONCE per kernel
    body from a single lane iota and shared by all three tap-stacking sites."""
    P = H * W
    p = lax.broadcasted_iota(jnp.int32, (1, P), 1)
    if W & (W - 1) == 0:
        j = jnp.bitwise_and(p, W - 1)          # W power of two: cheap bit-and
    else:
        j = p % W
    masks = []
    for dy, dx in _TAPS:
        if dy == 0 and dx == 0:
            masks.append(None)
            continue
        valid = None
        if dy == -1:
            valid = p >= W                      # row i-1 >= 0
        elif dy == 1:
            valid = p < P - W                   # row i+1 <  H
        if dx == -1:
            vj = j >= 1
            valid = vj if valid is None else valid & vj
        elif dx == 1:
            vj = j < W - 1
            valid = vj if valid is None else valid & vj
        masks.append(valid)
    return masks


def _stack_taps(z, masks, H, W):
    """z: (C, P) with P = H*W, pixels on lanes.  Returns the (9C, P) stack of the nine
    zero-padded 3x3 neighbour shifts of z (tap-major, t = kh*3 + kw), matching the
    host-side tap-major weight folding.  Shifts are static XLU lane rotations."""
    P = H * W
    slabs = []
    for t, (dy, dx) in enumerate(_TAPS):
        s = dy * W + dx
        if s == 0:
            slabs.append(z)
            continue
        r = pltpu.roll(z, shift=(-s) % P, axis=1)       # r[:, p] = z[:, (p + s) % P]
        slabs.append(jnp.where(masks[t], r, 0.0))       # zero out-of-image neighbours
    return jnp.concatenate(slabs, axis=0)                # (9C, P)


def _attn_ffn_kernel(H, W, inv_scale,
                     x_ref,
                     wenc_ref, b1_ref, w2_ref, b2_ref,
                     wqkv_ref, bqkv_ref,
                     wproj_ref, sp_ref, tp_ref,
                     tmat_ref, smat_ref,
                     y_ref):
    """Fully fused AttnFFN forward for one image: all intermediates stay in VMEM."""
    f32 = jnp.float32
    x = x_ref[0].astype(f32)                             # (C, P)  pixels on the 128-lane axis
    C = x.shape[0]
    cdt = wenc_ref.dtype                                  # MXU operand dtype (f32 or bf16 knob)
    masks = _make_tap_masks(H, W)

    # --- ConvEncoder: dwconv3x3 (+bias) + BN + pwconv1 folded into ONE (C,9C)@(9C,P) dot ---
    xt = _stack_taps(x, masks, H, W).astype(cdt)
    h = jnp.dot(wenc_ref[...], xt, preferred_element_type=f32) + b1_ref[...]
    h = _gelu(h)
    ce = jnp.dot(w2_ref[...], h.astype(cdt), preferred_element_type=f32) + b2_ref[...]
    x1 = x + ce                                           # residual 1

    # --- qkv = BN(conv3x3(x1)) : one (3C,9C)@(9C,P) dot (BN folded host-side) ---
    x1t = _stack_taps(x1, masks, H, W).astype(cdt)
    qkv = jnp.dot(wqkv_ref[...], x1t, preferred_element_type=f32) + bqkv_ref[...]
    q = qkv[:C]
    k = qkv[C:2 * C]
    v = qkv[2 * C:]

    # --- attention, lane-dense in (C, P): spatial k-transpose and per-row segment sums as
    #     tiny constant-matrix MXU matmuls; softmax stays in f32 ---
    kt = jnp.dot(k, tmat_ref[...], preferred_element_type=f32)     # kt[:, i*W+j] = k[:, j*W+i]
    s = q * kt * inv_scale
    m = jnp.max(s, axis=-1, keepdims=True)                # row max: cancels exactly in softmax
    e = jnp.exp(s - m)
    denom = jnp.dot(e, smat_ref[...], preferred_element_type=f32)  # per-(c,row) sums, lane-broadcast
    # pl.reciprocal keeps the divide on the EUP; approx=True is the faster (looser) knob.
    o = e * pl.reciprocal(denom, approx=False) * v        # A * v  (focusing_factor folded into wproj)

    # --- proj: conv3x3 -> GELU -> BN affine, + residual x1 ---
    ot = _stack_taps(o, masks, H, W).astype(cdt)
    g = _gelu(jnp.dot(wproj_ref[...], ot, preferred_element_type=f32))
    y_ref[0] = (g * sp_ref[...] + tp_ref[...] + x1).astype(y_ref.dtype)


def attn_ffn_forward(x_nchw, params, *, use_bf16_matmul=False):
    """AttnFFN forward (inference semantics).  x_nchw: [B, C, H, W] float32."""
    B, C, H, W = x_nchw.shape
    assert H == W, "q * k.transpose(-1,-2) in the reference module requires H == W"
    assert C % 4 == 0, "dim must be divisible by num_heads=4"
    P = H * W
    eps = 1e-5
    p = params
    f32 = jnp.float32
    cdt = jnp.bfloat16 if use_bf16_matmul else f32        # MXU operand dtype (v6e/v7x knob)
    dtype = x_nchw.dtype

    # ---- host-side parameter folding (tiny, once per call) ----
    # ConvEncoder: fold dwconv bias + BatchNorm + pwconv1 into ONE tap-major (C, 9C) weight.
    s_ce = p["ce_gamma"] / jnp.sqrt(p["ce_var"] + eps)
    t_ce = p["ce_beta"] - p["ce_mean"] * s_ce
    u_ce = p["dw_b"] * s_ce + t_ce                                    # (C,)
    dww = p["dw_w"].reshape(C, 9).astype(f32)                         # (C,1,3,3) -> (C,9), t=kh*3+kw
    w1 = p["pw1_w"].reshape(C, C).astype(f32)
    w1s = w1 * s_ce[None, :]
    wenc = jnp.concatenate([w1s * dww[:, t][None, :] for t in range(9)], axis=1).astype(cdt)  # (C,9C)
    b1f = (w1 @ u_ce + p["pw1_b"]).reshape(C, 1).astype(f32)
    w2 = p["pw2_w"].reshape(C, C).astype(cdt)
    b2 = p["pw2_b"].reshape(C, 1).astype(f32)

    # qkv conv (bias=False) + BatchNorm folded -> tap-major (3C, 9C) weight + bias.
    s_q = p["qkv_gamma"] / jnp.sqrt(p["qkv_var"] + eps)               # (3C,)
    t_q = p["qkv_beta"] - p["qkv_mean"] * s_q
    wq = jnp.transpose(p["qkv_w"], (2, 3, 0, 1)).reshape(9, 3 * C, C) * s_q[None, :, None]
    wqkv = jnp.transpose(wq, (1, 0, 2)).reshape(3 * C, 9 * C).astype(cdt)
    bqkv = t_q.reshape(3 * C, 1).astype(f32)

    # proj conv (bias=False) -> GELU -> BN (cannot fold across GELU: keep affine).
    # focusing_factor multiplies v BEFORE the linear conv -> fold it into the conv weights.
    wp = jnp.transpose(p["proj_w"], (2, 3, 0, 1)).reshape(9, C, C)
    wproj = (jnp.transpose(wp, (1, 0, 2)).reshape(C, 9 * C) * p["ff"][0]).astype(cdt)
    s_pr = p["proj_gamma"] / jnp.sqrt(p["proj_var"] + eps)
    sp = s_pr.reshape(C, 1).astype(f32)
    tp = (p["proj_beta"] - p["proj_mean"] * s_pr).reshape(C, 1).astype(f32)

    # attention helpers: spatial-transpose permutation matrix and per-row segment-sum matrix
    idx = jnp.arange(P, dtype=jnp.int32)
    i_idx, j_idx = idx // W, idx % W
    perm = j_idx * W + i_idx                                          # source lane of transposed k
    tmat = (idx[:, None] == perm[None, :]).astype(f32)                # kt = k @ tmat
    smat = (i_idx[:, None] == i_idx[None, :]).astype(f32)             # denom = e @ smat

    inv_scale = 1.0 / math.sqrt(C // 4)                               # num_heads = 4

    # NCHW -> (B, C, H*W): contiguous (free) reshape, no transpose / extra HBM pass.
    x2 = x_nchw.reshape(B, C, P)

    # ---- ONE fused kernel: ConvEncoder + residual, qkv, attention, proj + residual ----
    # Per-image working set (weights + stacked tap slabs + qkv) is a few MiB, far below the
    # default scoped VMEM on all of v5e/v6e/v7x, so no vmem_limit_bytes override is needed.
    y = pl.pallas_call(
        functools.partial(_attn_ffn_kernel, H, W, inv_scale),
        out_shape=jax.ShapeDtypeStruct((B, C, P), dtype),
        grid_spec=pltpu.PrefetchScalarGridSpec(
            num_scalar_prefetch=0,
            grid=(B,),
            in_specs=[
                pl.BlockSpec((1, C, P), lambda b: (b, 0, 0)),          # x (pixels on lanes)
                pl.BlockSpec((C, 9 * C), lambda b: (0, 0)),            # fused dw+BN+pwconv1 weight
                pl.BlockSpec((C, 1), lambda b: (0, 0)),                # folded pwconv1 bias
                pl.BlockSpec((C, C), lambda b: (0, 0)),                # pwconv2 weight
                pl.BlockSpec((C, 1), lambda b: (0, 0)),                # pwconv2 bias
                pl.BlockSpec((3 * C, 9 * C), lambda b: (0, 0)),        # qkv conv (BN folded)
                pl.BlockSpec((3 * C, 1), lambda b: (0, 0)),            # qkv bias (from BN)
                pl.BlockSpec((C, 9 * C), lambda b: (0, 0)),            # proj conv (ff folded)
                pl.BlockSpec((C, 1), lambda b: (0, 0)),                # proj BN scale
                pl.BlockSpec((C, 1), lambda b: (0, 0)),                # proj BN shift
                pl.BlockSpec((P, P), lambda b: (0, 0)),                # spatial-transpose matrix
                pl.BlockSpec((P, P), lambda b: (0, 0)),                # segment-sum matrix
            ],
            out_specs=pl.BlockSpec((1, C, P), lambda b: (b, 0, 0)),
        ),
        compiler_params=pltpu.CompilerParams(dimension_semantics=("parallel",)),
    )(x2, wenc, b1f, w2, b2, wqkv, bqkv, wproj, sp, tp, tmat, smat)

    return y.reshape(B, C, H, W)


def reference_forward(x, params):
    """Pure-JAX reference (eval-mode PyTorch semantics) for validation."""
    eps = 1e-5
    p = params
    C = x.shape[1]

    def conv(inp, w, padding, groups=1):
        return lax.conv_general_dilated(
            inp, w, window_strides=(1, 1),
            padding=[(padding, padding), (padding, padding)],
            dimension_numbers=("NCHW", "OIHW", "NCHW"),
            feature_group_count=groups)

    def bn(inp, g, b, m, v):
        s = g / jnp.sqrt(v + eps)
        return inp * s.reshape(1, -1, 1, 1) + (b - m * s).reshape(1, -1, 1, 1)

    # ConvEncoder branch + residual
    d = conv(x, p["dw_w"], padding=1, groups=C) + p["dw_b"].reshape(1, -1, 1, 1)
    n = bn(d, p["ce_gamma"], p["ce_beta"], p["ce_mean"], p["ce_var"])
    h = conv(n, p["pw1_w"], padding=0) + p["pw1_b"].reshape(1, -1, 1, 1)
    h = _gelu(h)
    c = conv(h, p["pw2_w"], padding=0) + p["pw2_b"].reshape(1, -1, 1, 1)
    x1 = x + c

    # Attention branch + residual
    qkv = bn(conv(x1, p["qkv_w"], padding=1),
             p["qkv_gamma"], p["qkv_beta"], p["qkv_mean"], p["qkv_var"])
    q, k, v = qkv[:, :C], qkv[:, C:2 * C], qkv[:, 2 * C:]
    scores = q * jnp.swapaxes(k, -1, -2) / math.sqrt(C // 4)
    a = jax.nn.softmax(scores, axis=-1)
    out = a * p["ff"] * v
    pr = bn(_gelu(conv(out, p["proj_w"], padding=1)),
            p["proj_gamma"], p["proj_beta"], p["proj_mean"], p["proj_var"])
    return x1 + pr


def init_params(key, dim):
    C = dim
    ks = jax.random.split(key, 20)
    uni = lambda k, n: jax.random.uniform(k, (n,), jnp.float32, 0.5, 1.5)
    nrm = lambda k, shape, s: jax.random.normal(k, shape, jnp.float32) * s
    return {
        # ConvEncoder: dwconv3x3(groups=C, bias) -> BN -> pwconv1 -> GELU -> pwconv2
        "dw_w": nrm(ks[0], (C, 1, 3, 3), 1.0 / 3.0),
        "dw_b": nrm(ks[1], (C,), 0.02),
        "ce_gamma": uni(ks[2], C), "ce_beta": nrm(ks[3], (C,), 0.1),
        "ce_mean": nrm(ks[4], (C,), 0.1), "ce_var": uni(ks[5], C),
        "pw1_w": nrm(ks[6], (C, C, 1, 1), 1.0 / math.sqrt(C)),
        "pw1_b": nrm(ks[7], (C,), 0.02),
        "pw2_w": nrm(ks[8], (C, C, 1, 1), 1.0 / math.sqrt(C)),
        "pw2_b": nrm(ks[9], (C,), 0.02),
        # MultiheadAttention: qkv = BN(conv3x3, bias=False); proj = BN(GELU(conv3x3, bias=False))
        "qkv_w": nrm(ks[10], (3 * C, C, 3, 3), 0.02),
        "qkv_gamma": uni(ks[11], 3 * C), "qkv_beta": nrm(ks[12], (3 * C,), 0.1),
        "qkv_mean": nrm(ks[13], (3 * C,), 0.1), "qkv_var": uni(ks[14], 3 * C),
        "proj_w": nrm(ks[15], (C, C, 3, 3), 0.02),
        "proj_gamma": uni(ks[16], C), "proj_beta": nrm(ks[17], (C,), 0.1),
        "proj_mean": nrm(ks[18], (C,), 0.1), "proj_var": uni(ks[19], C),
        # focusing_factor: PyTorch initializes it to 0; use a nonzero value so the
        # softmax path is numerically exercised (it is a learnable parameter).
        "ff": jnp.array([0.3], jnp.float32),
    }


if __name__ == "__main__":
    key = jax.random.PRNGKey(0)
    k_x, k_p = jax.random.split(key)

    B, C, H, W = 2, 64, 16, 16          # dim=64 (divisible by num_heads=4), square spatial
    x = jax.random.normal(k_x, (B, C, H, W), jnp.float32)
    params = init_params(k_p, C)

    # use_bf16_matmul=True is the v6e/v7x MXU knob; kept False here for exact f32 validation.
    fwd = jax.jit(functools.partial(attn_ffn_forward, use_bf16_matmul=False))
    out = jax.block_until_ready(fwd(x, params))
    ref = jax.block_until_ready(reference_forward(x, params))

    assert out.shape == (B, C, H, W)
    max_err = float(jnp.max(jnp.abs(out - ref)))
    assert jnp.allclose(out, ref, atol=2e-3, rtol=2e-3), f"mismatch vs reference (max abs err {max_err:e})"

    print("KERNEL_OK")
</pallas_src>

<mosaic_0001>
module attributes {stable_mosaic.version = 11 : i64} {
  func.func @_attn_ffn_kernel(%arg0: i32, %arg1: memref<1x64x256xf32, #tpu.memory_space<vmem>>, %arg2: memref<64x576xf32, #tpu.memory_space<vmem>>, %arg3: memref<64x1xf32, #tpu.memory_space<vmem>>, %arg4: memref<64x64xf32, #tpu.memory_space<vmem>>, %arg5: memref<64x1xf32, #tpu.memory_space<vmem>>, %arg6: memref<192x576xf32, #tpu.memory_space<vmem>>, %arg7: memref<192x1xf32, #tpu.memory_space<vmem>>, %arg8: memref<64x576xf32, #tpu.memory_space<vmem>>, %arg9: memref<64x1xf32, #tpu.memory_space<vmem>>, %arg10: memref<64x1xf32, #tpu.memory_space<vmem>>, %arg11: memref<256x256xf32, #tpu.memory_space<vmem>>, %arg12: memref<256x256xf32, #tpu.memory_space<vmem>>, %arg13: memref<1x64x256xf32, #tpu.memory_space<vmem>>) attributes {dimension_semantics = [#tpu.dimension_semantics<parallel>], iteration_bounds = array<i64: 2>, scalar_prefetch = 0 : i64, scratch_operands = 0 : i64, tpu.core_type = #tpu.core_type<tc>, window_params = [{transform_indices = @transform_0, window_bounds = array<i64: 1, 64, 256>}, {pipeline_mode = #tpu.pipeline_mode<synchronous>, transform_indices = @transform_1, window_bounds = array<i64: 64, 576>}, {pipeline_mode = #tpu.pipeline_mode<synchronous>, transform_indices = @transform_2, window_bounds = array<i64: 64, 1>}, {pipeline_mode = #tpu.pipeline_mode<synchronous>, transform_indices = @transform_3, window_bounds = array<i64: 64, 64>}, {pipeline_mode = #tpu.pipeline_mode<synchronous>, transform_indices = @transform_4, window_bounds = array<i64: 64, 1>}, {pipeline_mode = #tpu.pipeline_mode<synchronous>, transform_indices = @transform_5, window_bounds = array<i64: 192, 576>}, {pipeline_mode = #tpu.pipeline_mode<synchronous>, transform_indices = @transform_6, window_bounds = array<i64: 192, 1>}, {pipeline_mode = #tpu.pipeline_mode<synchronous>, transform_indices = @transform_7, window_bounds = array<i64: 64, 576>}, {pipeline_mode = #tpu.pipeline_mode<synchronous>, transform_indices = @transform_8, window_bounds = array<i64: 64, 1>}, {pipeline_mode = #tpu.pipeline_mode<synchronous>, transform_indices = @transform_9, window_bounds = array<i64: 64, 1>}, {pipeline_mode = #tpu.pipeline_mode<synchronous>, transform_indices = @transform_10, window_bounds = array<i64: 256, 256>}, {pipeline_mode = #tpu.pipeline_mode<synchronous>, transform_indices = @transform_11, window_bounds = array<i64: 256, 256>}, {transform_indices = @transform_12, window_bounds = array<i64: 1, 64, 256>}]} {
    %c0 = arith.constant 0 : index
    %c0_0 = arith.constant 0 : index
    %c0_1 = arith.constant 0 : index
    %0 = vector.load %arg1[%c0, %c0_0, %c0_1] : memref<1x64x256xf32, #tpu.memory_space<vmem>>, vector<1x64x256xf32>
    %1 = vector.shape_cast %0 : vector<1x64x256xf32> to vector<64x256xf32>
    %2 = tpu.iota {dimensions = array<i32: 1>} : vector<1x256xi32>
    %c15_i32 = arith.constant 15 : i32
    %3 = vector.broadcast %c15_i32 : i32 to vector<1x256xi32>
    %4 = arith.andi %2, %3 : vector<1x256xi32>
    %c16_i32 = arith.constant 16 : i32
    %5 = vector.broadcast %c16_i32 : i32 to vector<1x256xi32>
    %6 = arith.cmpi sge, %2, %5 : vector<1x256xi32>
    %c1_i32 = arith.constant 1 : i32
    %7 = vector.broadcast %c1_i32 : i32 to vector<1x256xi32>
    %8 = arith.cmpi sge, %4, %7 : vector<1x256xi32>
    %9 = arith.andi %6, %8 : vector<1x256xi1>
    %c16_i32_2 = arith.constant 16 : i32
    %10 = vector.broadcast %c16_i32_2 : i32 to vector<1x256xi32>
    %11 = arith.cmpi sge, %2, %10 : vector<1x256xi32>
    %c16_i32_3 = arith.constant 16 : i32
    %12 = vector.broadcast %c16_i32_3 : i32 to vector<1x256xi32>
    %13 = arith.cmpi sge, %2, %12 : vector<1x256xi32>
    %c15_i32_4 = arith.constant 15 : i32
    %14 = vector.broadcast %c15_i32_4 : i32 to vector<1x256xi32>
    %15 = arith.cmpi slt, %4, %14 : vector<1x256xi32>
    %16 = arith.andi %13, %15 : vector<1x256xi1>
    %c1_i32_5 = arith.constant 1 : i32
    %17 = vector.broadcast %c1_i32_5 : i32 to vector<1x256xi32>
    %18 = arith.cmpi sge, %4, %17 : vector<1x256xi32>
    %c15_i32_6 = arith.constant 15 : i32
    %19 = vector.broadcast %c15_i32_6 : i32 to vector<1x256xi32>
    %20 = arith.cmpi slt, %4, %19 : vector<1x256xi32>
    %c240_i32 = arith.constant 240 : i32
    %21 = vector.broadcast %c240_i32 : i32 to vector<1x256xi32>
    %22 = arith.cmpi slt, %2, %21 : vector<1x256xi32>
    %c1_i32_7 = arith.constant 1 : i32
    %23 = vector.broadcast %c1_i32_7 : i32 to vector<1x256xi32>
    %24 = arith.cmpi sge, %4, %23 : vector<1x256xi32>
    %25 = arith.andi %22, %24 : vector<1x256xi1>
    %c240_i32_8 = arith.constant 240 : i32
    %26 = vector.broadcast %c240_i32_8 : i32 to vector<1x256xi32>
    %27 = arith.cmpi slt, %2, %26 : vector<1x256xi32>
    %c240_i32_9 = arith.constant 240 : i32
    %28 = vector.broadcast %c240_i32_9 : i32 to vector<1x256xi32>
    %29 = arith.cmpi slt, %2, %28 : vector<1x256xi32>
    %c15_i32_10 = arith.constant 15 : i32
    %30 = vector.broadcast %c15_i32_10 : i32 to vector<1x256xi32>
    %31 = arith.cmpi slt, %4, %30 : vector<1x256xi32>
    %32 = arith.andi %29, %31 : vector<1x256xi1>
    %c17_i32 = arith.constant 17 : i32
    %33 = tpu.dynamic_rotate %1 by %c17_i32 dim 1 : vector<64x256xf32>, i32 -> vector<64x256xf32>
    %cst = arith.constant 0.000000e+00 : f32
    %34 = vector.shape_cast %9 : vector<1x256xi1> to vector<1x256xi1>
    %35 = vector.broadcast %34 : vector<1x256xi1> to vector<64x256xi1>
    %36 = vector.broadcast %cst : f32 to vector<64x256xf32>
    %37 = arith.select %35, %33, %36 : vector<64x256xi1>, vector<64x256xf32>
    %c16_i32_11 = arith.constant 16 : i32
    %38 = tpu.dynamic_rotate %1 by %c16_i32_11 dim 1 : vector<64x256xf32>, i32 -> vector<64x256xf32>
    %cst_12 = arith.constant 0.000000e+00 : f32
    %39 = vector.shape_cast %11 : vector<1x256xi1> to vector<1x256xi1>
    %40 = vector.broadcast %39 : vector<1x256xi1> to vector<64x256xi1>
    %41 = vector.broadcast %cst_12 : f32 to vector<64x256xf32>
    %42 = arith.select %40, %38, %41 : vector<64x256xi1>, vector<64x256xf32>
    %c15_i32_13 = arith.constant 15 : i32
    %43 = tpu.dynamic_rotate %1 by %c15_i32_13 dim 1 : vector<64x256xf32>, i32 -> vector<64x256xf32>
    %cst_14 = arith.constant 0.000000e+00 : f32
    %44 = vector.shape_cast %16 : vector<1x256xi1> to vector<1x256xi1>
    %45 = vector.broadcast %44 : vector<1x256xi1> to vector<64x256xi1>
    %46 = vector.broadcast %cst_14 : f32 to vector<64x256xf32>
    %47 = arith.select %45, %43, %46 : vector<64x256xi1>, vector<64x256xf32>
    %c1_i32_15 = arith.constant 1 : i32
    %48 = tpu.dynamic_rotate %1 by %c1_i32_15 dim 1 : vector<64x256xf32>, i32 -> vector<64x256xf32>
    %cst_16 = arith.constant 0.000000e+00 : f32
    %49 = vector.shape_cast %18 : vector<1x256xi1> to vector<1x256xi1>
    %50 = vector.broadcast %49 : vector<1x256xi1> to vector<64x256xi1>
    %51 = vector.broadcast %cst_16 : f32 to vector<64x256xf32>
    %52 = arith.select %50, %48, %51 : vector<64x256xi1>, vector<64x256xf32>
    %c255_i32 = arith.constant 255 : i32
    %53 = tpu.dynamic_rotate %1 by %c255_i32 dim 1 : vector<64x256xf32>, i32 -> vector<64x256xf32>
    %cst_17 = arith.constant 0.000000e+00 : f32
    %54 = vector.shape_cast %20 : vector<1x256xi1> to vector<1x256xi1>
    %55 = vector.broadcast %54 : vector<1x256xi1> to vector<64x256xi1>
    %56 = vector.broadcast %cst_17 : f32 to vector<64x256xf32>
    %57 = arith.select %55, %53, %56 : vector<64x256xi1>, vector<64x256xf32>
    %c241_i32 = arith.constant 241 : i32
    %58 = tpu.dynamic_rotate %1 by %c241_i32 dim 1 : vector<64x256xf32>, i32 -> vector<64x256xf32>
    %cst_18 = arith.constant 0.000000e+00 : f32
    %59 = vector.shape_cast %25 : vector<1x256xi1> to vector<1x256xi1>
    %60 = vector.broadcast %59 : vector<1x256xi1> to vector<64x256xi1>
    %61 = vector.broadcast %cst_18 : f32 to vector<64x256xf32>
    %62 = arith.select %60, %58, %61 : vector<64x256xi1>, vector<64x256xf32>
    %c240_i32_19 = arith.constant 240 : i32
    %63 = tpu.dynamic_rotate %1 by %c240_i32_19 dim 1 : vector<64x256xf32>, i32 -> vector<64x256xf32>
    %cst_20 = arith.constant 0.000000e+00 : f32
    %64 = vector.shape_cast %27 : vector<1x256xi1> to vector<1x256xi1>
    %65 = vector.broadcast %64 : vector<1x256xi1> to vector<64x256xi1>
    %66 = vector.broadcast %cst_20 : f32 to vector<64x256xf32>
    %67 = arith.select %65, %63, %66 : vector<64x256xi1>, vector<64x256xf32>
    %c239_i32 = arith.constant 239 : i32
    %68 = tpu.dynamic_rotate %1 by %c239_i32 dim 1 : vector<64x256xf32>, i32 -> vector<64x256xf32>
    %cst_21 = arith.constant 0.000000e+00 : f32
    %69 = vector.shape_cast %32 : vector<1x256xi1> to vector<1x256xi1>
    %70 = vector.broadcast %69 : vector<1x256xi1> to vector<64x256xi1>
    %71 = vector.broadcast %cst_21 : f32 to vector<64x256xf32>
    %72 = arith.select %70, %68, %71 : vector<64x256xi1>, vector<64x256xf32>
    %73 = tpu.concatenate %37, %42, %47, %52, %1, %57, %62, %67, %72 in 0 : vector<64x256xf32>, vector<64x256xf32>, vector<64x256xf32>, vector<64x256xf32>, vector<64x256xf32>, vector<64x256xf32>, vector<64x256xf32>, vector<64x256xf32>, vector<64x256xf32> -> vector<576x256xf32>
    %c0_22 = arith.constant 0 : index
    %c0_23 = arith.constant 0 : index
    %74 = vector.load %arg2[%c0_22, %c0_23] : memref<64x576xf32, #tpu.memory_space<vmem>>, vector<64x576xf32>
    %cst_24 = arith.constant dense<0.000000e+00> : vector<64x256xf32>
    %75 = tpu.matmul %74, %73, %cst_24 {dimension_numbers = #tpu.dot_dimension_numbers<[1], [0], [0], [1], [0, 0, 1, 1], [], []>} : vector<64x576xf32>, vector<576x256xf32>, vector<64x256xf32> -> vector<64x256xf32>
    %c0_25 = arith.constant 0 : index
    %c0_26 = arith.constant 0 : index
    %76 = vector.load %arg3[%c0_25, %c0_26] : memref<64x1xf32, #tpu.memory_space<vmem>>, vector<64x1xf32>
    %77 = vector.broadcast %76 : vector<64x1xf32> to vector<64x256xf32>
    %78 = arith.addf %75, %77 : vector<64x256xf32>
    %cst_27 = arith.constant 5.000000e-01 : f32
    %79 = vector.broadcast %cst_27 : f32 to vector<64x256xf32>
    %80 = arith.mulf %79, %78 : vector<64x256xf32>
    %cst_28 = arith.constant 0.707106769 : f32
    %81 = vector.broadcast %cst_28 : f32 to vector<64x256xf32>
    %82 = arith.mulf %78, %81 : vector<64x256xf32>
    %83 = math.erf %82 : vector<64x256xf32>
    %cst_29 = arith.constant 1.000000e+00 : f32
    %84 = vector.broadcast %cst_29 : f32 to vector<64x256xf32>
    %85 = arith.addf %84, %83 : vector<64x256xf32>
    %86 = arith.mulf %80, %85 : vector<64x256xf32>
    %c0_30 = arith.constant 0 : index
    %c0_31 = arith.constant 0 : index
    %87 = vector.load %arg4[%c0_30, %c0_31] : memref<64x64xf32, #tpu.memory_space<vmem>>, vector<64x64xf32>
    %cst_32 = arith.constant dense<0.000000e+00> : vector<64x256xf32>
    %88 = tpu.matmul %87, %86, %cst_32 {dimension_numbers = #tpu.dot_dimension_numbers<[1], [0], [0], [1], [0, 0, 1, 1], [], []>} : vector<64x64xf32>, vector<64x256xf32>, vector<64x256xf32> -> vector<64x256xf32>
    %c0_33 = arith.constant 0 : index
    %c0_34 = arith.constant 0 : index
    %89 = vector.load %arg5[%c0_33, %c0_34] : memref<64x1xf32, #tpu.memory_space<vmem>>, vector<64x1xf32>
    %90 = vector.broadcast %89 : vector<64x1xf32> to vector<64x256xf32>
    %91 = arith.addf %88, %90 : vector<64x256xf32>
    %92 = arith.addf %1, %91 : vector<64x256xf32>
    %c17_i32_35 = arith.constant 17 : i32
    %93 = tpu.dynamic_rotate %92 by %c17_i32_35 dim 1 : vector<64x256xf32>, i32 -> vector<64x256xf32>
    %cst_36 = arith.constant 0.000000e+00 : f32
    %94 = vector.shape_cast %9 : vector<1x256xi1> to vector<1x256xi1>
    %95 = vector.broadcast %94 : vector<1x256xi1> to vector<64x256xi1>
    %96 = vector.broadcast %cst_36 : f32 to vector<64x256xf32>
    %97 = arith.select %95, %93, %96 : vector<64x256xi1>, vector<64x256xf32>
    %c16_i32_37 = arith.constant 16 : i32
    %98 = tpu.dynamic_rotate %92 by %c16_i32_37 dim 1 : vector<64x256xf32>, i32 -> vector<64x256xf32>
    %cst_38 = arith.constant 0.000000e+00 : f32
    %99 = vector.shape_cast %11 : vector<1x256xi1> to vector<1x256xi1>
    %100 = vector.broadcast %99 : vector<1x256xi1> to vector<64x256xi1>
    %101 = vector.broadcast %cst_38 : f32 to vector<64x256xf32>
    %102 = arith.select %100, %98, %101 : vector<64x256xi1>, vector<64x256xf32>
    %c15_i32_39 = arith.constant 15 : i32
    %103 = tpu.dynamic_rotate %92 by %c15_i32_39 dim 1 : vector<64x256xf32>, i32 -> vector<64x256xf32>
    %cst_40 = arith.constant 0.000000e+00 : f32
    %104 = vector.shape_cast %16 : vector<1x256xi1> to vector<1x256xi1>
    %105 = vector.broadcast %104 : vector<1x256xi1> to vector<64x256xi1>
    %106 = vector.broadcast %cst_40 : f32 to vector<64x256xf32>
    %107 = arith.select %105, %103, %106 : vector<64x256xi1>, vector<64x256xf32>
    %c1_i32_41 = arith.constant 1 : i32
    %108 = tpu.dynamic_rotate %92 by %c1_i32_41 dim 1 : vector<64x256xf32>, i32 -> vector<64x256xf32>
    %cst_42 = arith.constant 0.000000e+00 : f32
    %109 = vector.shape_cast %18 : vector<1x256xi1> to vector<1x256xi1>
    %110 = vector.broadcast %109 : vector<1x256xi1> to vector<64x256xi1>
    %111 = vector.broadcast %cst_42 : f32 to vector<64x256xf32>
    %112 = arith.select %110, %108, %111 : vector<64x256xi1>, vector<64x256xf32>
    %c255_i32_43 = arith.constant 255 : i32
    %113 = tpu.dynamic_rotate %92 by %c255_i32_43 dim 1 : vector<64x256xf32>, i32 -> vector<64x256xf32>
    %cst_44 = arith.constant 0.000000e+00 : f32
    %114 = vector.shape_cast %20 : vector<1x256xi1> to vector<1x256xi1>
    %115 = vector.broadcast %114 : vector<1x256xi1> to vector<64x256xi1>
    %116 = vector.broadcast %cst_44 : f32 to vector<64x256xf32>
    %117 = arith.select %115, %113, %116 : vector<64x256xi1>, vector<64x256xf32>
    %c241_i32_45 = arith.constant 241 : i32
    %118 = tpu.dynamic_rotate %92 by %c241_i32_45 dim 1 : vector<64x256xf32>, i32 -> vector<64x256xf32>
    %cst_46 = arith.constant 0.000000e+00 : f32
    %119 = vector.shape_cast %25 : vector<1x256xi1> to vector<1x256xi1>
    %120 = vector.broadcast %119 : vector<1x256xi1> to vector<64x256xi1>
    %121 = vector.broadcast %cst_46 : f32 to vector<64x256xf32>
    %122 = arith.select %120, %118, %121 : vector<64x256xi1>, vector<64x256xf32>
    %c240_i32_47 = arith.constant 240 : i32
    %123 = tpu.dynamic_rotate %92 by %c240_i32_47 dim 1 : vector<64x256xf32>, i32 -> vector<64x256xf32>
    %cst_48 = arith.constant 0.000000e+00 : f32
    %124 = vector.shape_cast %27 : vector<1x256xi1> to vector<1x256xi1>
    %125 = vector.broadcast %124 : vector<1x256xi1> to vector<64x256xi1>
    %126 = vector.broadcast %cst_48 : f32 to vector<64x256xf32>
    %127 = arith.select %125, %123, %126 : vector<64x256xi1>, vector<64x256xf32>
    %c239_i32_49 = arith.constant 239 : i32
    %128 = tpu.dynamic_rotate %92 by %c239_i32_49 dim 1 : vector<64x256xf32>, i32 -> vector<64x256xf32>
    %cst_50 = arith.constant 0.000000e+00 : f32
    %129 = vector.shape_cast %32 : vector<1x256xi1> to vector<1x256xi1>
    %130 = vector.broadcast %129 : vector<1x256xi1> to vector<64x256xi1>
    %131 = vector.broadcast %cst_50 : f32 to vector<64x256xf32>
    %132 = arith.select %130, %128, %131 : vector<64x256xi1>, vector<64x256xf32>
    %133 = tpu.concatenate %97, %102, %107, %112, %92, %117, %122, %127, %132 in 0 : vector<64x256xf32>, vector<64x256xf32>, vector<64x256xf32>, vector<64x256xf32>, vector<64x256xf32>, vector<64x256xf32>, vector<64x256xf32>, vector<64x256xf32>, vector<64x256xf32> -> vector<576x256xf32>
    %c0_51 = arith.constant 0 : index
    %c0_52 = arith.constant 0 : index
    %134 = vector.load %arg6[%c0_51, %c0_52] : memref<192x576xf32, #tpu.memory_space<vmem>>, vector<192x576xf32>
    %cst_53 = arith.constant dense<0.000000e+00> : vector<192x256xf32>
    %135 = tpu.matmul %134, %133, %cst_53 {dimension_numbers = #tpu.dot_dimension_numbers<[1], [0], [0], [1], [0, 0, 1, 1], [], []>} : vector<192x576xf32>, vector<576x256xf32>, vector<192x256xf32> -> vector<192x256xf32>
    %c0_54 = arith.constant 0 : index
    %c0_55 = arith.constant 0 : index
    %136 = vector.load %arg7[%c0_54, %c0_55] : memref<192x1xf32, #tpu.memory_space<vmem>>, vector<192x1xf32>
    %137 = vector.broadcast %136 : vector<192x1xf32> to vector<192x256xf32>
    %138 = arith.addf %135, %137 : vector<192x256xf32>
    %139 = vector.extract_strided_slice %138 {offsets = [0, 0], sizes = [64, 256], strides = [1, 1]} : vector<192x256xf32> to vector<64x256xf32>
    %140 = vector.extract_strided_slice %138 {offsets = [64, 0], sizes = [64, 256], strides = [1, 1]} : vector<192x256xf32> to vector<64x256xf32>
    %141 = vector.extract_strided_slice %138 {offsets = [128, 0], sizes = [64, 256], strides = [1, 1]} : vector<192x256xf32> to vector<64x256xf32>
    %c0_56 = arith.constant 0 : index
    %c0_57 = arith.constant 0 : index
    %142 = vector.load %arg11[%c0_56, %c0_57] : memref<256x256xf32, #tpu.memory_space<vmem>>, vector<256x256xf32>
    %cst_58 = arith.constant dense<0.000000e+00> : vector<64x256xf32>
    %143 = tpu.matmul %140, %142, %cst_58 {dimension_numbers = #tpu.dot_dimension_numbers<[1], [0], [0], [1], [0, 0, 1, 1], [], []>} : vector<64x256xf32>, vector<256x256xf32>, vector<64x256xf32> -> vector<64x256xf32>
    %144 = arith.mulf %139, %143 : vector<64x256xf32>
    %cst_59 = arith.constant 2.500000e-01 : f32
    %145 = vector.broadcast %cst_59 : f32 to vector<64x256xf32>
    %146 = arith.mulf %144, %145 : vector<64x256xf32>
    %cst_60 = arith.constant dense<0xFF800000> : vector<64xf32>
    %147 = vector.multi_reduction <maximumf>, %146, %cst_60 [1] : vector<64x256xf32> to vector<64xf32>
    %148 = vector.shape_cast %147 : vector<64xf32> to vector<64x1xf32>
    %149 = vector.broadcast %148 : vector<64x1xf32> to vector<64x256xf32>
    %150 = arith.subf %146, %149 : vector<64x256xf32>
    %151 = math.exp %150 : vector<64x256xf32>
    %c0_61 = arith.constant 0 : index
    %c0_62 = arith.constant 0 : index
    %152 = vector.load %arg12[%c0_61, %c0_62] : memref<256x256xf32, #tpu.memory_space<vmem>>, vector<256x256xf32>
    %cst_63 = arith.constant dense<0.000000e+00> : vector<64x256xf32>
    %153 = tpu.matmul %151, %152, %cst_63 {dimension_numbers = #tpu.dot_dimension_numbers<[1], [0], [0], [1], [0, 0, 1, 1], [], []>} : vector<64x256xf32>, vector<256x256xf32>, vector<64x256xf32> -> vector<64x256xf32>
    %154 = tpu.reciprocal %153 : vector<64x256xf32> -> vector<64x256xf32>
    %155 = arith.mulf %151, %154 : vector<64x256xf32>
    %156 = arith.mulf %155, %141 : vector<64x256xf32>
    %c17_i32_64 = arith.constant 17 : i32
    %157 = tpu.dynamic_rotate %156 by %c17_i32_64 dim 1 : vector<64x256xf32>, i32 -> vector<64x256xf32>
    %cst_65 = arith.constant 0.000000e+00 : f32
    %158 = vector.shape_cast %9 : vector<1x256xi1> to vector<1x256xi1>
    %159 = vector.broadcast %158 : vector<1x256xi1> to vector<64x256xi1>
    %160 = vector.broadcast %cst_65 : f32 to vector<64x256xf32>
    %161 = arith.select %159, %157, %160 : vector<64x256xi1>, vector<64x256xf32>
    %c16_i32_66 = arith.constant 16 : i32
    %162 = tpu.dynamic_rotate %156 by %c16_i32_66 dim 1 : vector<64x256xf32>, i32 -> vector<64x256xf32>
    %cst_67 = arith.constant 0.000000e+00 : f32
    %163 = vector.shape_cast %11 : vector<1x256xi1> to vector<1x256xi1>
    %164 = vector.broadcast %163 : vector<1x256xi1> to vector<64x256xi1>
    %165 = vector.broadcast %cst_67 : f32 to vector<64x256xf32>
    %166 = arith.select %164, %162, %165 : vector<64x256xi1>, vector<64x256xf32>
    %c15_i32_68 = arith.constant 15 : i32
    %167 = tpu.dynamic_rotate %156 by %c15_i32_68 dim 1 : vector<64x256xf32>, i32 -> vector<64x256xf32>
    %cst_69 = arith.constant 0.000000e+00 : f32
    %168 = vector.shape_cast %16 : vector<1x256xi1> to vector<1x256xi1>
    %169 = vector.broadcast %168 : vector<1x256xi1> to vector<64x256xi1>
    %170 = vector.broadcast %cst_69 : f32 to vector<64x256xf32>
    %171 = arith.select %169, %167, %170 : vector<64x256xi1>, vector<64x256xf32>
    %c1_i32_70 = arith.constant 1 : i32
    %172 = tpu.dynamic_rotate %156 by %c1_i32_70 dim 1 : vector<64x256xf32>, i32 -> vector<64x256xf32>
    %cst_71 = arith.constant 0.000000e+00 : f32
    %173 = vector.shape_cast %18 : vector<1x256xi1> to vector<1x256xi1>
    %174 = vector.broadcast %173 : vector<1x256xi1> to vector<64x256xi1>
    %175 = vector.broadcast %cst_71 : f32 to vector<64x256xf32>
    %176 = arith.select %174, %172, %175 : vector<64x256xi1>, vector<64x256xf32>
    %c255_i32_72 = arith.constant 255 : i32
    %177 = tpu.dynamic_rotate %156 by %c255_i32_72 dim 1 : vector<64x256xf32>, i32 -> vector<64x256xf32>
    %cst_73 = arith.constant 0.000000e+00 : f32
    %178 = vector.shape_cast %20 : vector<1x256xi1> to vector<1x256xi1>
    %179 = vector.broadcast %178 : vector<1x256xi1> to vector<64x256xi1>
    %180 = vector.broadcast %cst_73 : f32 to vector<64x256xf32>
    %181 = arith.select %179, %177, %180 : vector<64x256xi1>, vector<64x256xf32>
    %c241_i32_74 = arith.constant 241 : i32
    %182 = tpu.dynamic_rotate %156 by %c241_i32_74 dim 1 : vector<64x256xf32>, i32 -> vector<64x256xf32>
    %cst_75 = arith.constant 0.000000e+00 : f32
    %183 = vector.shape_cast %25 : vector<1x256xi1> to vector<1x256xi1>
    %184 = vector.broadcast %183 : vector<1x256xi1> to vector<64x256xi1>
    %185 = vector.broadcast %cst_75 : f32 to vector<64x256xf32>
    %186 = arith.select %184, %182, %185 : vector<64x256xi1>, vector<64x256xf32>
    %c240_i32_76 = arith.constant 240 : i32
    %187 = tpu.dynamic_rotate %156 by %c240_i32_76 dim 1 : vector<64x256xf32>, i32 -> vector<64x256xf32>
    %cst_77 = arith.constant 0.000000e+00 : f32
    %188 = vector.shape_cast %27 : vector<1x256xi1> to vector<1x256xi1>
    %189 = vector.broadcast %188 : vector<1x256xi1> to vector<64x256xi1>
    %190 = vector.broadcast %cst_77 : f32 to vector<64x256xf32>
    %191 = arith.select %189, %187, %190 : vector<64x256xi1>, vector<64x256xf32>
    %c239_i32_78 = arith.constant 239 : i32
    %192 = tpu.dynamic_rotate %156 by %c239_i32_78 dim 1 : vector<64x256xf32>, i32 -> vector<64x256xf32>
    %cst_79 = arith.constant 0.000000e+00 : f32
    %193 = vector.shape_cast %32 : vector<1x256xi1> to vector<1x256xi1>
    %194 = vector.broadcast %193 : vector<1x256xi1> to vector<64x256xi1>
    %195 = vector.broadcast %cst_79 : f32 to vector<64x256xf32>
    %196 = arith.select %194, %192, %195 : vector<64x256xi1>, vector<64x256xf32>
    %197 = tpu.concatenate %161, %166, %171, %176, %156, %181, %186, %191, %196 in 0 : vector<64x256xf32>, vector<64x256xf32>, vector<64x256xf32>, vector<64x256xf32>, vector<64x256xf32>, vector<64x256xf32>, vector<64x256xf32>, vector<64x256xf32>, vector<64x256xf32> -> vector<576x256xf32>
    %c0_80 = arith.constant 0 : index
    %c0_81 = arith.constant 0 : index
    %198 = vector.load %arg8[%c0_80, %c0_81] : memref<64x576xf32, #tpu.memory_space<vmem>>, vector<64x576xf32>
    %cst_82 = arith.constant dense<0.000000e+00> : vector<64x256xf32>
    %199 = tpu.matmul %198, %197, %cst_82 {dimension_numbers = #tpu.dot_dimension_numbers<[1], [0], [0], [1], [0, 0, 1, 1], [], []>} : vector<64x576xf32>, vector<576x256xf32>, vector<64x256xf32> -> vector<64x256xf32>
    %cst_83 = arith.constant 5.000000e-01 : f32
    %200 = vector.broadcast %cst_83 : f32 to vector<64x256xf32>
    %201 = arith.mulf %200, %199 : vector<64x256xf32>
    %cst_84 = arith.constant 0.707106769 : f32
    %202 = vector.broadcast %cst_84 : f32 to vector<64x256xf32>
    %203 = arith.mulf %199, %202 : vector<64x256xf32>
    %204 = math.erf %203 : vector<64x256xf32>
    %cst_85 = arith.constant 1.000000e+00 : f32
    %205 = vector.broadcast %cst_85 : f32 to vector<64x256xf32>
    %206 = arith.addf %205, %204 : vector<64x256xf32>
    %207 = arith.mulf %201, %206 : vector<64x256xf32>
    %c0_86 = arith.constant 0 : index
    %c0_87 = arith.constant 0 : index
    %208 = vector.load %arg9[%c0_86, %c0_87] : memref<64x1xf32, #tpu.memory_space<vmem>>, vector<64x1xf32>
    %209 = vector.broadcast %208 : vector<64x1xf32> to vector<64x256xf32>
    %210 = arith.mulf %207, %209 : vector<64x256xf32>
    %c0_88 = arith.constant 0 : index
    %c0_89 = arith.constant 0 : index
    %211 = vector.load %arg10[%c0_88, %c0_89] : memref<64x1xf32, #tpu.memory_space<vmem>>, vector<64x1xf32>
    %212 = vector.broadcast %211 : vector<64x1xf32> to vector<64x256xf32>
    %213 = arith.addf %210, %212 : vector<64x256xf32>
    %214 = arith.addf %213, %92 : vector<64x256xf32>
    %c0_90 = arith.constant 0 : index
    %c0_91 = arith.constant 0 : index
    %c0_92 = arith.constant 0 : index
    %215 = vector.load %arg13[%c0_90, %c0_91, %c0_92] : memref<1x64x256xf32, #tpu.memory_space<vmem>>, vector<1x64x256xf32>
    %216 = vector.shape_cast %215 : vector<1x64x256xf32> to vector<64x256xf32>
    %217 = vector.shape_cast %214 : vector<64x256xf32> to vector<1x64x256xf32>
    tpu.vector_store %arg13[%c0_90, %c0_91, %c0_92], %217 {strides = array<i32>} : memref<1x64x256xf32, #tpu.memory_space<vmem>>, vector<1x64x256xf32>,
    return
  }
  func.func @transform_0(%arg0: i32) -> (i32, i32, i32) {
    %c0_i32 = arith.constant 0 : i32
    %c0_i32_0 = arith.constant 0 : i32
    %c0_i32_1 = arith.constant 0 : i32
    return %arg0, %c0_i32, %c0_i32_0 : i32, i32, i32
  }
  func.func @transform_1(%arg0: i32) -> (i32, i32) {
    %c0_i32 = arith.constant 0 : i32
    %c0_i32_0 = arith.constant 0 : i32
    %c0_i32_1 = arith.constant 0 : i32
    return %c0_i32, %c0_i32_0 : i32, i32
  }
  func.func @transform_2(%arg0: i32) -> (i32, i32) {
    %c0_i32 = arith.constant 0 : i32
    %c0_i32_0 = arith.constant 0 : i32
    %c0_i32_1 = arith.constant 0 : i32
    return %c0_i32, %c0_i32_0 : i32, i32
  }
  func.func @transform_3(%arg0: i32) -> (i32, i32) {
    %c0_i32 = arith.constant 0 : i32
    %c0_i32_0 = arith.constant 0 : i32
    %c0_i32_1 = arith.constant 0 : i32
    return %c0_i32, %c0_i32_0 : i32, i32
  }
  func.func @transform_4(%arg0: i32) -> (i32, i32) {
    %c0_i32 = arith.constant 0 : i32
    %c0_i32_0 = arith.constant 0 : i32
    %c0_i32_1 = arith.constant 0 : i32
    return %c0_i32, %c0_i32_0 : i32, i32
  }
  func.func @transform_5(%arg0: i32) -> (i32, i32) {
    %c0_i32 = arith.constant 0 : i32
    %c0_i32_0 = arith.constant 0 : i32
    %c0_i32_1 = arith.constant 0 : i32
    return %c0_i32, %c0_i32_0 : i32, i32
  }
  func.func @transform_6(%arg0: i32) -> (i32, i32) {
    %c0_i32 = arith.constant 0 : i32
    %c0_i32_0 = arith.constant 0 : i32
    %c0_i32_1 = arith.constant 0 : i32
    return %c0_i32, %c0_i32_0 : i32, i32
  }
  func.func @transform_7(%arg0: i32) -> (i32, i32) {
    %c0_i32 = arith.constant 0 : i32
    %c0_i32_0 = arith.constant 0 : i32
    %c0_i32_1 = arith.constant 0 : i32
    return %c0_i32, %c0_i32_0 : i32, i32
  }
  func.func @transform_8(%arg0: i32) -> (i32, i32) {
    %c0_i32 = arith.constant 0 : i32
    %c0_i32_0 = arith.constant 0 : i32
    %c0_i32_1 = arith.constant 0 : i32
    return %c0_i32, %c0_i32_0 : i32, i32
  }
  func.func @transform_9(%arg0: i32) -> (i32, i32) {
    %c0_i32 = arith.constant 0 : i32
    %c0_i32_0 = arith.constant 0 : i32
    %c0_i32_1 = arith.constant 0 : i32
    return %c0_i32, %c0_i32_0 : i32, i32
  }
  func.func @transform_10(%arg0: i32) -> (i32, i32) {
    %c0_i32 = arith.constant 0 : i32
    %c0_i32_0 = arith.constant 0 : i32
    %c0_i32_1 = arith.constant 0 : i32
    return %c0_i32, %c0_i32_0 : i32, i32
  }
  func.func @transform_11(%arg0: i32) -> (i32, i32) {
    %c0_i32 = arith.constant 0 : i32
    %c0_i32_0 = arith.constant 0 : i32
    %c0_i32_1 = arith.constant 0 : i32
    return %c0_i32, %c0_i32_0 : i32, i32
  }
  func.func @transform_12(%arg0: i32) -> (i32, i32, i32) {
    %c0_i32 = arith.constant 0 : i32
    %c0_i32_0 = arith.constant 0 : i32
    %c0_i32_1 = arith.constant 0 : i32
    return %arg0, %c0_i32, %c0_i32_0 : i32, i32, i32
  }
}

</mosaic_0001>

<llo_original>
// kernel: attn_ffn_forward.1
$region0: #{attn_ffn_forward.1}
  #allocation0 [shape = 'u32[]', space=smem, size = 0x4, offset = 0x4, fixed_abs, tag = 'smem constant byte address 0x4 - core index']
  #allocation1 [shape = 'u32[144,128]{1,0:T(1,128)}', space=vmem, size = 0x12000, scoped, tag = 'internal scratch']
  %s0 = inlined_call_operand.vmem [shape: f32[2,64,256], index: 0, kind: input, shape index: {}]
  %s1 = inlined_call_operand.vmem [shape: f32[64,576], index: 1, kind: input, shape index: {}]
  %s2 = inlined_call_operand.vmem [shape: f32[64,1], index: 2, kind: input, shape index: {}]
  %s3 = inlined_call_operand.vmem [shape: f32[64,64], index: 3, kind: input, shape index: {}]
  %s4 = inlined_call_operand.vmem [shape: f32[64,1], index: 4, kind: input, shape index: {}]
  %s5 = inlined_call_operand.vmem [shape: f32[192,576], index: 5, kind: input, shape index: {}]
  %s6 = inlined_call_operand.vmem [shape: f32[192,1], index: 6, kind: input, shape index: {}]
  %s7 = inlined_call_operand.vmem [shape: f32[64,576], index: 7, kind: input, shape index: {}]
  %s8 = inlined_call_operand.vmem [shape: f32[64,1], index: 8, kind: input, shape index: {}]
  %s9 = inlined_call_operand.vmem [shape: f32[64,1], index: 9, kind: input, shape index: {}]
  %s10 = inlined_call_operand.vmem [shape: f32[256,256], index: 10, kind: input, shape index: {}]
  %s11 = inlined_call_operand.vmem [shape: f32[256,256], index: 11, kind: input, shape index: {}]
  %s12 = inlined_call_operand.vmem [shape: f32[2,64,256], index: 12, kind: output, shape index: {}]
  %s13 = sld [smem:[#allocation0]]
  $region81: #{attn_ffn_forward.1} parent=0
    _
  %s15 = ssub.s32 1, %s13
  %s16 = scalar_select 0, %s15, %s13
  loop: start=0, step=1, limit=4
  $region2: #{attn_ffn_forward.1} parent=0 // loop_pre_header
    _
  $region3: #{attn_ffn_forward.1} parent=0 // loop_header
    %s18 = sphi 0, %s22
    %p19 = scmp.ge.s32.totalorder %s18, 4
    %s28 = sphi 0, %s30
    %s31 = sphi 0, %s28
    %s32 = sphi 0, %s31
    %s48 = sphi 0, %s32
    %s52 = sphi 0, %s52
    %s54 = sphi 0, %s52
    %s55 = sphi 0, %s54
    %s69 = sphi 0, %s55
    %s73 = sphi 0, %s73
    %s75 = sphi 0, %s73
    %s76 = sphi 0, %s75
    %s90 = sphi 0, %s76
    %s94 = sphi 0, %s94
    %s96 = sphi 0, %s94
    %s97 = sphi 0, %s96
    %s111 = sphi 0, %s97
    %s115 = sphi 0, %s115
    %s117 = sphi 0, %s115
    %s118 = sphi 0, %s117
    %s132 = sphi 0, %s118
    %s136 = sphi 0, %s136
    %s138 = sphi 0, %s136
    %s139 = sphi 0, %s138
    %s153 = sphi 0, %s139
    %s157 = sphi 0, %s157
    %s159 = sphi 0, %s157
    %s160 = sphi 0, %s159
    %s174 = sphi 0, %s160
    %s178 = sphi 0, %s178
    %s180 = sphi 0, %s178
    %s181 = sphi 0, %s180
    %s195 = sphi 0, %s181
    %s199 = sphi 0, %s199
    %s201 = sphi 0, %s199
    %s202 = sphi 0, %s201
    %s216 = sphi 0, %s202
    %s220 = sphi 0, %s220
    %s222 = sphi 0, %s220
    %s223 = sphi 0, %s222
    %s237 = sphi 0, %s223
    %s241 = sphi 0, %s241
    %s243 = sphi 0, %s241
    %s244 = sphi 0, %s243
    %s258 = sphi 0, %s244
    %s262 = sphi 0, %s262
    %s264 = sphi 0, %s262
    %s265 = sphi 0, %s264
    %s279 = sphi 0, %s265
    %s285 = sphi 0, %s287
    %s288 = sphi 0, %s285
    %s289 = sphi 0, %s288
    %s305 = sphi 0, %s289
  $region4: #{attn_ffn_forward.1} parent=0 // loop_header_branch
    %21 = sbr.rel (%p19) target = $region8
  $region5: #{attn_ffn_forward.1} parent=0 // loop_body
    %s23 = ssub.s32 %s18, 1
    %s24 = ssub.s32 %s18, 2
    %s25 = sadd.s32 %s18, 1
    %s26 = ssub.s32 %s18, %s25
    %p27 = scmp.eq.s32.totalorder %s26, 0
    %s29 = sadd.s32 %s28, 1
    %s30 = scalar_select %p27, %s28, %s29
    %p33 = pneg %p27
    %p34 = scmp.eq.s32.totalorder %s18, 1
    %p35 = por %p33, %p34
    %p36 = scmp.ne.s32.totalorder %s28, %s31
    %p37 = scmp.eq.s32.totalorder %s18, 0
    %p38 = por %p36, %p37
    %p39 = scmp.ne.s32.totalorder %s28, %s31
    %p40 = scmp.eq.s32.totalorder %s23, 1
    %p41 = por %p39, %p40
    %p42 = scmp.ne.s32.totalorder %s31, %s32
    %p43 = scmp.eq.s32.totalorder %s23, 0
    %p44 = por %p42, %p43
    %p45 = scmp.ne.s32.totalorder %s31, %s32
    %p46 = scmp.eq.s32.totalorder %s24, 1
    %p47 = por %p45, %p46
    %p49 = scmp.ne.s32.totalorder %s32, %s48
    %p50 = scmp.eq.s32.totalorder %s24, 0
    %p51 = por %p49, %p50
    %s53 = sadd.s32 %s52, 1
    %p56 = scmp.eq.s32.totalorder %s18, 1
    %p57 = scmp.ne.s32.totalorder %s52, %s54
    %p58 = scmp.eq.s32.totalorder %s18, 0
    %p59 = por %p57, %p58
    %p60 = scmp.ne.s32.totalorder %s52, %s54
    %p61 = scmp.eq.s32.totalorder %s23, 1
    %p62 = por %p60, %p61
    %p63 = scmp.ne.s32.totalorder %s54, %s55
    %p64 = scmp.eq.s32.totalorder %s23, 0
    %p65 = por %p63, %p64
    %p66 = scmp.ne.s32.totalorder %s54, %s55
    %p67 = scmp.eq.s32.totalorder %s24, 1
    %p68 = por %p66, %p67
    %p70 = scmp.ne.s32.totalorder %s55, %s69
    %p71 = scmp.eq.s32.totalorder %s24, 0
    %p72 = por %p70, %p71
    %s74 = sadd.s32 %s73, 1
    %p77 = scmp.eq.s32.totalorder %s18, 1
    %p78 = scmp.ne.s32.totalorder %s73, %s75
    %p79 = scmp.eq.s32.totalorder %s18, 0
    %p80 = por %p78, %p79
    %p81 = scmp.ne.s32.totalorder %s73, %s75
    %p82 = scmp.eq.s32.totalorder %s23, 1
    %p83 = por %p81, %p82
    %p84 = scmp.ne.s32.totalorder %s75, %s76
    %p85 = scmp.eq.s32.totalorder %s23, 0
    %p86 = por %p84, %p85
    %p87 = scmp.ne.s32.totalorder %s75, %s76
    %p88 = scmp.eq.s32.totalorder %s24, 1
    %p89 = por %p87, %p88
    %p91 = scmp.ne.s32.totalorder %s76, %s90
    %p92 = scmp.eq.s32.totalorder %s24, 0
    %p93 = por %p91, %p92
    %s95 = sadd.s32 %s94, 1
    %p98 = scmp.eq.s32.totalorder %s18, 1
    %p99 = scmp.ne.s32.totalorder %s94, %s96
    %p100 = scmp.eq.s32.totalorder %s18, 0
    %p101 = por %p99, %p100
    %p102 = scmp.ne.s32.totalorder %s94, %s96
    %p103 = scmp.eq.s32.totalorder %s23, 1
    %p104 = por %p102, %p103
    %p105 = scmp.ne.s32.totalorder %s96, %s97
    %p106 = scmp.eq.s32.totalorder %s23, 0
    %p107 = por %p105, %p106
    %p108 = scmp.ne.s32.totalorder %s96, %s97
    %p109 = scmp.eq.s32.totalorder %s24, 1
    %p110 = por %p108, %p109
    %p112 = scmp.ne.s32.totalorder %s97, %s111
    %p113 = scmp.eq.s32.totalorder %s24, 0
    %p114 = por %p112, %p113
    %s116 = sadd.s32 %s115, 1
    %p119 = scmp.eq.s32.totalorder %s18, 1
    %p120 = scmp.ne.s32.totalorder %s115, %s117
    %p121 = scmp.eq.s32.totalorder %s18, 0
    %p122 = por %p120, %p121
    %p123 = scmp.ne.s32.totalorder %s115, %s117
    %p124 = scmp.eq.s32.totalorder %s23, 1
    %p125 = por %p123, %p124
    %p126 = scmp.ne.s32.totalorder %s117, %s118
    %p127 = scmp.eq.s32.totalorder %s23, 0
    %p128 = por %p126, %p127
    %p129 = scmp.ne.s32.totalorder %s117, %s118
    %p130 = scmp.eq.s32.totalorder %s24, 1
    %p131 = por %p129, %p130
    %p133 = scmp.ne.s32.totalorder %s118, %s132
    %p134 = scmp.eq.s32.totalorder %s24, 0
    %p135 = por %p133, %p134
    %s137 = sadd.s32 %s136, 1
    %p140 = scmp.eq.s32.totalorder %s18, 1
    %p141 = scmp.ne.s32.totalorder %s136, %s138
    %p142 = scmp.eq.s32.totalorder %s18, 0
    %p143 = por %p141, %p142
    %p144 = scmp.ne.s32.totalorder %s136, %s138
    %p145 = scmp.eq.s32.totalorder %s23, 1
    %p146 = por %p144, %p145
    %p147 = scmp.ne.s32.totalorder %s138, %s139
    %p148 = scmp.eq.s32.totalorder %s23, 0
    %p149 = por %p147, %p148
    %p150 = scmp.ne.s32.totalorder %s138, %s139
    %p151 = scmp.eq.s32.totalorder %s24, 1
    %p152 = por %p150, %p151
    %p154 = scmp.ne.s32.totalorder %s139, %s153
    %p155 = scmp.eq.s32.totalorder %s24, 0
    %p156 = por %p154, %p155
    %s158 = sadd.s32 %s157, 1
    %p161 = scmp.eq.s32.totalorder %s18, 1
    %p162 = scmp.ne.s32.totalorder %s157, %s159
    %p163 = scmp.eq.s32.totalorder %s18, 0
    %p164 = por %p162, %p163
    %p165 = scmp.ne.s32.totalorder %s157, %s159
    %p166 = scmp.eq.s32.totalorder %s23, 1
    %p167 = por %p165, %p166
    %p168 = scmp.ne.s32.totalorder %s159, %s160
    %p169 = scmp.eq.s32.totalorder %s23, 0
    %p170 = por %p168, %p169
    %p171 = scmp.ne.s32.totalorder %s159, %s160
    %p172 = scmp.eq.s32.totalorder %s24, 1
    %p173 = por %p171, %p172
    %p175 = scmp.ne.s32.totalorder %s160, %s174
    %p176 = scmp.eq.s32.totalorder %s24, 0
    %p177 = por %p175, %p176
    %s179 = sadd.s32 %s178, 1
    %p182 = scmp.eq.s32.totalorder %s18, 1
    %p183 = scmp.ne.s32.totalorder %s178, %s180
    %p184 = scmp.eq.s32.totalorder %s18, 0
    %p185 = por %p183, %p184
    %p186 = scmp.ne.s32.totalorder %s178, %s180
    %p187 = scmp.eq.s32.totalorder %s23, 1
    %p188 = por %p186, %p187
    %p189 = scmp.ne.s32.totalorder %s180, %s181
    %p190 = scmp.eq.s32.totalorder %s23, 0
    %p191 = por %p189, %p190
    %p192 = scmp.ne.s32.totalorder %s180, %s181
    %p193 = scmp.eq.s32.totalorder %s24, 1
    %p194 = por %p192, %p193
    %p196 = scmp.ne.s32.totalorder %s181, %s195
    %p197 = scmp.eq.s32.totalorder %s24, 0
    %p198 = por %p196, %p197
    %s200 = sadd.s32 %s199, 1
    %p203 = scmp.eq.s32.totalorder %s18, 1
    %p204 = scmp.ne.s32.totalorder %s199, %s201
    %p205 = scmp.eq.s32.totalorder %s18, 0
    %p206 = por %p204, %p205
    %p207 = scmp.ne.s32.totalorder %s199, %s201
    %p208 = scmp.eq.s32.totalorder %s23, 1
    %p209 = por %p207, %p208
    %p210 = scmp.ne.s32.totalorder %s201, %s202
    %p211 = scmp.eq.s32.totalorder %s23, 0
    %p212 = por %p210, %p211
    %p213 = scmp.ne.s32.totalorder %s201, %s202
    %p214 = scmp.eq.s32.totalorder %s24, 1
    %p215 = por %p213, %p214
    %p217 = scmp.ne.s32.totalorder %s202, %s216
    %p218 = scmp.eq.s32.totalorder %s24, 0
    %p219 = por %p217, %p218
    %s221 = sadd.s32 %s220, 1
    %p224 = scmp.eq.s32.totalorder %s18, 1
    %p225 = scmp.ne.s32.totalorder %s220, %s222
    %p226 = scmp.eq.s32.totalorder %s18, 0
    %p227 = por %p225, %p226
    %p228 = scmp.ne.s32.totalorder %s220, %s222
    %p229 = scmp.eq.s32.totalorder %s23, 1
    %p230 = por %p228, %p229
    %p231 = scmp.ne.s32.totalorder %s222, %s223
    %p232 = scmp.eq.s32.totalorder %s23, 0
    %p233 = por %p231, %p232
    %p234 = scmp.ne.s32.totalorder %s222, %s223
    %p235 = scmp.eq.s32.totalorder %s24, 1
    %p236 = por %p234, %p235
    %p238 = scmp.ne.s32.totalorder %s223, %s237
    %p239 = scmp.eq.s32.totalorder %s24, 0
    %p240 = por %p238, %p239
    %s242 = sadd.s32 %s241, 1
    %p245 = scmp.eq.s32.totalorder %s18, 1
    %p246 = scmp.ne.s32.totalorder %s241, %s243
    %p247 = scmp.eq.s32.totalorder %s18, 0
    %p248 = por %p246, %p247
    %p249 = scmp.ne.s32.totalorder %s241, %s243
    %p250 = scmp.eq.s32.totalorder %s23, 1
    %p251 = por %p249, %p250
    %p252 = scmp.ne.s32.totalorder %s243, %s244
    %p253 = scmp.eq.s32.totalorder %s23, 0
    %p254 = por %p252, %p253
    %p255 = scmp.ne.s32.totalorder %s243, %s244
    %p256 = scmp.eq.s32.totalorder %s24, 1
    %p257 = por %p255, %p256
    %p259 = scmp.ne.s32.totalorder %s244, %s258
    %p260 = scmp.eq.s32.totalorder %s24, 0
    %p261 = por %p259, %p260
    %s263 = sadd.s32 %s262, 1
    %p266 = scmp.eq.s32.totalorder %s18, 1
    %p267 = scmp.ne.s32.totalorder %s262, %s264
    %p268 = scmp.eq.s32.totalorder %s18, 0
    %p269 = por %p267, %p268
    %p270 = scmp.ne.s32.totalorder %s262, %s264
    %p271 = scmp.eq.s32.totalorder %s23, 1
    %p272 = por %p270, %p271
    %p273 = scmp.ne.s32.totalorder %s264, %s265
    %p274 = scmp.eq.s32.totalorder %s23, 0
    %p275 = por %p273, %p274
    %p276 = scmp.ne.s32.totalorder %s264, %s265
    %p277 = scmp.eq.s32.totalorder %s24, 1
    %p278 = por %p276, %p277
    %p280 = scmp.ne.s32.totalorder %s265, %s279
    %p281 = scmp.eq.s32.totalorder %s24, 0
    %p282 = por %p280, %p281
    %s283 = ssub.s32 %s18, %s25
    %p284 = scmp.eq.s32.totalorder %s283, 0
    %s286 = sadd.s32 %s285, 1
    %s287 = scalar_select %p284, %s285, %s286
    %p290 = pneg %p284
    %p291 = scmp.eq.s32.totalorder %s18, 1
    %p292 = por %p290, %p291
    %p293 = scmp.ne.s32.totalorder %s285, %s288
    %p294 = scmp.eq.s32.totalorder %s18, 0
    %p295 = por %p293, %p294
    %p296 = scmp.ne.s32.totalorder %s285, %s288
    %p297 = scmp.eq.s32.totalorder %s23, 1
    %p298 = por %p296, %p297
    %p299 = scmp.ne.s32.totalorder %s288, %s289
    %p300 = scmp.eq.s32.totalorder %s23, 0
    %p301 = por %p299, %p300
    %p302 = scmp.ne.s32.totalorder %s288, %s289
    %p303 = scmp.eq.s32.totalorder %s24, 1
    %p304 = por %p302, %p303
    %p306 = scmp.ne.s32.totalorder %s289, %s305
    %p307 = scmp.eq.s32.totalorder %s24, 0
    %p308 = por %p306, %p307
    %p309 = scmp.le.s32.totalorder 1, %s18
    %p310 = scmp.lt.s32.totalorder %s18, 3
    %p311 = pnand %p309, %p310
    %p312 = pneg %p311
    // Predicated region
    $region9: #{attn_ffn_forward.1} parent=5 // pred_check
      _
    $region10: #{attn_ffn_forward.1} parent=5 // pred_check_branch
      %314 = sbr.rel (%p311) target = $region12
    $region11: #{attn_ffn_forward.1} parent=5 // pred_region
      %s315 = ssub.s32 %s18, 1
      // Predicated region
      $region13: #{attn_ffn_forward.1} parent=11 // pred_check
        %p316 = pneg %p65
      $region14: #{attn_ffn_forward.1} parent=11 // pred_check_branch
        %318 = sbr.rel (%p316) target = $region16
      $region15: #{attn_ffn_forward.1} parent=11 // pred_region
        _
      $region16: #{attn_ffn_forward.1} parent=11 // pred_fallthru
        _
      // Predicated region
      $region17: #{attn_ffn_forward.1} parent=11 // pred_check
        %p319 = pneg %p86
      $region18: #{attn_ffn_forward.1} parent=11 // pred_check_branch
        %321 = sbr.rel (%p319) target = $region20
      $region19: #{attn_ffn_forward.1} parent=11 // pred_region
        _
      $region20: #{attn_ffn_forward.1} parent=11 // pred_fallthru
        _
      // Predicated region
      $region21: #{attn_ffn_forward.1} parent=11 // pred_check
        %p322 = pneg %p107
      $region22: #{attn_ffn_forward.1} parent=11 // pred_check_branch
        %324 = sbr.rel (%p322) target = $region24
      $region23: #{attn_ffn_forward.1} parent=11 // pred_region
        _
      $region24: #{attn_ffn_forward.1} parent=11 // pred_fallthru
        _
      // Predicated region
      $region25: #{attn_ffn_forward.1} parent=11 // pred_check
        %p325 = pneg %p128
      $region26: #{attn_ffn_forward.1} parent=11 // pred_check_branch
        %327 = sbr.rel (%p325) target = $region28
      $region27: #{attn_ffn_forward.1} parent=11 // pred_region
        _
      $region28: #{attn_ffn_forward.1} parent=11 // pred_fallthru
        _
      // Predicated region
      $region29: #{attn_ffn_forward.1} parent=11 // pred_check
        %p328 = pneg %p149
      $region30: #{attn_ffn_forward.1} parent=11 // pred_check_branch
        %330 = sbr.rel (%p328) target = $region32
      $region31: #{attn_ffn_forward.1} parent=11 // pred_region
        _
      $region32: #{attn_ffn_forward.1} parent=11 // pred_fallthru
        _
      // Predicated region
      $region33: #{attn_ffn_forward.1} parent=11 // pred_check
        %p331 = pneg %p170
      $region34: #{attn_ffn_forward.1} parent=11 // pred_check_branch
        %333 = sbr.rel (%p331) target = $region36
      $region35: #{attn_ffn_forward.1} parent=11 // pred_region
        _
      $region36: #{attn_ffn_forward.1} parent=11 // pred_fallthru
        _
      // Predicated region
      $region37: #{attn_ffn_forward.1} parent=11 // pred_check
        %p334 = pneg %p191
      $region38: #{attn_ffn_forward.1} parent=11 // pred_check_branch
        %336 = sbr.rel (%p334) target = $region40
      $region39: #{attn_ffn_forward.1} parent=11 // pred_region
        _
      $region40: #{attn_ffn_forward.1} parent=11 // pred_fallthru
        _
      // Predicated region
      $region41: #{attn_ffn_forward.1} parent=11 // pred_check
        %p337 = pneg %p212
      $region42: #{attn_ffn_forward.1} parent=11 // pred_check_branch
        %339 = sbr.rel (%p337) target = $region44
      $region43: #{attn_ffn_forward.1} parent=11 // pred_region
        _
      $region44: #{attn_ffn_forward.1} parent=11 // pred_fallthru
        _
      // Predicated region
      $region45: #{attn_ffn_forward.1} parent=11 // pred_check
        %p340 = pneg %p233
      $region46: #{attn_ffn_forward.1} parent=11 // pred_check_branch
        %342 = sbr.rel (%p340) target = $region48
      $region47: #{attn_ffn_forward.1} parent=11 // pred_region
        _
      $region48: #{attn_ffn_forward.1} parent=11 // pred_fallthru
        _
      // Predicated region
      $region49: #{attn_ffn_forward.1} parent=11 // pred_check
        %p343 = pneg %p254
      $region50: #{attn_ffn_forward.1} parent=11 // pred_check_branch
        %345 = sbr.rel (%p343) target = $region52
      $region51: #{attn_ffn_forward.1} parent=11 // pred_region
        _
      $region52: #{attn_ffn_forward.1} parent=11 // pred_fallthru
        _
      // Predicated region
      $region53: #{attn_ffn_forward.1} parent=11 // pred_check
        %p346 = pneg %p275
      $region54: #{attn_ffn_forward.1} parent=11 // pred_check_branch
        %348 = sbr.rel (%p346) target = $region56
      $region55: #{attn_ffn_forward.1} parent=11 // pred_region
        _
      $region56: #{attn_ffn_forward.1} parent=11 // pred_fallthru
        _
    $region12: #{attn_ffn_forward.1} parent=5 // pred_fallthru
      _
    %p349 = scmp.lt.s32.totalorder %s18, 2
    // Predicated region
    $region57: #{attn_ffn_forward.1} parent=5 // pred_check
      %p350 = pneg %p349
    $region58: #{attn_ffn_forward.1} parent=5 // pred_check_branch
      %352 = sbr.rel (%p350) target = $region60
    $region59: #{attn_ffn_forward.1} parent=5 // pred_region
      // Predicated region
      $region61: #{attn_ffn_forward.1} parent=59 // pred_check
        %p353 = pneg %p38
      $region62: #{attn_ffn_forward.1} parent=59 // pred_check_branch
        %355 = sbr.rel (%p353) target = $region64
      $region63: #{attn_ffn_forward.1} parent=59 // pred_region
        %p356 = scmp.lt.s32.totalorder %s18, 1
        %s357 = scalar_select %p356, %s18, 1
        %s358 = smul.addr %s357, 16
        %s359 = smul.addr %s358, 8
        %s360 = scalar_lea.vmem %s0, %s359
      $region64: #{attn_ffn_forward.1} parent=59 // pred_fallthru
        _
    $region60: #{attn_ffn_forward.1} parent=5 // pred_fallthru
      _
    %p361 = scmp.le.s32.totalorder 1, %s18
    %p362 = scmp.lt.s32.totalorder %s18, 3
    %p363 = pnand %p361, %p362
    %p364 = pneg %p363
    // Predicated region
    $region65: #{attn_ffn_forward.1} parent=5 // pred_check
      _
    $region66: #{attn_ffn_forward.1} parent=5 // pred_check_branch
      %366 = sbr.rel (%p363) target = $region68
    $region67: #{attn_ffn_forward.1} parent=5 // pred_region
      %s367 = ssub.s32 %s18, 1
      %p368 = scmp.lt.s32.totalorder %s23, 1
      %s369 = scalar_select %p368, %s23, 1
      %s370 = smul.addr %s369, 16
      %s371 = smul.addr %s370, 8
      %s372 = scalar_lea.vmem %s0, %s371
      %p373 = pneg %p44
      %p374 = pneg %p41
      %p375 = pneg %p65
      %p376 = pneg %p62
      %p377 = pneg %p86
      %p378 = pneg %p83
      %p379 = pneg %p107
      %p380 = pneg %p104
      %p381 = pneg %p128
      %p382 = pneg %p125
      %p383 = pneg %p149
      %p384 = pneg %p146
      %p385 = pneg %p170
      %p386 = pneg %p167
      %p387 = pneg %p191
      %p388 = pneg %p188
      %p389 = pneg %p212
      %p390 = pneg %p209
      %p391 = pneg %p233
      %p392 = pneg %p230
      %p393 = pneg %p254
      %p394 = pneg %p251
      %p395 = pneg %p275
      %p396 = pneg %p272
      %p397 = pneg %p301
      %p398 = pneg %p298
      %p399 = scmp.lt.s32.totalorder %s23, 1
      %s400 = scalar_select %p399, %s23, 1
      %s401 = smul.addr %s400, 16
      %s402 = smul.addr %s401, 8
      %s403 = scalar_lea.vmem %s12, %s402
      %p404 = scmp.lt.s32.totalorder %s23, 1
      %s405 = scalar_select %p404, %s23, 1
      %s406 = smul.addr %s405, 16
      %s407 = smul.addr %s406, 8
      %s408 = scalar_lea.vmem %s0, %s407
      %p409 = scmp.lt.s32.totalorder %s23, 1
      %s410 = scalar_select %p409, %s23, 1
      %s411 = smul.addr %s410, 16
      %s412 = smul.addr %s411, 8
      %s413 = scalar_lea.vmem %s12, %s412
      %v414 = vld [vmem:[%s408] sm:$0xff]
      %v415 = vld [vmem:[%s408 + $0x8] sm:$0xff]
      %v416 = vld [vmem:[%s408 + $0x10] sm:$0xff]
      %v417 = vld [vmem:[%s408 + $0x18] sm:$0xff]
      %v418 = vld [vmem:[%s408 + $0x20] sm:$0xff]
      %v419 = vld [vmem:[%s408 + $0x28] sm:$0xff]
      %v420 = vld [vmem:[%s408 + $0x30] sm:$0xff]
      %v421 = vld [vmem:[%s408 + $0x38] sm:$0xff]
      %v422 = vld [vmem:[%s408 + $0x40] sm:$0xff]
      %v423 = vld [vmem:[%s408 + $0x48] sm:$0xff]
      %v424 = vld [vmem:[%s408 + $0x50] sm:$0xff]
      %v425 = vld [vmem:[%s408 + $0x58] sm:$0xff]
      %v426 = vld [vmem:[%s408 + $0x60] sm:$0xff]
      %v427 = vld [vmem:[%s408 + $0x68] sm:$0xff]
      %v428 = vld [vmem:[%s408 + $0x70] sm:$0xff]
      %v429 = vld [vmem:[%s408 + $0x78] sm:$0xff]
      %v430 = vlaneseq
      %v431 = vand.u32 %v430, 127
      %v432 = vadd.s32 %v431, 128
      %v433 = vand.u32 %v431, 15
      %v434 = vand.u32 %v432, 15
      %vm435 = vcmp.ge.s32.totalorder %v431, 16
      %vm436 = vcmp.ge.s32.totalorder %v432, 16
      %vm437 = vcmp.ge.s32.totalorder %v433, 1
      %vm438 = vcmp.ge.s32.totalorder %v434, 1
      %vm439 = vmand %vm435, %vm437
      %vm440 = vmand %vm436, %vm438
      %vm441 = vcmp.lt.s32.totalorder %v433, 15
      %vm442 = vcmp.lt.s32.totalorder %v434, 15
      %vm443 = vmand %vm435, %vm441
      %vm444 = vmand %vm436, %vm442
      %vm445 = vcmp.lt.s32.totalorder %v431, 240
      %vm446 = vcmp.lt.s32.totalorder %v432, 240
      %vm447 = vmand %vm445, %vm437
      %vm448 = vmand %vm446, %vm438
      %vm449 = vmand %vm445, %vm441
      %vm450 = vmand %vm446, %vm442
      %451 = vrot.lane.b32.xlu0 %v414, 17
      %v452 = vpop.permute.xlu0 %451
      %453 = vrot.lane.b32.xlu0 %v416, 17
      %v454 = vpop.permute.xlu0 %453
      %455 = vrot.lane.b32.xlu0 %v418, 17
      %v456 = vpop.permute.xlu0 %455
      %457 = vrot.lane.b32.xlu0 %v420, 17
      %v458 = vpop.permute.xlu0 %457
      %459 = vrot.lane.b32.xlu0 %v422, 17
      %v460 = vpop.permute.xlu0 %459
      %461 = vrot.lane.b32.xlu0 %v424, 17
      %v462 = vpop.permute.xlu0 %461
      %463 = vrot.lane.b32.xlu0 %v426, 17
      %v464 = vpop.permute.xlu0 %463
      %465 = vrot.lane.b32.xlu0 %v428, 17
      %v466 = vpop.permute.xlu0 %465
      %467 = vrot.lane.b32.xlu0 %v415, 17
      %v468 = vpop.permute.xlu0 %467
      %469 = vrot.lane.b32.xlu0 %v417, 17
      %v470 = vpop.permute.xlu0 %469
      %471 = vrot.lane.b32.xlu0 %v419, 17
      %v472 = vpop.permute.xlu0 %471
      %473 = vrot.lane.b32.xlu0 %v421, 17
      %v474 = vpop.permute.xlu0 %473
      %475 = vrot.lane.b32.xlu0 %v423, 17
      %v476 = vpop.permute.xlu0 %475
      %477 = vrot.lane.b32.xlu0 %v425, 17
      %v478 = vpop.permute.xlu0 %477
      %479 = vrot.lane.b32.xlu0 %v427, 17
      %v480 = vpop.permute.xlu0 %479
      %481 = vrot.lane.b32.xlu0 %v429, 17
      %v482 = vpop.permute.xlu0 %481
      %vm483 = vcmp.lt.s32.totalorder %v431, 17
      %v484 = vsel %vm483, %v452, %v468
      %v485 = vsel %vm483, %v454, %v470
      %v486 = vsel %vm483, %v456, %v472
      %v487 = vsel %vm483, %v458, %v474
      %v488 = vsel %vm483, %v460, %v476
      %v489 = vsel %vm483, %v462, %v478
      %v490 = vsel %vm483, %v464, %v480
      %v491 = vsel %vm483, %v466, %v482
      %v492 = vsel %vm483, %v468, %v452
      %v493 = vsel %vm483, %v470, %v454
      %v494 = vsel %vm483, %v472, %v456
      %v495 = vsel %vm483, %v474, %v458
      %v496 = vsel %vm483, %v476, %v460
      %v497 = vsel %vm483, %v478, %v462
      %v498 = vsel %vm483, %v480, %v464
      %v499 = vsel %vm483, %v482, %v466
      %v500 = vsel %vm439, 1, 0
      %v501 = vsel %vm440, 1, 0
      %vm502 = vcmp.eq.s32.totalorder %v500, 1
      %vm503 = vcmp.eq.s32.totalorder %v501, 1
      %v504 = vsel %vm502, %v492, 0.0
      %v505 = vsel %vm503, %v484, 0.0
      %v506 = vsel %vm502, %v493, 0.0
      %v507 = vsel %vm503, %v485, 0.0
      %v508 = vsel %vm502, %v494, 0.0
      %v509 = vsel %vm503, %v486, 0.0
      %v510 = vsel %vm502, %v495, 0.0
      %v511 = vsel %vm503, %v487, 0.0
      %v512 = vsel %vm502, %v496, 0.0
      %v513 = vsel %vm503, %v488, 0.0
      %v514 = vsel %vm502, %v497, 0.0
      %v515 = vsel %vm503, %v489, 0.0
      %v516 = vsel %vm502, %v498, 0.0
      %v517 = vsel %vm503, %v490, 0.0
      %v518 = vsel %vm502, %v499, 0.0
      %v519 = vsel %vm503, %v491, 0.0
      %520 = vrot.lane.b32.xlu0 %v414, 16
      %v521 = vpop.permute.xlu0 %520
      %522 = vrot.lane.b32.xlu0 %v416, 16
      %v523 = vpop.permute.xlu0 %522
      %524 = vrot.lane.b32.xlu0 %v418, 16
      %v525 = vpop.permute.xlu0 %524
      %526 = vrot.lane.b32.xlu0 %v420, 16
      %v527 = vpop.permute.xlu0 %526
      %528 = vrot.lane.b32.xlu0 %v422, 16
      %v529 = vpop.permute.xlu0 %528
      %530 = vrot.lane.b32.xlu0 %v424, 16
      %v531 = vpop.permute.xlu0 %530
      %532 = vrot.lane.b32.xlu0 %v426, 16
      %v533 = vpop.permute.xlu0 %532
      %534 = vrot.lane.b32.xlu0 %v428, 16
      %v535 = vpop.permute.xlu0 %534
      %536 = vrot.lane.b32.xlu0 %v415, 16
      %v537 = vpop.permute.xlu0 %536
      %538 = vrot.lane.b32.xlu0 %v417, 16
      %v539 = vpop.permute.xlu0 %538
      %540 = vrot.lane.b32.xlu0 %v419, 16
      %v541 = vpop.permute.xlu0 %540
      %542 = vrot.lane.b32.xlu0 %v421, 16
      %v543 = vpop.permute.xlu0 %542
      %544 = vrot.lane.b32.xlu0 %v423, 16
      %v545 = vpop.permute.xlu0 %544
      %546 = vrot.lane.b32.xlu0 %v425, 16
      %v547 = vpop.permute.xlu0 %546
      %548 = vrot.lane.b32.xlu0 %v427, 16
      %v549 = vpop.permute.xlu0 %548
      %550 = vrot.lane.b32.xlu0 %v429, 16
      %v551 = vpop.permute.xlu0 %550
      %vm552 = vcmp.lt.s32.totalorder %v431, 16
      %v553 = vsel %vm552, %v521, %v537
      %v554 = vsel %vm552, %v523, %v539
      %v555 = vsel %vm552, %v525, %v541
      %v556 = vsel %vm552, %v527, %v543
      %v557 = vsel %vm552, %v529, %v545
      %v558 = vsel %vm552, %v531, %v547
      %v559 = vsel %vm552, %v533, %v549
      %v560 = vsel %vm552, %v535, %v551
      %v561 = vsel %vm552, %v537, %v521
      %v562 = vsel %vm552, %v539, %v523
      %v563 = vsel %vm552, %v541, %v525
      %v564 = vsel %vm552, %v543, %v527
      %v565 = vsel %vm552, %v545, %v529
      %v566 = vsel %vm552, %v547, %v531
      %v567 = vsel %vm552, %v549, %v533
      %v568 = vsel %vm552, %v551, %v535
      %v569 = vsel %vm435, 1, 0
      %v570 = vsel %vm436, 1, 0
      %vm571 = vcmp.eq.s32.totalorder %v569, 1
      %vm572 = vcmp.eq.s32.totalorder %v570, 1
      %v573 = vsel %vm571, %v561, 0.0
      %v574 = vsel %vm572, %v553, 0.0
      %v575 = vsel %vm571, %v562, 0.0
      %v576 = vsel %vm572, %v554, 0.0
      %v577 = vsel %vm571, %v563, 0.0
      %v578 = vsel %vm572, %v555, 0.0
      %v579 = vsel %vm571, %v564, 0.0
      %v580 = vsel %vm572, %v556, 0.0
      %v581 = vsel %vm571, %v565, 0.0
      %v582 = vsel %vm572, %v557, 0.0
      %v583 = vsel %vm571, %v566, 0.0
      %v584 = vsel %vm572, %v558, 0.0
      %v585 = vsel %vm571, %v567, 0.0
      %v586 = vsel %vm572, %v559, 0.0
      %v587 = vsel %vm571, %v568, 0.0
      %v588 = vsel %vm572, %v560, 0.0
      %589 = vrot.lane.b32.xlu0 %v414, 15
      %v590 = vpop.permute.xlu0 %589
      %591 = vrot.lane.b32.xlu0 %v416, 15
      %v592 = vpop.permute.xlu0 %591
      %593 = vrot.lane.b32.xlu0 %v418, 15
      %v594 = vpop.permute.xlu0 %593
      %595 = vrot.lane.b32.xlu0 %v420, 15
      %v596 = vpop.permute.xlu0 %595
      %597 = vrot.lane.b32.xlu0 %v422, 15
      %v598 = vpop.permute.xlu0 %597
      %599 = vrot.lane.b32.xlu0 %v424, 15
      %v600 = vpop.permute.xlu0 %599
      %601 = vrot.lane.b32.xlu0 %v426, 15
      %v602 = vpop.permute.xlu0 %601
      %603 = vrot.lane.b32.xlu0 %v428, 15
      %v604 = vpop.permute.xlu0 %603
      %605 = vrot.lane.b32.xlu0 %v415, 15
      %v606 = vpop.permute.xlu0 %605
      %607 = vrot.lane.b32.xlu0 %v417, 15
      %v608 = vpop.permute.xlu0 %607
      %609 = vrot.lane.b32.xlu0 %v419, 15
      %v610 = vpop.permute.xlu0 %609
      %611 = vrot.lane.b32.xlu0 %v421, 15
      %v612 = vpop.permute.xlu0 %611
      %613 = vrot.lane.b32.xlu0 %v423, 15
      %v614 = vpop.permute.xlu0 %613
      %615 = vrot.lane.b32.xlu0 %v425, 15
      %v616 = vpop.permute.xlu0 %615
      %617 = vrot.lane.b32.xlu0 %v427, 15
      %v618 = vpop.permute.xlu0 %617
      %619 = vrot.lane.b32.xlu0 %v429, 15
      %v620 = vpop.permute.xlu0 %619
      %vm621 = vcmp.lt.s32.totalorder %v431, 15
      %v622 = vsel %vm621, %v590, %v606
      %v623 = vsel %vm621, %v592, %v608
      %v624 = vsel %vm621, %v594, %v610
      %v625 = vsel %vm621, %v596, %v612
      %v626 = vsel %vm621, %v598, %v614
      %v627 = vsel %vm621, %v600, %v616
      %v628 = vsel %vm621, %v602, %v618
      %v629 = vsel %vm621, %v604, %v620
      %v630 = vsel %vm621, %v606, %v590
      %v631 = vsel %vm621, %v608, %v592
      %v632 = vsel %vm621, %v610, %v594
      %v633 = vsel %vm621, %v612, %v596
      %v634 = vsel %vm621, %v614, %v598
      %v635 = vsel %vm621, %v616, %v600
      %v636 = vsel %vm621, %v618, %v602
      %v637 = vsel %vm621, %v620, %v604
      %v638 = vsel %vm443, 1, 0
      %v639 = vsel %vm444, 1, 0
      %vm640 = vcmp.eq.s32.totalorder %v638, 1
      %vm641 = vcmp.eq.s32.totalorder %v639, 1
      %v642 = vsel %vm640, %v630, 0.0
      %v643 = vsel %vm641, %v622, 0.0
      %v644 = vsel %vm640, %v631, 0.0
      %v645 = vsel %vm641, %v623, 0.0
      %v646 = vsel %vm640, %v632, 0.0
      %v647 = vsel %vm641, %v624, 0.0
      %v648 = vsel %vm640, %v633, 0.0
      %v649 = vsel %vm641, %v625, 0.0
      %v650 = vsel %vm640, %v634, 0.0
      %v651 = vsel %vm641, %v626, 0.0
      %v652 = vsel %vm640, %v635, 0.0
      %v653 = vsel %vm641, %v627, 0.0
      %v654 = vsel %vm640, %v636, 0.0
      %v655 = vsel %vm641, %v628, 0.0
      %v656 = vsel %vm640, %v637, 0.0
      %v657 = vsel %vm641, %v629, 0.0
      %658 = vrot.lane.b32.xlu0 %v414, 1
      %v659 = vpop.permute.xlu0 %658
      %660 = vrot.lane.b32.xlu0 %v416, 1
      %v661 = vpop.permute.xlu0 %660
      %662 = vrot.lane.b32.xlu0 %v418, 1
      %v663 = vpop.permute.xlu0 %662
      %664 = vrot.lane.b32.xlu0 %v420, 1
      %v665 = vpop.permute.xlu0 %664
      %666 = vrot.lane.b32.xlu0 %v422, 1
      %v667 = vpop.permute.xlu0 %666
      %668 = vrot.lane.b32.xlu0 %v424, 1
      %v669 = vpop.permute.xlu0 %668
      %670 = vrot.lane.b32.xlu0 %v426, 1
      %v671 = vpop.permute.xlu0 %670
      %672 = vrot.lane.b32.xlu0 %v428, 1
      %v673 = vpop.permute.xlu0 %672
      %674 = vrot.lane.b32.xlu0 %v415, 1
      %v675 = vpop.permute.xlu0 %674
      %676 = vrot.lane.b32.xlu0 %v417, 1
      %v677 = vpop.permute.xlu0 %676
      %678 = vrot.lane.b32.xlu0 %v419, 1
      %v679 = vpop.permute.xlu0 %678
      %680 = vrot.lane.b32.xlu0 %v421, 1
      %v681 = vpop.permute.xlu0 %680
      %682 = vrot.lane.b32.xlu0 %v423, 1
      %v683 = vpop.permute.xlu0 %682
      %684 = vrot.lane.b32.xlu0 %v425, 1
      %v685 = vpop.permute.xlu0 %684
      %686 = vrot.lane.b32.xlu0 %v427, 1
      %v687 = vpop.permute.xlu0 %686
      %688 = vrot.lane.b32.xlu0 %v429, 1
      %v689 = vpop.permute.xlu0 %688
      %vm690 = vcmp.lt.s32.totalorder %v431, 1
      %v691 = vsel %vm690, %v659, %v675
      %v692 = vsel %vm690, %v661, %v677
      %v693 = vsel %vm690, %v663, %v679
      %v694 = vsel %vm690, %v665, %v681
      %v695 = vsel %vm690, %v667, %v683
      %v696 = vsel %vm690, %v669, %v685
      %v697 = vsel %vm690, %v671, %v687
      %v698 = vsel %vm690, %v673, %v689
      %v699 = vsel %vm690, %v675, %v659
      %v700 = vsel %vm690, %v677, %v661
      %v701 = vsel %vm690, %v679, %v663
      %v702 = vsel %vm690, %v681, %v665
      %v703 = vsel %vm690, %v683, %v667
      %v704 = vsel %vm690, %v685, %v669
      %v705 = vsel %vm690, %v687, %v671
      %v706 = vsel %vm690, %v689, %v673
      %v707 = vsel %vm437, 1, 0
      %v708 = vsel %vm438, 1, 0
      %vm709 = vcmp.eq.s32.totalorder %v707, 1
      %vm710 = vcmp.eq.s32.totalorder %v708, 1
      %v711 = vsel %vm709, %v699, 0.0
      %v712 = vsel %vm710, %v691, 0.0
      %v713 = vsel %vm709, %v700, 0.0
      %v714 = vsel %vm710, %v692, 0.0
      %v715 = vsel %vm709, %v701, 0.0
      %v716 = vsel %vm710, %v693, 0.0
      %v717 = vsel %vm709, %v702, 0.0
      %v718 = vsel %vm710, %v694, 0.0
      %v719 = vsel %vm709, %v703, 0.0
      %v720 = vsel %vm710, %v695, 0.0
      %v721 = vsel %vm709, %v704, 0.0
      %v722 = vsel %vm710, %v696, 0.0
      %v723 = vsel %vm709, %v705, 0.0
      %v724 = vsel %vm710, %v697, 0.0
      %v725 = vsel %vm709, %v706, 0.0
      %v726 = vsel %vm710, %v698, 0.0
      %727 = vrot.lane.b32.xlu0 %v414, 127
      %v728 = vpop.permute.xlu0 %727
      %729 = vrot.lane.b32.xlu0 %v416, 127
      %v730 = vpop.permute.xlu0 %729
      %731 = vrot.lane.b32.xlu0 %v418, 127
      %v732 = vpop.permute.xlu0 %731
      %733 = vrot.lane.b32.xlu0 %v420, 127
      %v734 = vpop.permute.xlu0 %733
      %735 = vrot.lane.b32.xlu0 %v422, 127
      %v736 = vpop.permute.xlu0 %735
      %737 = vrot.lane.b32.xlu0 %v424, 127
      %v738 = vpop.permute.xlu0 %737
      %739 = vrot.lane.b32.xlu0 %v426, 127
      %v740 = vpop.permute.xlu0 %739
      %741 = vrot.lane.b32.xlu0 %v428, 127
      %v742 = vpop.permute.xlu0 %741
      %743 = vrot.lane.b32.xlu0 %v415, 127
      %v744 = vpop.permute.xlu0 %743
      %745 = vrot.lane.b32.xlu0 %v417, 127
      %v746 = vpop.permute.xlu0 %745
      %747 = vrot.lane.b32.xlu0 %v419, 127
      %v748 = vpop.permute.xlu0 %747
      %749 = vrot.lane.b32.xlu0 %v421, 127
      %v750 = vpop.permute.xlu0 %749
      %751 = vrot.lane.b32.xlu0 %v423, 127
      %v752 = vpop.permute.xlu0 %751
      %753 = vrot.lane.b32.xlu0 %v425, 127
      %v754 = vpop.permute.xlu0 %753
      %755 = vrot.lane.b32.xlu0 %v427, 127
      %v756 = vpop.permute.xlu0 %755
      %757 = vrot.lane.b32.xlu0 %v429, 127
      %v758 = vpop.permute.xlu0 %757
      %vm759 = vcmp.lt.s32.totalorder %v431, 127
      %v760 = vsel %vm759, %v728, %v744
      %v761 = vsel %vm759, %v730, %v746
      %v762 = vsel %vm759, %v732, %v748
      %v763 = vsel %vm759, %v734, %v750
      %v764 = vsel %vm759, %v736, %v752
      %v765 = vsel %vm759, %v738, %v754
      %v766 = vsel %vm759, %v740, %v756
      %v767 = vsel %vm759, %v742, %v758
      %v768 = vsel %vm759, %v744, %v728
      %v769 = vsel %vm759, %v746, %v730
      %v770 = vsel %vm759, %v748, %v732
      %v771 = vsel %vm759, %v750, %v734
      %v772 = vsel %vm759, %v752, %v736
      %v773 = vsel %vm759, %v754, %v738
      %v774 = vsel %vm759, %v756, %v740
      %v775 = vsel %vm759, %v758, %v742
      %v776 = vsel %vm441, 1, 0
      %v777 = vsel %vm442, 1, 0
      %vm778 = vcmp.eq.s32.totalorder %v776, 1
      %vm779 = vcmp.eq.s32.totalorder %v777, 1
      %v780 = vsel %vm778, %v760, 0.0
      %v781 = vsel %vm779, %v768, 0.0
      %v782 = vsel %vm778, %v761, 0.0
      %v783 = vsel %vm779, %v769, 0.0
      %v784 = vsel %vm778, %v762, 0.0
      %v785 = vsel %vm779, %v770, 0.0
      %v786 = vsel %vm778, %v763, 0.0
      %v787 = vsel %vm779, %v771, 0.0
      %v788 = vsel %vm778, %v764, 0.0
      %v789 = vsel %vm779, %v772, 0.0
      %v790 = vsel %vm778, %v765, 0.0
      %v791 = vsel %vm779, %v773, 0.0
      %v792 = vsel %vm778, %v766, 0.0
      %v793 = vsel %vm779, %v774, 0.0
      %v794 = vsel %vm778, %v767, 0.0
      %v795 = vsel %vm779, %v775, 0.0
      %796 = vrot.lane.b32.xlu0 %v414, 113
      %v797 = vpop.permute.xlu0 %796
      %798 = vrot.lane.b32.xlu0 %v416, 113
      %v799 = vpop.permute.xlu0 %798
      %800 = vrot.lane.b32.xlu0 %v418, 113
      %v801 = vpop.permute.xlu0 %800
      %802 = vrot.lane.b32.xlu0 %v420, 113
      %v803 = vpop.permute.xlu0 %802
      %804 = vrot.lane.b32.xlu0 %v422, 113
      %v805 = vpop.permute.xlu0 %804
      %806 = vrot.lane.b32.xlu0 %v424, 113
      %v807 = vpop.permute.xlu0 %806
      %808 = vrot.lane.b32.xlu0 %v426, 113
      %v809 = vpop.permute.xlu0 %808
      %810 = vrot.lane.b32.xlu0 %v428, 113
      %v811 = vpop.permute.xlu0 %810
      %812 = vrot.lane.b32.xlu0 %v415, 113
      %v813 = vpop.permute.xlu0 %812
      %814 = vrot.lane.b32.xlu0 %v417, 113
      %v815 = vpop.permute.xlu0 %814
      %816 = vrot.lane.b32.xlu0 %v419, 113
      %v817 = vpop.permute.xlu0 %816
      %818 = vrot.lane.b32.xlu0 %v421, 113
      %v819 = vpop.permute.xlu0 %818
      %820 = vrot.lane.b32.xlu0 %v423, 113
      %v821 = vpop.permute.xlu0 %820
      %822 = vrot.lane.b32.xlu0 %v425, 113
      %v823 = vpop.permute.xlu0 %822
      %824 = vrot.lane.b32.xlu0 %v427, 113
      %v825 = vpop.permute.xlu0 %824
      %826 = vrot.lane.b32.xlu0 %v429, 113
      %v827 = vpop.permute.xlu0 %826
      %vm828 = vcmp.lt.s32.totalorder %v431, 113
      %v829 = vsel %vm828, %v797, %v813
      %v830 = vsel %vm828, %v799, %v815
      %v831 = vsel %vm828, %v801, %v817
      %v832 = vsel %vm828, %v803, %v819
      %v833 = vsel %vm828, %v805, %v821
      %v834 = vsel %vm828, %v807, %v823
      %v835 = vsel %vm828, %v809, %v825
      %v836 = vsel %vm828, %v811, %v827
      %v837 = vsel %vm828, %v813, %v797
      %v838 = vsel %vm828, %v815, %v799
      %v839 = vsel %vm828, %v817, %v801
      %v840 = vsel %vm828, %v819, %v803
      %v841 = vsel %vm828, %v821, %v805
      %v842 = vsel %vm828, %v823, %v807
      %v843 = vsel %vm828, %v825, %v809
      %v844 = vsel %vm828, %v827, %v811
      %v845 = vsel %vm447, 1, 0
      %v846 = vsel %vm448, 1, 0
      %vm847 = vcmp.eq.s32.totalorder %v845, 1
      %vm848 = vcmp.eq.s32.totalorder %v846, 1
      %v849 = vsel %vm847, %v829, 0.0
      %v850 = vsel %vm848, %v837, 0.0
      %v851 = vsel %vm847, %v830, 0.0
      %v852 = vsel %vm848, %v838, 0.0
      %v853 = vsel %vm847, %v831, 0.0
      %v854 = vsel %vm848, %v839, 0.0
      %v855 = vsel %vm847, %v832, 0.0
      %v856 = vsel %vm848, %v840, 0.0
      %v857 = vsel %vm847, %v833, 0.0
      %v858 = vsel %vm848, %v841, 0.0
      %v859 = vsel %vm847, %v834, 0.0
      %v860 = vsel %vm848, %v842, 0.0
      %v861 = vsel %vm847, %v835, 0.0
      %v862 = vsel %vm848, %v843, 0.0
      %v863 = vsel %vm847, %v836, 0.0
      %v864 = vsel %vm848, %v844, 0.0
      %865 = vrot.lane.b32.xlu0 %v414, 112
      %v866 = vpop.permute.xlu0 %865
      %867 = vrot.lane.b32.xlu0 %v416, 112
      %v868 = vpop.permute.xlu0 %867
      %869 = vrot.lane.b32.xlu0 %v418, 112
      %v870 = vpop.permute.xlu0 %869
      %871 = vrot.lane.b32.xlu0 %v420, 112
      %v872 = vpop.permute.xlu0 %871
      %873 = vrot.lane.b32.xlu0 %v422, 112
      %v874 = vpop.permute.xlu0 %873
      %875 = vrot.lane.b32.xlu0 %v424, 112
      %v876 = vpop.permute.xlu0 %875
      %877 = vrot.lane.b32.xlu0 %v426, 112
      %v878 = vpop.permute.xlu0 %877
      %879 = vrot.lane.b32.xlu0 %v428, 112
      %v880 = vpop.permute.xlu0 %879
      %881 = vrot.lane.b32.xlu0 %v415, 112
      %v882 = vpop.permute.xlu0 %881
      %883 = vrot.lane.b32.xlu0 %v417, 112
      %v884 = vpop.permute.xlu0 %883
      %885 = vrot.lane.b32.xlu0 %v419, 112
      %v886 = vpop.permute.xlu0 %885
      %887 = vrot.lane.b32.xlu0 %v421, 112
      %v888 = vpop.permute.xlu0 %887
      %889 = vrot.lane.b32.xlu0 %v423, 112
      %v890 = vpop.permute.xlu0 %889
      %891 = vrot.lane.b32.xlu0 %v425, 112
      %v892 = vpop.permute.xlu0 %891
      %893 = vrot.lane.b32.xlu0 %v427, 112
      %v894 = vpop.permute.xlu0 %893
      %895 = vrot.lane.b32.xlu0 %v429, 112
      %v896 = vpop.permute.xlu0 %895
      %vm897 = vcmp.lt.s32.totalorder %v431, 112
      %v898 = vsel %vm897, %v866, %v882
      %v899 = vsel %vm897, %v868, %v884
      %v900 = vsel %vm897, %v870, %v886
      %v901 = vsel %vm897, %v872, %v888
      %v902 = vsel %vm897, %v874, %v890
      %v903 = vsel %vm897, %v876, %v892
      %v904 = vsel %vm897, %v878, %v894
      %v905 = vsel %vm897, %v880, %v896
      %v906 = vsel %vm897, %v882, %v866
      %v907 = vsel %vm897, %v884, %v868
      %v908 = vsel %vm897, %v886, %v870
      %v909 = vsel %vm897, %v888, %v872
      %v910 = vsel %vm897, %v890, %v874
      %v911 = vsel %vm897, %v892, %v876
      %v912 = vsel %vm897, %v894, %v878
      %v913 = vsel %vm897, %v896, %v880
      %v914 = vsel %vm445, 1, 0
      %v915 = vsel %vm446, 1, 0
      %vm916 = vcmp.eq.s32.totalorder %v914, 1
      %vm917 = vcmp.eq.s32.totalorder %v915, 1
      %v918 = vsel %vm916, %v898, 0.0
      %v919 = vsel %vm917, %v906, 0.0
      %v920 = vsel %vm916, %v899, 0.0
      %v921 = vsel %vm917, %v907, 0.0
      %v922 = vsel %vm916, %v900, 0.0
      %v923 = vsel %vm917, %v908, 0.0
      %v924 = vsel %vm916, %v901, 0.0
      %v925 = vsel %vm917, %v909, 0.0
      %v926 = vsel %vm916, %v902, 0.0
      %v927 = vsel %vm917, %v910, 0.0
      %v928 = vsel %vm916, %v903, 0.0
      %v929 = vsel %vm917, %v911, 0.0
      %v930 = vsel %vm916, %v904, 0.0
      %v931 = vsel %vm917, %v912, 0.0
      %v932 = vsel %vm916, %v905, 0.0
      %v933 = vsel %vm917, %v913, 0.0
      %934 = vrot.lane.b32.xlu0 %v414, 111
      %v935 = vpop.permute.xlu0 %934
      %936 = vrot.lane.b32.xlu0 %v416, 111
      %v937 = vpop.permute.xlu0 %936
      %938 = vrot.lane.b32.xlu0 %v418, 111
      %v939 = vpop.permute.xlu0 %938
      %940 = vrot.lane.b32.xlu0 %v420, 111
      %v941 = vpop.permute.xlu0 %940
      %942 = vrot.lane.b32.xlu0 %v422, 111
      %v943 = vpop.permute.xlu0 %942
      %944 = vrot.lane.b32.xlu0 %v424, 111
      %v945 = vpop.permute.xlu0 %944
      %946 = vrot.lane.b32.xlu0 %v426, 111
      %v947 = vpop.permute.xlu0 %946
      %948 = vrot.lane.b32.xlu0 %v428, 111
      %v949 = vpop.permute.xlu0 %948
      %950 = vrot.lane.b32.xlu0 %v415, 111
      %v951 = vpop.permute.xlu0 %950
      %952 = vrot.lane.b32.xlu0 %v417, 111
      %v953 = vpop.permute.xlu0 %952
      %954 = vrot.lane.b32.xlu0 %v419, 111
      %v955 = vpop.permute.xlu0 %954
      %956 = vrot.lane.b32.xlu0 %v421, 111
      %v957 = vpop.permute.xlu0 %956
      %958 = vrot.lane.b32.xlu0 %v423, 111
      %v959 = vpop.permute.xlu0 %958
      %960 = vrot.lane.b32.xlu0 %v425, 111
      %v961 = vpop.permute.xlu0 %960
      %962 = vrot.lane.b32.xlu0 %v427, 111
      %v963 = vpop.permute.xlu0 %962
      %964 = vrot.lane.b32.xlu0 %v429, 111
      %v965 = vpop.permute.xlu0 %964
      %vm966 = vcmp.lt.s32.totalorder %v431, 111
      %v967 = vsel %vm966, %v935, %v951
      %v968 = vsel %vm966, %v937, %v953
      %v969 = vsel %vm966, %v939, %v955
      %v970 = vsel %vm966, %v941, %v957
      %v971 = vsel %vm966, %v943, %v959
      %v972 = vsel %vm966, %v945, %v961
      %v973 = vsel %vm966, %v947, %v963
      %v974 = vsel %vm966, %v949, %v965
      %v975 = vsel %vm966, %v951, %v935
      %v976 = vsel %vm966, %v953, %v937
      %v977 = vsel %vm966, %v955, %v939
      %v978 = vsel %vm966, %v957, %v941
      %v979 = vsel %vm966, %v959, %v943
      %v980 = vsel %vm966, %v961, %v945
      %v981 = vsel %vm966, %v963, %v947
      %v982 = vsel %vm966, %v965, %v949
      %v983 = vsel %vm449, 1, 0
      %v984 = vsel %vm450, 1, 0
      %vm985 = vcmp.eq.s32.totalorder %v983, 1
      %vm986 = vcmp.eq.s32.totalorder %v984, 1
      %v987 = vsel %vm985, %v967, 0.0
      %v988 = vsel %vm986, %v975, 0.0
      %v989 = vsel %vm985, %v968, 0.0
      %v990 = vsel %vm986, %v976, 0.0
      %v991 = vsel %vm985, %v969, 0.0
      %v992 = vsel %vm986, %v977, 0.0
      %v993 = vsel %vm985, %v970, 0.0
      %v994 = vsel %vm986, %v978, 0.0
      %v995 = vsel %vm985, %v971, 0.0
      %v996 = vsel %vm986, %v979, 0.0
      %v997 = vsel %vm985, %v972, 0.0
      %v998 = vsel %vm986, %v980, 0.0
      %v999 = vsel %vm985, %v973, 0.0
      %v1000 = vsel %vm986, %v981, 0.0
      %v1001 = vsel %vm985, %v974, 0.0
      %v1002 = vsel %vm986, %v982, 0.0
      %v1003 = vld [vmem:[%s1] sm:$0xff]
      %v1004 = vld [vmem:[%s1 + $0x8] sm:$0xff]
      %v1005 = vld [vmem:[%s1 + $0x10] sm:$0xff]
      %v1006 = vld [vmem:[%s1 + $0x18] sm:$0xff]
      %v1007 = vld [vmem:[%s1 + $0x20] sm:$0xff]
      %v1008 = vld [vmem:[%s1 + $0x28] sm:$0xff]
      %v1009 = vld [vmem:[%s1 + $0x30] sm:$0xff]
      %v1010 = vld [vmem:[%s1 + $0x38] sm:$0xff]
      %v1011 = vld [vmem:[%s1 + $0x40] sm:$0xff]
      %v1012 = vld [vmem:[%s1 + $0x48] sm:$0xff]
      %v1013 = vld [vmem:[%s1 + $0x50] sm:$0xff]
      %v1014 = vld [vmem:[%s1 + $0x58] sm:$0xff]
      %v1015 = vld [vmem:[%s1 + $0x60] sm:$0xff]
      %v1016 = vld [vmem:[%s1 + $0x68] sm:$0xff]
      %v1017 = vld [vmem:[%s1 + $0x70] sm:$0xff]
      %v1018 = vld [vmem:[%s1 + $0x78] sm:$0xff]
      %v1019 = vld [vmem:[%s1 + $0x80] sm:$0xff]
      %v1020 = vld [vmem:[%s1 + $0x88] sm:$0xff]
      %v1021 = vld [vmem:[%s1 + $0x90] sm:$0xff]
      %v1022 = vld [vmem:[%s1 + $0x98] sm:$0xff]
      %v1023 = vld [vmem:[%s1 + $0xa0] sm:$0xff]
      %v1024 = vld [vmem:[%s1 + $0xa8] sm:$0xff]
      %v1025 = vld [vmem:[%s1 + $0xb0] sm:$0xff]
      %v1026 = vld [vmem:[%s1 + $0xb8] sm:$0xff]
      %v1027 = vld [vmem:[%s1 + $0xc0] sm:$0xff]
      %v1028 = vld [vmem:[%s1 + $0xc8] sm:$0xff]
      %v1029 = vld [vmem:[%s1 + $0xd0] sm:$0xff]
      %v1030 = vld [vmem:[%s1 + $0xd8] sm:$0xff]
      %v1031 = vld [vmem:[%s1 + $0xe0] sm:$0xff]
      %v1032 = vld [vmem:[%s1 + $0xe8] sm:$0xff]
      %v1033 = vld [vmem:[%s1 + $0xf0] sm:$0xff]
      %v1034 = vld [vmem:[%s1 + $0xf8] sm:$0xff]
      %v1035 = vld [vmem:[%s1 + $0x100] sm:$0xff]
      %v1036 = vld [vmem:[%s1 + $0x108] sm:$0xff]
      %v1037 = vld [vmem:[%s1 + $0x110] sm:$0xff]
      %v1038 = vld [vmem:[%s1 + $0x118] sm:$0xff]
      %v1039 = vld [vmem:[%s1 + $0x120] sm:$0xff]
      %v1040 = vld [vmem:[%s1 + $0x128] sm:$0xff]
      %v1041 = vld [vmem:[%s1 + $0x130] sm:$0xff]
      %v1042 = vld [vmem:[%s1 + $0x138] sm:$0xff]
      %v1043 = vld [vmem:[%s2] sm:$0xff]
      %v1044 = vld [vmem:[%s2 + $0x8] sm:$0xff]
      %v1045 = vld [vmem:[%s2 + $0x10] sm:$0xff]
      %v1046 = vld [vmem:[%s2 + $0x18] sm:$0xff]
      %v1047 = vld [vmem:[%s2 + $0x20] sm:$0xff]
      %v1048 = vld [vmem:[%s2 + $0x28] sm:$0xff]
      %v1049 = vld [vmem:[%s2 + $0x30] sm:$0xff]
      %v1050 = vld [vmem:[%s2 + $0x38] sm:$0xff]
      %1052 = vset.pattern.permute.xlu0 0
      %1053 = vperm.xlu0 %1052, %v1043
      %v1054 = vpop.permute.xlu0 %1053
      %1057 = vset.pattern.permute.xlu0 0
      %1058 = vperm.xlu0 %1057, %v1044
      %v1059 = vpop.permute.xlu0 %1058
      %1062 = vset.pattern.permute.xlu0 0
      %1063 = vperm.xlu0 %1062, %v1045
      %v1064 = vpop.permute.xlu0 %1063
      %1067 = vset.pattern.permute.xlu0 0
      %1068 = vperm.xlu0 %1067, %v1046
      %v1069 = vpop.permute.xlu0 %1068
      %1072 = vset.pattern.permute.xlu0 0
      %1073 = vperm.xlu0 %1072, %v1047
      %v1074 = vpop.permute.xlu0 %1073
      %1077 = vset.pattern.permute.xlu0 0
      %1078 = vperm.xlu0 %1077, %v1048
      %v1079 = vpop.permute.xlu0 %1078
      %1082 = vset.pattern.permute.xlu0 0
      %1083 = vperm.xlu0 %1082, %v1049
      %v1084 = vpop.permute.xlu0 %1083
      %1087 = vset.pattern.permute.xlu0 0
      %1088 = vperm.xlu0 %1087, %v1050
      %v1089 = vpop.permute.xlu0 %1088
      %vm1091 = vcmask 523264
      %v1093 = vsel %vm1091, %v1007, 0
      %v1096 = vsel %vm1091, %v1012, 0
      %v1099 = vsel %vm1091, %v1017, 0
      %v1102 = vsel %vm1091, %v1022, 0
      %v1105 = vsel %vm1091, %v1027, 0
      %v1108 = vsel %vm1091, %v1032, 0
      %v1111 = vsel %vm1091, %v1037, 0
      %v1114 = vsel %vm1091, %v1042, 0
      %1116 = vmatprep.subr.mxu0 %v505
      %1117 = vmatpush1.msra.mxu0 %v504
      %1118 = vmatprep.subr.mxu0 %v507
      %1119 = vmatpush1.msra.mxu0 %v506
      %1120 = vmatprep.subr.mxu0 %v509
      %1121 = vmatpush1.msra.mxu0 %v508
      %1122 = vmatprep.subr.mxu0 %v511
      %1123 = vmatpush1.msra.mxu0 %v510
      %1124 = vmatprep.subr.mxu0 %v513
      %1125 = vmatpush1.msra.mxu0 %v512
      %1126 = vmatprep.subr.mxu0 %v515
      %1127 = vmatpush1.msra.mxu0 %v514
      %1128 = vmatprep.subr.mxu0 %v517
      %1129 = vmatpush1.msra.mxu0 %v516
      %1130 = vmatprep.subr.mxu0 %v519
      %1131 = vmatpush1.msra.mxu0 %v518
      %1132 = vmatprep.subr.mxu0 %v574
      %1133 = vmatpush1.msra.mxu0 %v573
      %1134 = vmatprep.subr.mxu0 %v576
      %1135 = vmatpush1.msra.mxu0 %v575
      %1136 = vmatprep.subr.mxu0 %v578
      %1137 = vmatpush1.msra.mxu0 %v577
      %1138 = vmatprep.subr.mxu0 %v580
      %1139 = vmatpush1.msra.mxu0 %v579
      %1140 = vmatprep.subr.mxu0 %v582
      %1141 = vmatpush1.msra.mxu0 %v581
      %1142 = vmatprep.subr.mxu0 %v584
      %1143 = vmatpush1.msra.mxu0 %v583
      %1144 = vmatprep.subr.mxu0 %v586
      %1145 = vmatpush1.msra.mxu0 %v585
      %1146 = vmatprep.subr.mxu0 %v588
      %1147 = vmatpush1.msra.mxu0 %v587
      %1148 = vmatprep.subr.mxu0 %v643
      %1149 = vmatpush1.msra.mxu0 %v642
      %1150 = vmatprep.subr.mxu0 %v645
      %1151 = vmatpush1.msra.mxu0 %v644
      %1152 = vmatprep.subr.mxu0 %v647
      %1153 = vmatpush1.msra.mxu0 %v646
      %1154 = vmatprep.subr.mxu0 %v649
      %1155 = vmatpush1.msra.mxu0 %v648
      %1156 = vmatprep.subr.mxu0 %v651
      %1157 = vmatpush1.msra.mxu0 %v650
      %1158 = vmatprep.subr.mxu0 %v653
      %1159 = vmatpush1.msra.mxu0 %v652
      %1160 = vmatprep.subr.mxu0 %v655
      %1161 = vmatpush1.msra.mxu0 %v654
      %1162 = vmatprep.subr.mxu0 %v657
      %1163 = vmatpush1.msra.mxu0 %v656
      %1164 = vmatprep.subr.mxu0 %v712
      %1165 = vmatpush1.msra.mxu0 %v711
      %1166 = vmatprep.subr.mxu0 %v714
      %1167 = vmatpush1.msra.mxu0 %v713
      %1168 = vmatprep.subr.mxu0 %v716
      %1169 = vmatpush1.msra.mxu0 %v715
      %1170 = vmatprep.subr.mxu0 %v718
      %1171 = vmatpush1.msra.mxu0 %v717
      %1172 = vmatprep.subr.mxu0 %v720
      %1173 = vmatpush1.msra.mxu0 %v719
      %1174 = vmatprep.subr.mxu0 %v722
      %1175 = vmatpush1.msra.mxu0 %v721
      %1176 = vmatprep.subr.mxu0 %v724
      %1177 = vmatpush1.msra.mxu0 %v723
      %1178 = vmatprep.subr.mxu0 %v726
      %1179 = vmatpush1.msra.mxu0 %v725
      %1180 = vmatprep.mubr.f32.mxu0 %v1004
      %1181 = vmatmul.mubr.f32.gmra.mrb[0].mxu0 %v1003
      %v1182 = vpop.f32.mrb[0].mxu0
      %v1183 = vadd.f32 %v1054, %v1182
      %v1184 = vpop.f32.mrb[0].mxu0
      %v1185 = vadd.f32 %v1054, %v1184
      %1186 = vmatprep.mubr.f32.mxu0 %v1009
      %1187 = vmatmul.mubr.f32.gmra.mrb[0].mxu0 %v1008
      %v1188 = vpop.f32.mrb[0].mxu0
      %v1189 = vadd.f32 %v1059, %v1188
      %v1190 = vpop.f32.mrb[0].mxu0
      %v1191 = vadd.f32 %v1059, %v1190
      %1192 = vmatprep.mubr.f32.mxu0 %v1014
      %1193 = vmatmul.mubr.f32.gmra.mrb[0].mxu0 %v1013
      %v1194 = vpop.f32.mrb[0].mxu0
      %v1195 = vadd.f32 %v1064, %v1194
      %v1196 = vpop.f32.mrb[0].mxu0
      %v1197 = vadd.f32 %v1064, %v1196
      %1198 = vmatprep.mubr.f32.mxu0 %v1019
      %1199 = vmatmul.mubr.f32.gmra.mrb[0].mxu0 %v1018
      %v1200 = vpop.f32.mrb[0].mxu0
      %v1201 = vadd.f32 %v1069, %v1200
      %v1202 = vpop.f32.mrb[0].mxu0
      %v1203 = vadd.f32 %v1069, %v1202
      %1204 = vmatprep.mubr.f32.mxu0 %v1024
      %1205 = vmatmul.mubr.f32.gmra.mrb[0].mxu0 %v1023
      %v1206 = vpop.f32.mrb[0].mxu0
      %v1207 = vadd.f32 %v1074, %v1206
      %v1208 = vpop.f32.mrb[0].mxu0
      %v1209 = vadd.f32 %v1074, %v1208
      %1210 = vmatprep.mubr.f32.mxu0 %v1029
      %1211 = vmatmul.mubr.f32.gmra.mrb[0].mxu0 %v1028
      %v1212 = vpop.f32.mrb[0].mxu0
      %v1213 = vadd.f32 %v1079, %v1212
      %v1214 = vpop.f32.mrb[0].mxu0
      %v1215 = vadd.f32 %v1079, %v1214
      %1216 = vmatprep.mubr.f32.mxu0 %v1034
      %1217 = vmatmul.mubr.f32.gmra.mrb[0].mxu0 %v1033
      %v1218 = vpop.f32.mrb[0].mxu0
      %v1219 = vadd.f32 %v1084, %v1218
      %v1220 = vpop.f32.mrb[0].mxu0
      %v1221 = vadd.f32 %v1084, %v1220
      %1222 = vmatprep.mubr.f32.mxu0 %v1039
      %1223 = vmatmul.mubr.f32.gmra.mrb[0].mxu0 %v1038
      %v1224 = vpop.f32.mrb[0].mxu0
      %v1225 = vadd.f32 %v1089, %v1224
      %v1226 = vpop.f32.mrb[0].mxu0
      %v1227 = vadd.f32 %v1089, %v1226
      %1228 = vdwg.mxu0
      %1229 = vmatprep.subr.mxu0 %v415
      %1230 = vmatpush1.msra.mxu0 %v414
      %1231 = vmatprep.subr.mxu0 %v417
      %1232 = vmatpush1.msra.mxu0 %v416
      %1233 = vmatprep.subr.mxu0 %v419
      %1234 = vmatpush1.msra.mxu0 %v418
      %1235 = vmatprep.subr.mxu0 %v421
      %1236 = vmatpush1.msra.mxu0 %v420
      %1237 = vmatprep.subr.mxu0 %v423
      %1238 = vmatpush1.msra.mxu0 %v422
      %1239 = vmatprep.subr.mxu0 %v425
      %1240 = vmatpush1.msra.mxu0 %v424
      %1241 = vmatprep.subr.mxu0 %v427
      %1242 = vmatpush1.msra.mxu0 %v426
      %1243 = vmatprep.subr.mxu0 %v429
      %1244 = vmatpush1.msra.mxu0 %v428
      %1245 = vmatprep.subr.mxu0 %v781
      %1246 = vmatpush1.msra.mxu0 %v780
      %1247 = vmatprep.subr.mxu0 %v783
      %1248 = vmatpush1.msra.mxu0 %v782
      %1249 = vmatprep.subr.mxu0 %v785
      %1250 = vmatpush1.msra.mxu0 %v784
      %1251 = vmatprep.subr.mxu0 %v787
      %1252 = vmatpush1.msra.mxu0 %v786
      %1253 = vmatprep.subr.mxu0 %v789
      %1254 = vmatpush1.msra.mxu0 %v788
      %1255 = vmatprep.subr.mxu0 %v791
      %1256 = vmatpush1.msra.mxu0 %v790
      %1257 = vmatprep.subr.mxu0 %v793
      %1258 = vmatpush1.msra.mxu0 %v792
      %1259 = vmatprep.subr.mxu0 %v795
      %1260 = vmatpush1.msra.mxu0 %v794
      %1261 = vmatprep.subr.mxu0 %v850
      %1262 = vmatpush1.msra.mxu0 %v849
      %1263 = vmatprep.subr.mxu0 %v852
      %1264 = vmatpush1.msra.mxu0 %v851
      %1265 = vmatprep.subr.mxu0 %v854
      %1266 = vmatpush1.msra.mxu0 %v853
      %1267 = vmatprep.subr.mxu0 %v856
      %1268 = vmatpush1.msra.mxu0 %v855
      %1269 = vmatprep.subr.mxu0 %v858
      %1270 = vmatpush1.msra.mxu0 %v857
      %1271 = vmatprep.subr.mxu0 %v860
      %1272 = vmatpush1.msra.mxu0 %v859
      %1273 = vmatprep.subr.mxu0 %v862
      %1274 = vmatpush1.msra.mxu0 %v861
      %1275 = vmatprep.subr.mxu0 %v864
      %1276 = vmatpush1.msra.mxu0 %v863
      %1277 = vmatprep.subr.mxu0 %v919
      %1278 = vmatpush1.msra.mxu0 %v918
      %1279 = vmatprep.subr.mxu0 %v921
      %1280 = vmatpush1.msra.mxu0 %v920
      %1281 = vmatprep.subr.mxu0 %v923
      %1282 = vmatpush1.msra.mxu0 %v922
      %1283 = vmatprep.subr.mxu0 %v925
      %1284 = vmatpush1.msra.mxu0 %v924
      %1285 = vmatprep.subr.mxu0 %v927
      %1286 = vmatpush1.msra.mxu0 %v926
      %1287 = vmatprep.subr.mxu0 %v929
      %1288 = vmatpush1.msra.mxu0 %v928
      %1289 = vmatprep.subr.mxu0 %v931
      %1290 = vmatpush1.msra.mxu0 %v930
      %1291 = vmatprep.subr.mxu0 %v933
      %1292 = vmatpush1.msra.mxu0 %v932
      %1293 = vmatprep.mubr.f32.mxu0 %v1006
      %1294 = vmatmul.mubr.f32.gmra.mrb[0].mxu0 %v1005
      %v1295 = vpop.f32.mrb[0].mxu0
      %v1296 = vadd.f32 %v1183, %v1295
      %v1297 = vpop.f32.mrb[0].mxu0
      %v1298 = vadd.f32 %v1185, %v1297
      %1299 = vmatprep.mubr.f32.mxu0 %v1011
      %1300 = vmatmul.mubr.f32.gmra.mrb[0].mxu0 %v1010
      %v1301 = vpop.f32.mrb[0].mxu0
      %v1302 = vadd.f32 %v1189, %v1301
      %v1303 = vpop.f32.mrb[0].mxu0
      %v1304 = vadd.f32 %v1191, %v1303
      %1305 = vmatprep.mubr.f32.mxu0 %v1016
      %1306 = vmatmul.mubr.f32.gmra.mrb[0].mxu0 %v1015
      %v1307 = vpop.f32.mrb[0].mxu0
      %v1308 = vadd.f32 %v1195, %v1307
      %v1309 = vpop.f32.mrb[0].mxu0
      %v1310 = vadd.f32 %v1197, %v1309
      %1311 = vmatprep.mubr.f32.mxu0 %v1021
      %1312 = vmatmul.mubr.f32.gmra.mrb[0].mxu0 %v1020
      %v1313 = vpop.f32.mrb[0].mxu0
      %v1314 = vadd.f32 %v1201, %v1313
      %v1315 = vpop.f32.mrb[0].mxu0
      %v1316 = vadd.f32 %v1203, %v1315
      %1317 = vmatprep.mubr.f32.mxu0 %v1026
      %1318 = vmatmul.mubr.f32.gmra.mrb[0].mxu0 %v1025
      %v1319 = vpop.f32.mrb[0].mxu0
      %v1320 = vadd.f32 %v1207, %v1319
      %v1321 = vpop.f32.mrb[0].mxu0
      %v1322 = vadd.f32 %v1209, %v1321
      %1323 = vmatprep.mubr.f32.mxu0 %v1031
      %1324 = vmatmul.mubr.f32.gmra.mrb[0].mxu0 %v1030
      %v1325 = vpop.f32.mrb[0].mxu0
      %v1326 = vadd.f32 %v1213, %v1325
      %v1327 = vpop.f32.mrb[0].mxu0
      %v1328 = vadd.f32 %v1215, %v1327
      %1329 = vmatprep.mubr.f32.mxu0 %v1036
      %1330 = vmatmul.mubr.f32.gmra.mrb[0].mxu0 %v1035
      %v1331 = vpop.f32.mrb[0].mxu0
      %v1332 = vadd.f32 %v1219, %v1331
      %v1333 = vpop.f32.mrb[0].mxu0
      %v1334 = vadd.f32 %v1221, %v1333
      %1335 = vmatprep.mubr.f32.mxu0 %v1041
      %1336 = vmatmul.mubr.f32.gmra.mrb[0].mxu0 %v1040
      %v1337 = vpop.f32.mrb[0].mxu0
      %v1338 = vadd.f32 %v1225, %v1337
      %v1339 = vpop.f32.mrb[0].mxu0
      %v1340 = vadd.f32 %v1227, %v1339
      %1341 = vdwg.mxu0
      %1342 = vmatprep.subr.mxu0 %v988
      %1343 = vmatpush1.msra.mxu0 %v987
      %1344 = vmatprep.subr.mxu0 %v990
      %1345 = vmatpush1.msra.mxu0 %v989
      %1346 = vmatprep.subr.mxu0 %v992
      %1347 = vmatpush1.msra.mxu0 %v991
      %1348 = vmatprep.subr.mxu0 %v994
      %1349 = vmatpush1.msra.mxu0 %v993
      %1350 = vmatprep.subr.mxu0 %v996
      %1351 = vmatpush1.msra.mxu0 %v995
      %1352 = vmatprep.subr.mxu0 %v998
      %1353 = vmatpush1.msra.mxu0 %v997
      %1354 = vmatprep.subr.mxu0 %v1000
      %1355 = vmatpush1.msra.mxu0 %v999
      %1356 = vmatprep.subr.mxu0 %v1002
      %1357 = vmatpush1.msra.mxu0 %v1001
      %1358 = vmatprep.subr.mxu0 0.0
      %1359 = vmatpush1.msra.mxu0 0.0
      %1360 = vmatprep.subr.mxu0 0.0
      %1361 = vmatpush1.msra.mxu0 0.0
      %1362 = vmatprep.subr.mxu0 0.0
      %1363 = vmatpush1.msra.mxu0 0.0
      %1364 = vmatprep.subr.mxu0 0.0
      %1365 = vmatpush1.msra.mxu0 0.0
      %1366 = vmatprep.subr.mxu0 0.0
      %1367 = vmatpush1.msra.mxu0 0.0
      %1368 = vmatprep.subr.mxu0 0.0
      %1369 = vmatpush1.msra.mxu0 0.0
      %1370 = vmatprep.subr.mxu0 0.0
      %1371 = vmatpush1.msra.mxu0 0.0
      %1372 = vmatprep.subr.mxu0 0.0
      %1373 = vmatpush1.msra.mxu0 0.0
      %1374 = vmatprep.subr.mxu0 0.0
      %1375 = vmatpush1.msra.mxu0 0.0
      %1376 = vmatprep.subr.mxu0 0.0
      %1377 = vmatpush1.msra.mxu0 0.0
      %1378 = vmatprep.subr.mxu0 0.0
      %1379 = vmatpush1.msra.mxu0 0.0
      %1380 = vmatprep.subr.mxu0 0.0
      %1381 = vmatpush1.msra.mxu0 0.0
      %1382 = vmatprep.subr.mxu0 0.0
      %1383 = vmatpush1.msra.mxu0 0.0
      %1384 = vmatprep.subr.mxu0 0.0
      %1385 = vmatpush1.msra.mxu0 0.0
      %1386 = vmatprep.subr.mxu0 0.0
      %1387 = vmatpush1.msra.mxu0 0.0
      %1388 = vmatprep.subr.mxu0 0.0
      %1389 = vmatpush1.msra.mxu0 0.0
      %1390 = vmatprep.subr.mxu0 0.0
      %1391 = vmatpush1.msra.mxu0 0.0
      %1392 = vmatprep.subr.mxu0 0.0
      %1393 = vmatpush1.msra.mxu0 0.0
      %1394 = vmatprep.subr.mxu0 0.0
      %1395 = vmatpush1.msra.mxu0 0.0
      %1396 = vmatprep.subr.mxu0 0.0
      %1397 = vmatpush1.msra.mxu0 0.0
      %1398 = vmatprep.subr.mxu0 0.0
      %1399 = vmatpush1.msra.mxu0 0.0
      %1400 = vmatprep.subr.mxu0 0.0
      %1401 = vmatpush1.msra.mxu0 0.0
      %1402 = vmatprep.subr.mxu0 0.0
      %1403 = vmatpush1.msra.mxu0 0.0
      %1404 = vmatprep.subr.mxu0 0.0
      %1405 = vmatpush1.msra.mxu0 0.0
      %1406 = vmatprep.mubr.f32.mxu0 0.0
      %1407 = vmatmul.mubr.f32.gmra.mrb[0].mxu0 %v1093
      %v1408 = vpop.f32.mrb[0].mxu0
      %v1409 = vadd.f32 %v1296, %v1408
      %v1410 = vpop.f32.mrb[0].mxu0
      %v1411 = vadd.f32 %v1298, %v1410
      %1412 = vmatprep.mubr.f32.mxu0 0.0
      %1413 = vmatmul.mubr.f32.gmra.mrb[0].mxu0 %v1096
      %v1414 = vpop.f32.mrb[0].mxu0
      %v1415 = vadd.f32 %v1302, %v1414
      %v1416 = vpop.f32.mrb[0].mxu0
      %v1417 = vadd.f32 %v1304, %v1416
      %1418 = vmatprep.mubr.f32.mxu0 0.0
      %1419 = vmatmul.mubr.f32.gmra.mrb[0].mxu0 %v1099
      %v1420 = vpop.f32.mrb[0].mxu0
      %v1421 = vadd.f32 %v1308, %v1420
      %v1422 = vpop.f32.mrb[0].mxu0
      %v1423 = vadd.f32 %v1310, %v1422
      %1424 = vmatprep.mubr.f32.mxu0 0.0
      %1425 = vmatmul.mubr.f32.gmra.mrb[0].mxu0 %v1102
      %v1426 = vpop.f32.mrb[0].mxu0
      %v1427 = vadd.f32 %v1314, %v1426
      %v1428 = vpop.f32.mrb[0].mxu0
      %v1429 = vadd.f32 %v1316, %v1428
      %1430 = vmatprep.mubr.f32.mxu0 0.0
      %1431 = vmatmul.mubr.f32.gmra.mrb[0].mxu0 %v1105
      %v1432 = vpop.f32.mrb[0].mxu0
      %v1433 = vadd.f32 %v1320, %v1432
      %v1434 = vpop.f32.mrb[0].mxu0
      %v1435 = vadd.f32 %v1322, %v1434
      %1436 = vmatprep.mubr.f32.mxu0 0.0
      %1437 = vmatmul.mubr.f32.gmra.mrb[0].mxu0 %v1108
      %v1438 = vpop.f32.mrb[0].mxu0
      %v1439 = vadd.f32 %v1326, %v1438
      %v1440 = vpop.f32.mrb[0].mxu0
      %v1441 = vadd.f32 %v1328, %v1440
      %1442 = vmatprep.mubr.f32.mxu0 0.0
      %1443 = vmatmul.mubr.f32.gmra.mrb[0].mxu0 %v1111
      %v1444 = vpop.f32.mrb[0].mxu0
      %v1445 = vadd.f32 %v1332, %v1444
      %v1446 = vpop.f32.mrb[0].mxu0
      %v1447 = vadd.f32 %v1334, %v1446
      %1448 = vmatprep.mubr.f32.mxu0 0.0
      %1449 = vmatmul.mubr.f32.gmra.mrb[0].mxu0 %v1114
      %v1450 = vpop.f32.mrb[0].mxu0
      %v1451 = vadd.f32 %v1338, %v1450
      %v1452 = vpop.f32.mrb[0].mxu0
      %v1453 = vadd.f32 %v1340, %v1452
      %1454 = vdwg.mxu0
      %v1455 = vmul.f32 %v1409, 0.5
      %v1456 = vmul.f32 %v1411, 0.5
      %v1457 = vmul.f32 %v1415, 0.5
      %v1458 = vmul.f32 %v1417, 0.5
      %v1459 = vmul.f32 %v1421, 0.5
      %v1460 = vmul.f32 %v1423, 0.5
      %v1461 = vmul.f32 %v1427, 0.5
      %v1462 = vmul.f32 %v1429, 0.5
      %v1463 = vmul.f32 %v1433, 0.5
      %v1464 = vmul.f32 %v1435, 0.5
      %v1465 = vmul.f32 %v1439, 0.5
      %v1466 = vmul.f32 %v1441, 0.5
      %v1467 = vmul.f32 %v1445, 0.5
      %v1468 = vmul.f32 %v1447, 0.5
      %v1469 = vmul.f32 %v1451, 0.5
      %v1470 = vmul.f32 %v1453, 0.5
      %v1471 = vmul.f32 %v1409, 0.70710677
      %v1472 = vmul.f32 %v1411, 0.70710677
      %v1473 = vmul.f32 %v1415, 0.70710677
      %v1474 = vmul.f32 %v1417, 0.70710677
      %v1475 = vmul.f32 %v1421, 0.70710677
      %v1476 = vmul.f32 %v1423, 0.70710677
      %v1477 = vmul.f32 %v1427, 0.70710677
      %v1478 = vmul.f32 %v1429, 0.70710677
      %v1479 = vmul.f32 %v1433, 0.70710677
      %v1480 = vmul.f32 %v1435, 0.70710677
      %v1481 = vmul.f32 %v1439, 0.70710677
      %v1482 = vmul.f32 %v1441, 0.70710677
      %v1483 = vmul.f32 %v1445, 0.70710677
      %v1484 = vmul.f32 %v1447, 0.70710677
      %v1485 = vmul.f32 %v1451, 0.70710677
      %v1486 = vmul.f32 %v1453, 0.70710677
      %v1487 = verf.f32.pop %v1471
      %v1488 = verf.f32.pop %v1472
      %v1489 = verf.f32.pop %v1473
      %v1490 = verf.f32.pop %v1474
      %v1491 = verf.f32.pop %v1475
      %v1492 = verf.f32.pop %v1476
      %v1493 = verf.f32.pop %v1477
      %v1494 = verf.f32.pop %v1478
      %v1495 = verf.f32.pop %v1479
      %v1496 = verf.f32.pop %v1480
      %v1497 = verf.f32.pop %v1481
      %v1498 = verf.f32.pop %v1482
      %v1499 = verf.f32.pop %v1483
      %v1500 = verf.f32.pop %v1484
      %v1501 = verf.f32.pop %v1485
      %v1502 = verf.f32.pop %v1486
      %v1503 = vadd.f32 %v1487, 1.0
      %v1504 = vadd.f32 %v1488, 1.0
      %v1505 = vadd.f32 %v1489, 1.0
      %v1506 = vadd.f32 %v1490, 1.0
      %v1507 = vadd.f32 %v1491, 1.0
      %v1508 = vadd.f32 %v1492, 1.0
      %v1509 = vadd.f32 %v1493, 1.0
      %v1510 = vadd.f32 %v1494, 1.0
      %v1511 = vadd.f32 %v1495, 1.0
      %v1512 = vadd.f32 %v1496, 1.0
      %v1513 = vadd.f32 %v1497, 1.0
      %v1514 = vadd.f32 %v1498, 1.0
      %v1515 = vadd.f32 %v1499, 1.0
      %v1516 = vadd.f32 %v1500, 1.0
      %v1517 = vadd.f32 %v1501, 1.0
      %v1518 = vadd.f32 %v1502, 1.0
      %v1519 = vmul.f32 %v1455, %v1503
      %v1520 = vmul.f32 %v1456, %v1504
      %v1521 = vmul.f32 %v1457, %v1505
      %v1522 = vmul.f32 %v1458, %v1506
      %v1523 = vmul.f32 %v1459, %v1507
      %v1524 = vmul.f32 %v1460, %v1508
      %v1525 = vmul.f32 %v1461, %v1509
      %v1526 = vmul.f32 %v1462, %v1510
      %v1527 = vmul.f32 %v1463, %v1511
      %v1528 = vmul.f32 %v1464, %v1512
      %v1529 = vmul.f32 %v1465, %v1513
      %v1530 = vmul.f32 %v1466, %v1514
      %v1531 = vmul.f32 %v1467, %v1515
      %v1532 = vmul.f32 %v1468, %v1516
      %v1533 = vmul.f32 %v1469, %v1517
      %v1534 = vmul.f32 %v1470, %v1518
      %v1535 = vld [vmem:[%s3] sm:$0xff]
      %v1536 = vld [vmem:[%s3 + $0x8] sm:$0xff]
      %v1537 = vld [vmem:[%s3 + $0x10] sm:$0xff]
      %v1538 = vld [vmem:[%s3 + $0x18] sm:$0xff]
      %v1539 = vld [vmem:[%s3 + $0x20] sm:$0xff]
      %v1540 = vld [vmem:[%s3 + $0x28] sm:$0xff]
      %v1541 = vld [vmem:[%s3 + $0x30] sm:$0xff]
      %v1542 = vld [vmem:[%s3 + $0x38] sm:$0xff]
      %v1543 = vld [vmem:[%s4] sm:$0xff]
      %v1544 = vld [vmem:[%s4 + $0x8] sm:$0xff]
      %v1545 = vld [vmem:[%s4 + $0x10] sm:$0xff]
      %v1546 = vld [vmem:[%s4 + $0x18] sm:$0xff]
      %v1547 = vld [vmem:[%s4 + $0x20] sm:$0xff]
      %v1548 = vld [vmem:[%s4 + $0x28] sm:$0xff]
      %v1549 = vld [vmem:[%s4 + $0x30] sm:$0xff]
      %v1550 = vld [vmem:[%s4 + $0x38] sm:$0xff]
      %1552 = vset.pattern.permute.xlu0 0
      %1553 = vperm.xlu0 %1552, %v1543
      %v1554 = vpop.permute.xlu0 %1553
      %1557 = vset.pattern.permute.xlu0 0
      %1558 = vperm.xlu0 %1557, %v1544
      %v1559 = vpop.permute.xlu0 %1558
      %1562 = vset.pattern.permute.xlu0 0
      %1563 = vperm.xlu0 %1562, %v1545
      %v1564 = vpop.permute.xlu0 %1563
      %1567 = vset.pattern.permute.xlu0 0
      %1568 = vperm.xlu0 %1567, %v1546
      %v1569 = vpop.permute.xlu0 %1568
      %1572 = vset.pattern.permute.xlu0 0
      %1573 = vperm.xlu0 %1572, %v1547
      %v1574 = vpop.permute.xlu0 %1573
      %1577 = vset.pattern.permute.xlu0 0
      %1578 = vperm.xlu0 %1577, %v1548
      %v1579 = vpop.permute.xlu0 %1578
      %1582 = vset.pattern.permute.xlu0 0
      %1583 = vperm.xlu0 %1582, %v1549
      %v1584 = vpop.permute.xlu0 %1583
      %1587 = vset.pattern.permute.xlu0 0
      %1588 = vperm.xlu0 %1587, %v1550
      %v1589 = vpop.permute.xlu0 %1588
      %v1592 = vsel %vm1091, %v1535, 0
      %v1595 = vsel %vm1091, %v1536, 0
      %v1598 = vsel %vm1091, %v1537, 0
      %v1601 = vsel %vm1091, %v1538, 0
      %v1604 = vsel %vm1091, %v1539, 0
      %v1607 = vsel %vm1091, %v1540, 0
      %v1610 = vsel %vm1091, %v1541, 0
      %v1613 = vsel %vm1091, %v1542, 0
      %1615 = vmatprep.subr.mxu0 %v1520
      %1616 = vmatpush1.msra.mxu0 %v1519
      %1617 = vmatprep.subr.mxu0 %v1522
      %1618 = vmatpush1.msra.mxu0 %v1521
      %1619 = vmatprep.subr.mxu0 %v1524
      %1620 = vmatpush1.msra.mxu0 %v1523
      %1621 = vmatprep.subr.mxu0 %v1526
      %1622 = vmatpush1.msra.mxu0 %v1525
      %1623 = vmatprep.subr.mxu0 %v1528
      %1624 = vmatpush1.msra.mxu0 %v1527
      %1625 = vmatprep.subr.mxu0 %v1530
      %1626 = vmatpush1.msra.mxu0 %v1529
      %1627 = vmatprep.subr.mxu0 %v1532
      %1628 = vmatpush1.msra.mxu0 %v1531
      %1629 = vmatprep.subr.mxu0 %v1534
      %1630 = vmatpush1.msra.mxu0 %v1533
      %1631 = vmatprep.subr.mxu0 0.0
      %1632 = vmatpush1.msra.mxu0 0.0
      %1633 = vmatprep.subr.mxu0 0.0
      %1634 = vmatpush1.msra.mxu0 0.0
      %1635 = vmatprep.subr.mxu0 0.0
      %1636 = vmatpush1.msra.mxu0 0.0
      %1637 = vmatprep.subr.mxu0 0.0
      %1638 = vmatpush1.msra.mxu0 0.0
      %1639 = vmatprep.subr.mxu0 0.0
      %1640 = vmatpush1.msra.mxu0 0.0
      %1641 = vmatprep.subr.mxu0 0.0
      %1642 = vmatpush1.msra.mxu0 0.0
      %1643 = vmatprep.subr.mxu0 0.0
      %1644 = vmatpush1.msra.mxu0 0.0
      %1645 = vmatprep.subr.mxu0 0.0
      %1646 = vmatpush1.msra.mxu0 0.0
      %1647 = vmatprep.subr.mxu0 0.0
      %1648 = vmatpush1.msra.mxu0 0.0
      %1649 = vmatprep.subr.mxu0 0.0
      %1650 = vmatpush1.msra.mxu0 0.0
      %1651 = vmatprep.subr.mxu0 0.0
      %1652 = vmatpush1.msra.mxu0 0.0
      %1653 = vmatprep.subr.mxu0 0.0
      %1654 = vmatpush1.msra.mxu0 0.0
      %1655 = vmatprep.subr.mxu0 0.0
      %1656 = vmatpush1.msra.mxu0 0.0
      %1657 = vmatprep.subr.mxu0 0.0
      %1658 = vmatpush1.msra.mxu0 0.0
      %1659 = vmatprep.subr.mxu0 0.0
      %1660 = vmatpush1.msra.mxu0 0.0
      %1661 = vmatprep.subr.mxu0 0.0
      %1662 = vmatpush1.msra.mxu0 0.0
      %1663 = vmatprep.subr.mxu0 0.0
      %1664 = vmatpush1.msra.mxu0 0.0
      %1665 = vmatprep.subr.mxu0 0.0
      %1666 = vmatpush1.msra.mxu0 0.0
      %1667 = vmatprep.subr.mxu0 0.0
      %1668 = vmatpush1.msra.mxu0 0.0
      %1669 = vmatprep.subr.mxu0 0.0
      %1670 = vmatpush1.msra.mxu0 0.0
      %1671 = vmatprep.subr.mxu0 0.0
      %1672 = vmatpush1.msra.mxu0 0.0
      %1673 = vmatprep.subr.mxu0 0.0
      %1674 = vmatpush1.msra.mxu0 0.0
      %1675 = vmatprep.subr.mxu0 0.0
      %1676 = vmatpush1.msra.mxu0 0.0
      %1677 = vmatprep.subr.mxu0 0.0
      %1678 = vmatpush1.msra.mxu0 0.0
      %1679 = vmatprep.mubr.f32.mxu0 0.0
      %1680 = vmatmul.mubr.f32.gmra.mrb[0].mxu0 %v1592
      %v1681 = vpop.f32.mrb[0].mxu0
      %v1682 = vadd.f32 %v1554, %v1681
      %v1683 = vpop.f32.mrb[0].mxu0
      %v1684 = vadd.f32 %v1554, %v1683
      %1685 = vmatprep.mubr.f32.mxu0 0.0
      %1686 = vmatmul.mubr.f32.gmra.mrb[0].mxu0 %v1595
      %v1687 = vpop.f32.mrb[0].mxu0
      %v1688 = vadd.f32 %v1559, %v1687
      %v1689 = vpop.f32.mrb[0].mxu0
      %v1690 = vadd.f32 %v1559, %v1689
      %1691 = vmatprep.mubr.f32.mxu0 0.0
      %1692 = vmatmul.mubr.f32.gmra.mrb[0].mxu0 %v1598
      %v1693 = vpop.f32.mrb[0].mxu0
      %v1694 = vadd.f32 %v1564, %v1693
      %v1695 = vpop.f32.mrb[0].mxu0
      %v1696 = vadd.f32 %v1564, %v1695
      %1697 = vmatprep.mubr.f32.mxu0 0.0
      %1698 = vmatmul.mubr.f32.gmra.mrb[0].mxu0 %v1601
      %v1699 = vpop.f32.mrb[0].mxu0
      %v1700 = vadd.f32 %v1569, %v1699
      %v1701 = vpop.f32.mrb[0].mxu0
      %v1702 = vadd.f32 %v1569, %v1701
      %1703 = vmatprep.mubr.f32.mxu0 0.0
      %1704 = vmatmul.mubr.f32.gmra.mrb[0].mxu0 %v1604
      %v1705 = vpop.f32.mrb[0].mxu0
      %v1706 = vadd.f32 %v1574, %v1705
      %v1707 = vpop.f32.mrb[0].mxu0
      %v1708 = vadd.f32 %v1574, %v1707
      %1709 = vmatprep.mubr.f32.mxu0 0.0
      %1710 = vmatmul.mubr.f32.gmra.mrb[0].mxu0 %v1607
      %v1711 = vpop.f32.mrb[0].mxu0
      %v1712 = vadd.f32 %v1579, %v1711
      %v1713 = vpop.f32.mrb[0].mxu0
      %v1714 = vadd.f32 %v1579, %v1713
      %1715 = vmatprep.mubr.f32.mxu0 0.0
      %1716 = vmatmul.mubr.f32.gmra.mrb[0].mxu0 %v1610
      %v1717 = vpop.f32.mrb[0].mxu0
      %v1718 = vadd.f32 %v1584, %v1717
      %v1719 = vpop.f32.mrb[0].mxu0
      %v1720 = vadd.f32 %v1584, %v1719
      %1721 = vmatprep.mubr.f32.mxu0 0.0
      %1722 = vmatmul.mubr.f32.gmra.mrb[0].mxu0 %v1613
      %v1723 = vpop.f32.mrb[0].mxu0
      %v1724 = vadd.f32 %v1589, %v1723
      %v1725 = vpop.f32.mrb[0].mxu0
      %v1726 = vadd.f32 %v1589, %v1725
      %1727 = vdwg.mxu0
      %v1728 = vadd.f32 %v414, %v1682
      %v1729 = vadd.f32 %v415, %v1684
      %v1730 = vadd.f32 %v416, %v1688
      %v1731 = vadd.f32 %v417, %v1690
      %v1732 = vadd.f32 %v418, %v1694
      %v1733 = vadd.f32 %v419, %v1696
      %v1734 = vadd.f32 %v420, %v1700
      %v1735 = vadd.f32 %v421, %v1702
      %v1736 = vadd.f32 %v422, %v1706
      %v1737 = vadd.f32 %v423, %v1708
      %v1738 = vadd.f32 %v424, %v1712
      %v1739 = vadd.f32 %v425, %v1714
      %v1740 = vadd.f32 %v426, %v1718
      %v1741 = vadd.f32 %v427, %v1720
      %v1742 = vadd.f32 %v428, %v1724
      %v1743 = vadd.f32 %v429, %v1726
      %1744 = vrot.lane.b32.xlu0 %v1728, 17
      %v1745 = vpop.permute.xlu0 %1744
      %1746 = vrot.lane.b32.xlu0 %v1730, 17
      %v1747 = vpop.permute.xlu0 %1746
      %1748 = vrot.lane.b32.xlu0 %v1732, 17
      %v1749 = vpop.permute.xlu0 %1748
      %1750 = vrot.lane.b32.xlu0 %v1734, 17
      %v1751 = vpop.permute.xlu0 %1750
      %1752 = vrot.lane.b32.xlu0 %v1736, 17
      %v1753 = vpop.permute.xlu0 %1752
      %1754 = vrot.lane.b32.xlu0 %v1738, 17
      %v1755 = vpop.permute.xlu0 %1754
      %1756 = vrot.lane.b32.xlu0 %v1740, 17
      %v1757 = vpop.permute.xlu0 %1756
      %1758 = vrot.lane.b32.xlu0 %v1742, 17
      %v1759 = vpop.permute.xlu0 %1758
      %1760 = vrot.lane.b32.xlu0 %v1729, 17
      %v1761 = vpop.permute.xlu0 %1760
      %1762 = vrot.lane.b32.xlu0 %v1731, 17
      %v1763 = vpop.permute.xlu0 %1762
      %1764 = vrot.lane.b32.xlu0 %v1733, 17
      %v1765 = vpop.permute.xlu0 %1764
      %1766 = vrot.lane.b32.xlu0 %v1735, 17
      %v1767 = vpop.permute.xlu0 %1766
      %1768 = vrot.lane.b32.xlu0 %v1737, 17
      %v1769 = vpop.permute.xlu0 %1768
      %1770 = vrot.lane.b32.xlu0 %v1739, 17
      %v1771 = vpop.permute.xlu0 %1770
      %1772 = vrot.lane.b32.xlu0 %v1741, 17
      %v1773 = vpop.permute.xlu0 %1772
      %1774 = vrot.lane.b32.xlu0 %v1743, 17
      %v1775 = vpop.permute.xlu0 %1774
      %v1776 = vsel %vm483, %v1745, %v1761
      %v1777 = vsel %vm483, %v1747, %v1763
      %v1778 = vsel %vm483, %v1749, %v1765
      %v1779 = vsel %vm483, %v1751, %v1767
      %v1780 = vsel %vm483, %v1753, %v1769
      %v1781 = vsel %vm483, %v1755, %v1771
      %v1782 = vsel %vm483, %v1757, %v1773
      %v1783 = vsel %vm483, %v1759, %v1775
      %v1784 = vsel %vm483, %v1761, %v1745
      %v1785 = vsel %vm483, %v1763, %v1747
      %v1786 = vsel %vm483, %v1765, %v1749
      %v1787 = vsel %vm483, %v1767, %v1751
      %v1788 = vsel %vm483, %v1769, %v1753
      %v1789 = vsel %vm483, %v1771, %v1755
      %v1790 = vsel %vm483, %v1773, %v1757
      %v1791 = vsel %vm483, %v1775, %v1759
      %v1792 = vsel %vm502, %v1784, 0.0
      %v1793 = vsel %vm503, %v1776, 0.0
      %v1794 = vsel %vm502, %v1785, 0.0
      %v1795 = vsel %vm503, %v1777, 0.0
      %v1796 = vsel %vm502, %v1786, 0.0
      %v1797 = vsel %vm503, %v1778, 0.0
      %v1798 = vsel %vm502, %v1787, 0.0
      %v1799 = vsel %vm503, %v1779, 0.0
      %v1800 = vsel %vm502, %v1788, 0.0
      %v1801 = vsel %vm503, %v1780, 0.0
      %v1802 = vsel %vm502, %v1789, 0.0
      %v1803 = vsel %vm503, %v1781, 0.0
      %v1804 = vsel %vm502, %v1790, 0.0
      %v1805 = vsel %vm503, %v1782, 0.0
      %v1806 = vsel %vm502, %v1791, 0.0
      %v1807 = vsel %vm503, %v1783, 0.0
      %1808 = vrot.lane.b32.xlu0 %v1728, 16
      %v1809 = vpop.permute.xlu0 %1808
      %1810 = vrot.lane.b32.xlu0 %v1730, 16
      %v1811 = vpop.permute.xlu0 %1810
      %1812 = vrot.lane.b32.xlu0 %v1732, 16
      %v1813 = vpop.permute.xlu0 %1812
      %1814 = vrot.lane.b32.xlu0 %v1734, 16
      %v1815 = vpop.permute.xlu0 %1814
      %1816 = vrot.lane.b32.xlu0 %v1736, 16
      %v1817 = vpop.permute.xlu0 %1816
      %1818 = vrot.lane.b32.xlu0 %v1738, 16
      %v1819 = vpop.permute.xlu0 %1818
      %1820 = vrot.lane.b32.xlu0 %v1740, 16
      %v1821 = vpop.permute.xlu0 %1820
      %1822 = vrot.lane.b32.xlu0 %v1742, 16
      %v1823 = vpop.permute.xlu0 %1822
      %1824 = vrot.lane.b32.xlu0 %v1729, 16
      %v1825 = vpop.permute.xlu0 %1824
      %1826 = vrot.lane.b32.xlu0 %v1731, 16
      %v1827 = vpop.permute.xlu0 %1826
      %1828 = vrot.lane.b32.xlu0 %v1733, 16
      %v1829 = vpop.permute.xlu0 %1828
      %1830 = vrot.lane.b32.xlu0 %v1735, 16
      %v1831 = vpop.permute.xlu0 %1830
      %1832 = vrot.lane.b32.xlu0 %v1737, 16
      %v1833 = vpop.permute.xlu0 %1832
      %1834 = vrot.lane.b32.xlu0 %v1739, 16
      %v1835 = vpop.permute.xlu0 %1834
      %1836 = vrot.lane.b32.xlu0 %v1741, 16
      %v1837 = vpop.permute.xlu0 %1836
      %1838 = vrot.lane.b32.xlu0 %v1743, 16
      %v1839 = vpop.permute.xlu0 %1838
      %v1840 = vsel %vm552, %v1809, %v1825
      %v1841 = vsel %vm552, %v1811, %v1827
      %v1842 = vsel %vm552, %v1813, %v1829
      %v1843 = vsel %vm552, %v1815, %v1831
      %v1844 = vsel %vm552, %v1817, %v1833
      %v1845 = vsel %vm552, %v1819, %v1835
      %v1846 = vsel %vm552, %v1821, %v1837
      %v1847 = vsel %vm552, %v1823, %v1839
      %v1848 = vsel %vm552, %v1825, %v1809
      %v1849 = vsel %vm552, %v1827, %v1811
      %v1850 = vsel %vm552, %v1829, %v1813
      %v1851 = vsel %vm552, %v1831, %v1815
      %v1852 = vsel %vm552, %v1833, %v1817
      %v1853 = vsel %vm552, %v1835, %v1819
      %v1854 = vsel %vm552, %v1837, %v1821
      %v1855 = vsel %vm552, %v1839, %v1823
      %v1856 = vsel %vm571, %v1848, 0.0
      %v1857 = vsel %vm572, %v1840, 0.0
      %v1858 = vsel %vm571, %v1849, 0.0
      %v1859 = vsel %vm572, %v1841, 0.0
      %v1860 = vsel %vm571, %v1850, 0.0
      %v1861 = vsel %vm572, %v1842, 0.0
      %v1862 = vsel %vm571, %v1851, 0.0
      %v1863 = vsel %vm572, %v1843, 0.0
      %v1864 = vsel %vm571, %v1852, 0.0
      %v1865 = vsel %vm572, %v1844, 0.0
      %v1866 = vsel %vm571, %v1853, 0.0
      %v1867 = vsel %vm572, %v1845, 0.0
      %v1868 = vsel %vm571, %v1854, 0.0
      %v1869 = vsel %vm572, %v1846, 0.0
      %v1870 = vsel %vm571, %v1855, 0.0
      %v1871 = vsel %vm572, %v1847, 0.0
      %1872 = vrot.lane.b32.xlu0 %v1728, 15
      %v1873 = vpop.permute.xlu0 %1872
      %1874 = vrot.lane.b32.xlu0 %v1730, 15
      %v1875 = vpop.permute.xlu0 %1874
      %1876 = vrot.lane.b32.xlu0 %v1732, 15
      %v1877 = vpop.permute.xlu0 %1876
      %1878 = vrot.lane.b32.xlu0 %v1734, 15
      %v1879 = vpop.permute.xlu0 %1878
      %1880 = vrot.lane.b32.xlu0 %v1736, 15
      %v1881 = vpop.permute.xlu0 %1880
      %1882 = vrot.lane.b32.xlu0 %v1738, 15
      %v1883 = vpop.permute.xlu0 %1882
      %1884 = vrot.lane.b32.xlu0 %v1740, 15
      %v1885 = vpop.permute.xlu0 %1884
      %1886 = vrot.lane.b32.xlu0 %v1742, 15
      %v1887 = vpop.permute.xlu0 %1886
      %1888 = vrot.lane.b32.xlu0 %v1729, 15
      %v1889 = vpop.permute.xlu0 %1888
      %1890 = vrot.lane.b32.xlu0 %v1731, 15
      %v1891 = vpop.permute.xlu0 %1890
      %1892 = vrot.lane.b32.xlu0 %v1733, 15
      %v1893 = vpop.permute.xlu0 %1892
      %1894 = vrot.lane.b32.xlu0 %v1735, 15
      %v1895 = vpop.permute.xlu0 %1894
      %1896 = vrot.lane.b32.xlu0 %v1737, 15
      %v1897 = vpop.permute.xlu0 %1896
      %1898 = vrot.lane.b32.xlu0 %v1739, 15
      %v1899 = vpop.permute.xlu0 %1898
      %1900 = vrot.lane.b32.xlu0 %v1741, 15
      %v1901 = vpop.permute.xlu0 %1900
      %1902 = vrot.lane.b32.xlu0 %v1743, 15
      %v1903 = vpop.permute.xlu0 %1902
      %v1904 = vsel %vm621, %v1873, %v1889
      %v1905 = vsel %vm621, %v1875, %v1891
      %v1906 = vsel %vm621, %v1877, %v1893
      %v1907 = vsel %vm621, %v1879, %v1895
      %v1908 = vsel %vm621, %v1881, %v1897
      %v1909 = vsel %vm621, %v1883, %v1899
      %v1910 = vsel %vm621, %v1885, %v1901
      %v1911 = vsel %vm621, %v1887, %v1903
      %v1912 = vsel %vm621, %v1889, %v1873
      %v1913 = vsel %vm621, %v1891, %v1875
      %v1914 = vsel %vm621, %v1893, %v1877
      %v1915 = vsel %vm621, %v1895, %v1879
      %v1916 = vsel %vm621, %v1897, %v1881
      %v1917 = vsel %vm621, %v1899, %v1883
      %v1918 = vsel %vm621, %v1901, %v1885
      %v1919 = vsel %vm621, %v1903, %v1887
      %v1920 = vsel %vm640, %v1912, 0.0
      %v1921 = vsel %vm641, %v1904, 0.0
      %v1922 = vsel %vm640, %v1913, 0.0
      %v1923 = vsel %vm641, %v1905, 0.0
      %v1924 = vsel %vm640, %v1914, 0.0
      %v1925 = vsel %vm641, %v1906, 0.0
      %v1926 = vsel %vm640, %v1915, 0.0
      %v1927 = vsel %vm641, %v1907, 0.0
      %v1928 = vsel %vm640, %v1916, 0.0
      %v1929 = vsel %vm641, %v1908, 0.0
      %v1930 = vsel %vm640, %v1917, 0.0
      %v1931 = vsel %vm641, %v1909, 0.0
      %v1932 = vsel %vm640, %v1918, 0.0
      %v1933 = vsel %vm641, %v1910, 0.0
      %v1934 = vsel %vm640, %v1919, 0.0
      %v1935 = vsel %vm641, %v1911, 0.0
      %1936 = vrot.lane.b32.xlu0 %v1728, 1
      %v1937 = vpop.permute.xlu0 %1936
      %1938 = vrot.lane.b32.xlu0 %v1730, 1
      %v1939 = vpop.permute.xlu0 %1938
      %1940 = vrot.lane.b32.xlu0 %v1732, 1
      %v1941 = vpop.permute.xlu0 %1940
      %1942 = vrot.lane.b32.xlu0 %v1734, 1
      %v1943 = vpop.permute.xlu0 %1942
      %1944 = vrot.lane.b32.xlu0 %v1736, 1
      %v1945 = vpop.permute.xlu0 %1944
      %1946 = vrot.lane.b32.xlu0 %v1738, 1
      %v1947 = vpop.permute.xlu0 %1946
      %1948 = vrot.lane.b32.xlu0 %v1740, 1
      %v1949 = vpop.permute.xlu0 %1948
      %1950 = vrot.lane.b32.xlu0 %v1742, 1
      %v1951 = vpop.permute.xlu0 %1950
      %1952 = vrot.lane.b32.xlu0 %v1729, 1
      %v1953 = vpop.permute.xlu0 %1952
      %1954 = vrot.lane.b32.xlu0 %v1731, 1
      %v1955 = vpop.permute.xlu0 %1954
      %1956 = vrot.lane.b32.xlu0 %v1733, 1
      %v1957 = vpop.permute.xlu0 %1956
      %1958 = vrot.lane.b32.xlu0 %v1735, 1
      %v1959 = vpop.permute.xlu0 %1958
      %1960 = vrot.lane.b32.xlu0 %v1737, 1
      %v1961 = vpop.permute.xlu0 %1960
      %1962 = vrot.lane.b32.xlu0 %v1739, 1
      %v1963 = vpop.permute.xlu0 %1962
      %1964 = vrot.lane.b32.xlu0 %v1741, 1
      %v1965 = vpop.permute.xlu0 %1964
      %1966 = vrot.lane.b32.xlu0 %v1743, 1
      %v1967 = vpop.permute.xlu0 %1966
      %v1968 = vsel %vm690, %v1937, %v1953
      %v1969 = vsel %vm690, %v1939, %v1955
      %v1970 = vsel %vm690, %v1941, %v1957
      %v1971 = vsel %vm690, %v1943, %v1959
      %v1972 = vsel %vm690, %v1945, %v1961
      %v1973 = vsel %vm690, %v1947, %v1963
      %v1974 = vsel %vm690, %v1949, %v1965
      %v1975 = vsel %vm690, %v1951, %v1967
      %v1976 = vsel %vm690, %v1953, %v1937
      %v1977 = vsel %vm690, %v1955, %v1939
      %v1978 = vsel %vm690, %v1957, %v1941
      %v1979 = vsel %vm690, %v1959, %v1943
      %v1980 = vsel %vm690, %v1961, %v1945
      %v1981 = vsel %vm690, %v1963, %v1947
      %v1982 = vsel %vm690, %v1965, %v1949
      %v1983 = vsel %vm690, %v1967, %v1951
      %v1984 = vsel %vm709, %v1976, 0.0
      %v1985 = vsel %vm710, %v1968, 0.0
      %v1986 = vsel %vm709, %v1977, 0.0
      %v1987 = vsel %vm710, %v1969, 0.0
      %v1988 = vsel %vm709, %v1978, 0.0
      %v1989 = vsel %vm710, %v1970, 0.0
      %v1990 = vsel %vm709, %v1979, 0.0
      %v1991 = vsel %vm710, %v1971, 0.0
      %v1992 = vsel %vm709, %v1980, 0.0
      %v1993 = vsel %vm710, %v1972, 0.0
      %v1994 = vsel %vm709, %v1981, 0.0
      %v1995 = vsel %vm710, %v1973, 0.0
      %v1996 = vsel %vm709, %v1982, 0.0
      %v1997 = vsel %vm710, %v1974, 0.0
      %v1998 = vsel %vm709, %v1983, 0.0
      %v1999 = vsel %vm710, %v1975, 0.0
      %2000 = vrot.lane.b32.xlu0 %v1728, 127
      %v2001 = vpop.permute.xlu0 %2000
      %2002 = vrot.lane.b32.xlu0 %v1730, 127
      %v2003 = vpop.permute.xlu0 %2002
      %2004 = vrot.lane.b32.xlu0 %v1732, 127
      %v2005 = vpop.permute.xlu0 %2004
      %2006 = vrot.lane.b32.xlu0 %v1734, 127
      %v2007 = vpop.permute.xlu0 %2006
      %2008 = vrot.lane.b32.xlu0 %v1736, 127
      %v2009 = vpop.permute.xlu0 %2008
      %2010 = vrot.lane.b32.xlu0 %v1738, 127
      %v2011 = vpop.permute.xlu0 %2010
      %2012 = vrot.lane.b32.xlu0 %v1740, 127
      %v2013 = vpop.permute.xlu0 %2012
      %2014 = vrot.lane.b32.xlu0 %v1742, 127
      %v2015 = vpop.permute.xlu0 %2014
      %2016 = vrot.lane.b32.xlu0 %v1729, 127
      %v2017 = vpop.permute.xlu0 %2016
      %2018 = vrot.lane.b32.xlu0 %v1731, 127
      %v2019 = vpop.permute.xlu0 %2018
      %2020 = vrot.lane.b32.xlu0 %v1733, 127
      %v2021 = vpop.permute.xlu0 %2020
      %2022 = vrot.lane.b32.xlu0 %v1735, 127
      %v2023 = vpop.permute.xlu0 %2022
      %2024 = vrot.lane.b32.xlu0 %v1737, 127
      %v2025 = vpop.permute.xlu0 %2024
      %2026 = vrot.lane.b32.xlu0 %v1739, 127
      %v2027 = vpop.permute.xlu0 %2026
      %2028 = vrot.lane.b32.xlu0 %v1741, 127
      %v2029 = vpop.permute.xlu0 %2028
      %2030 = vrot.lane.b32.xlu0 %v1743, 127
      %v2031 = vpop.permute.xlu0 %2030
      %v2032 = vsel %vm759, %v2001, %v2017
      %v2033 = vsel %vm759, %v2003, %v2019
      %v2034 = vsel %vm759, %v2005, %v2021
      %v2035 = vsel %vm759, %v2007, %v2023
      %v2036 = vsel %vm759, %v2009, %v2025
      %v2037 = vsel %vm759, %v2011, %v2027
      %v2038 = vsel %vm759, %v2013, %v2029
      %v2039 = vsel %vm759, %v2015, %v2031
      %v2040 = vsel %vm759, %v2017, %v2001
      %v2041 = vsel %vm759, %v2019, %v2003
      %v2042 = vsel %vm759, %v2021, %v2005
      %v2043 = vsel %vm759, %v2023, %v2007
      %v2044 = vsel %vm759, %v2025, %v2009
      %v2045 = vsel %vm759, %v2027, %v2011
      %v2046 = vsel %vm759, %v2029, %v2013
      %v2047 = vsel %vm759, %v2031, %v2015
      %v2048 = vsel %vm778, %v2032, 0.0
      %v2049 = vsel %vm779, %v2040, 0.0
      %v2050 = vsel %vm778, %v2033, 0.0
      %v2051 = vsel %vm779, %v2041, 0.0
      %v2052 = vsel %vm778, %v2034, 0.0
      %v2053 = vsel %vm779, %v2042, 0.0
      %v2054 = vsel %vm778, %v2035, 0.0
      %v2055 = vsel %vm779, %v2043, 0.0
      %v2056 = vsel %vm778, %v2036, 0.0
      %v2057 = vsel %vm779, %v2044, 0.0
      %v2058 = vsel %vm778, %v2037, 0.0
      %v2059 = vsel %vm779, %v2045, 0.0
      %v2060 = vsel %vm778, %v2038, 0.0
      %v2061 = vsel %vm779, %v2046, 0.0
      %v2062 = vsel %vm778, %v2039, 0.0
      %v2063 = vsel %vm779, %v2047, 0.0
      %2064 = vrot.lane.b32.xlu0 %v1728, 113
      %v2065 = vpop.permute.xlu0 %2064
      %2066 = vrot.lane.b32.xlu0 %v1730, 113
      %v2067 = vpop.permute.xlu0 %2066
      %2068 = vrot.lane.b32.xlu0 %v1732, 113
      %v2069 = vpop.permute.xlu0 %2068
      %2070 = vrot.lane.b32.xlu0 %v1734, 113
      %v2071 = vpop.permute.xlu0 %2070
      %2072 = vrot.lane.b32.xlu0 %v1736, 113
      %v2073 = vpop.permute.xlu0 %2072
      %2074 = vrot.lane.b32.xlu0 %v1738, 113
      %v2075 = vpop.permute.xlu0 %2074
      %2076 = vrot.lane.b32.xlu0 %v1740, 113
      %v2077 = vpop.permute.xlu0 %2076
      %2078 = vrot.lane.b32.xlu0 %v1742, 113
      %v2079 = vpop.permute.xlu0 %2078
      %2080 = vrot.lane.b32.xlu0 %v1729, 113
      %v2081 = vpop.permute.xlu0 %2080
      %2082 = vrot.lane.b32.xlu0 %v1731, 113
      %v2083 = vpop.permute.xlu0 %2082
      %2084 = vrot.lane.b32.xlu0 %v1733, 113
      %v2085 = vpop.permute.xlu0 %2084
      %2086 = vrot.lane.b32.xlu0 %v1735, 113
      %v2087 = vpop.permute.xlu0 %2086
      %2088 = vrot.lane.b32.xlu0 %v1737, 113
      %v2089 = vpop.permute.xlu0 %2088
      %2090 = vrot.lane.b32.xlu0 %v1739, 113
      %v2091 = vpop.permute.xlu0 %2090
      %2092 = vrot.lane.b32.xlu0 %v1741, 113
      %v2093 = vpop.permute.xlu0 %2092
      %2094 = vrot.lane.b32.xlu0 %v1743, 113
      %v2095 = vpop.permute.xlu0 %2094
      %v2096 = vsel %vm828, %v2065, %v2081
      %v2097 = vsel %vm828, %v2067, %v2083
      %v2098 = vsel %vm828, %v2069, %v2085
      %v2099 = vsel %vm828, %v2071, %v2087
      %v2100 = vsel %vm828, %v2073, %v2089
      %v2101 = vsel %vm828, %v2075, %v2091
      %v2102 = vsel %vm828, %v2077, %v2093
      %v2103 = vsel %vm828, %v2079, %v2095
      %v2104 = vsel %vm828, %v2081, %v2065
      %v2105 = vsel %vm828, %v2083, %v2067
      %v2106 = vsel %vm828, %v2085, %v2069
      %v2107 = vsel %vm828, %v2087, %v2071
      %v2108 = vsel %vm828, %v2089, %v2073
      %v2109 = vsel %vm828, %v2091, %v2075
      %v2110 = vsel %vm828, %v2093, %v2077
      %v2111 = vsel %vm828, %v2095, %v2079
      %v2112 = vsel %vm847, %v2096, 0.0
      %v2113 = vsel %vm848, %v2104, 0.0
      %v2114 = vsel %vm847, %v2097, 0.0
      %v2115 = vsel %vm848, %v2105, 0.0
      %v2116 = vsel %vm847, %v2098, 0.0
      %v2117 = vsel %vm848, %v2106, 0.0
      %v2118 = vsel %vm847, %v2099, 0.0
      %v2119 = vsel %vm848, %v2107, 0.0
      %v2120 = vsel %vm847, %v2100, 0.0
      %v2121 = vsel %vm848, %v2108, 0.0
      %v2122 = vsel %vm847, %v2101, 0.0
      %v2123 = vsel %vm848, %v2109, 0.0
      %v2124 = vsel %vm847, %v2102, 0.0
      %v2125 = vsel %vm848, %v2110, 0.0
      %v2126 = vsel %vm847, %v2103, 0.0
      %v2127 = vsel %vm848, %v2111, 0.0
      %2128 = vrot.lane.b32.xlu0 %v1728, 112
      %v2129 = vpop.permute.xlu0 %2128
      %2130 = vrot.lane.b32.xlu0 %v1730, 112
      %v2131 = vpop.permute.xlu0 %2130
      %2132 = vrot.lane.b32.xlu0 %v1732, 112
      %v2133 = vpop.permute.xlu0 %2132
      %2134 = vrot.lane.b32.xlu0 %v1734, 112
      %v2135 = vpop.permute.xlu0 %2134
      %2136 = vrot.lane.b32.xlu0 %v1736, 112
      %v2137 = vpop.permute.xlu0 %2136
      %2138 = vrot.lane.b32.xlu0 %v1738, 112
      %v2139 = vpop.permute.xlu0 %2138
      %2140 = vrot.lane.b32.xlu0 %v1740, 112
      %v2141 = vpop.permute.xlu0 %2140
      %2142 = vrot.lane.b32.xlu0 %v1742, 112
      %v2143 = vpop.permute.xlu0 %2142
      %2144 = vrot.lane.b32.xlu0 %v1729, 112
      %v2145 = vpop.permute.xlu0 %2144
      %2146 = vrot.lane.b32.xlu0 %v1731, 112
      %v2147 = vpop.permute.xlu0 %2146
      %2148 = vrot.lane.b32.xlu0 %v1733, 112
      %v2149 = vpop.permute.xlu0 %2148
      %2150 = vrot.lane.b32.xlu0 %v1735, 112
      %v2151 = vpop.permute.xlu0 %2150
      %2152 = vrot.lane.b32.xlu0 %v1737, 112
      %v2153 = vpop.permute.xlu0 %2152
      %2154 = vrot.lane.b32.xlu0 %v1739, 112
      %v2155 = vpop.permute.xlu0 %2154
      %2156 = vrot.lane.b32.xlu0 %v1741, 112
      %v2157 = vpop.permute.xlu0 %2156
      %2158 = vrot.lane.b32.xlu0 %v1743, 112
      %v2159 = vpop.permute.xlu0 %2158
      %v2160 = vsel %vm897, %v2129, %v2145
      %v2161 = vsel %vm897, %v2131, %v2147
      %v2162 = vsel %vm897, %v2133, %v2149
      %v2163 = vsel %vm897, %v2135, %v2151
      %v2164 = vsel %vm897, %v2137, %v2153
      %v2165 = vsel %vm897, %v2139, %v2155
      %v2166 = vsel %vm897, %v2141, %v2157
      %v2167 = vsel %vm897, %v2143, %v2159
      %v2168 = vsel %vm897, %v2145, %v2129
      %v2169 = vsel %vm897, %v2147, %v2131
      %v2170 = vsel %vm897, %v2149, %v2133
      %v2171 = vsel %vm897, %v2151, %v2135
      %v2172 = vsel %vm897, %v2153, %v2137
      %v2173 = vsel %vm897, %v2155, %v2139
      %v2174 = vsel %vm897, %v2157, %v2141
      %v2175 = vsel %vm897, %v2159, %v2143
      %v2176 = vsel %vm916, %v2160, 0.0
      %v2177 = vsel %vm917, %v2168, 0.0
      %v2178 = vsel %vm916, %v2161, 0.0
      %v2179 = vsel %vm917, %v2169, 0.0
      %v2180 = vsel %vm916, %v2162, 0.0
      %v2181 = vsel %vm917, %v2170, 0.0
      %v2182 = vsel %vm916, %v2163, 0.0
      %v2183 = vsel %vm917, %v2171, 0.0
      %v2184 = vsel %vm916, %v2164, 0.0
      %v2185 = vsel %vm917, %v2172, 0.0
      %v2186 = vsel %vm916, %v2165, 0.0
      %v2187 = vsel %vm917, %v2173, 0.0
      %v2188 = vsel %vm916, %v2166, 0.0
      %v2189 = vsel %vm917, %v2174, 0.0
      %v2190 = vsel %vm916, %v2167, 0.0
      %v2191 = vsel %vm917, %v2175, 0.0
      %2192 = vrot.lane.b32.xlu0 %v1728, 111
      %v2193 = vpop.permute.xlu0 %2192
      %2194 = vrot.lane.b32.xlu0 %v1730, 111
      %v2195 = vpop.permute.xlu0 %2194
      %2196 = vrot.lane.b32.xlu0 %v1732, 111
      %v2197 = vpop.permute.xlu0 %2196
      %2198 = vrot.lane.b32.xlu0 %v1734, 111
      %v2199 = vpop.permute.xlu0 %2198
      %2200 = vrot.lane.b32.xlu0 %v1736, 111
      %v2201 = vpop.permute.xlu0 %2200
      %2202 = vrot.lane.b32.xlu0 %v1738, 111
      %v2203 = vpop.permute.xlu0 %2202
      %2204 = vrot.lane.b32.xlu0 %v1740, 111
      %v2205 = vpop.permute.xlu0 %2204
      %2206 = vrot.lane.b32.xlu0 %v1742, 111
      %v2207 = vpop.permute.xlu0 %2206
      %2208 = vrot.lane.b32.xlu0 %v1729, 111
      %v2209 = vpop.permute.xlu0 %2208
      %2210 = vrot.lane.b32.xlu0 %v1731, 111
      %v2211 = vpop.permute.xlu0 %2210
      %2212 = vrot.lane.b32.xlu0 %v1733, 111
      %v2213 = vpop.permute.xlu0 %2212
      %2214 = vrot.lane.b32.xlu0 %v1735, 111
      %v2215 = vpop.permute.xlu0 %2214
      %2216 = vrot.lane.b32.xlu0 %v1737, 111
      %v2217 = vpop.permute.xlu0 %2216
      %2218 = vrot.lane.b32.xlu0 %v1739, 111
      %v2219 = vpop.permute.xlu0 %2218
      %2220 = vrot.lane.b32.xlu0 %v1741, 111
      %v2221 = vpop.permute.xlu0 %2220
      %2222 = vrot.lane.b32.xlu0 %v1743, 111
      %v2223 = vpop.permute.xlu0 %2222
      %v2224 = vsel %vm966, %v2193, %v2209
      %v2225 = vsel %vm966, %v2195, %v2211
      %v2226 = vsel %vm966, %v2197, %v2213
      %v2227 = vsel %vm966, %v2199, %v2215
      %v2228 = vsel %vm966, %v2201, %v2217
      %v2229 = vsel %vm966, %v2203, %v2219
      %v2230 = vsel %vm966, %v2205, %v2221
      %v2231 = vsel %vm966, %v2207, %v2223
      %v2232 = vsel %vm966, %v2209, %v2193
      %v2233 = vsel %vm966, %v2211, %v2195
      %v2234 = vsel %vm966, %v2213, %v2197
      %v2235 = vsel %vm966, %v2215, %v2199
      %v2236 = vsel %vm966, %v2217, %v2201
      %v2237 = vsel %vm966, %v2219, %v2203
      %v2238 = vsel %vm966, %v2221, %v2205
      %v2239 = vsel %vm966, %v2223, %v2207
      %v2240 = vsel %vm985, %v2224, 0.0
      %v2241 = vsel %vm986, %v2232, 0.0
      %v2242 = vsel %vm985, %v2225, 0.0
      %v2243 = vsel %vm986, %v2233, 0.0
      %v2244 = vsel %vm985, %v2226, 0.0
      %v2245 = vsel %vm986, %v2234, 0.0
      %v2246 = vsel %vm985, %v2227, 0.0
      %v2247 = vsel %vm986, %v2235, 0.0
      %v2248 = vsel %vm985, %v2228, 0.0
      %v2249 = vsel %vm986, %v2236, 0.0
      %v2250 = vsel %vm985, %v2229, 0.0
      %v2251 = vsel %vm986, %v2237, 0.0
      %v2252 = vsel %vm985, %v2230, 0.0
      %v2253 = vsel %vm986, %v2238, 0.0
      %v2254 = vsel %vm985, %v2231, 0.0
      %v2255 = vsel %vm986, %v2239, 0.0
      %v2256 = vld [vmem:[%s5] sm:$0xff]
      %v2257 = vld [vmem:[%s5 + $0x8] sm:$0xff]
      %v2258 = vld [vmem:[%s5 + $0x10] sm:$0xff]
      %v2259 = vld [vmem:[%s5 + $0x18] sm:$0xff]
      %v2260 = vld [vmem:[%s5 + $0x20] sm:$0xff]
      %v2261 = vld [vmem:[%s5 + $0x28] sm:$0xff]
      %v2262 = vld [vmem:[%s5 + $0x30] sm:$0xff]
      %v2263 = vld [vmem:[%s5 + $0x38] sm:$0xff]
      %v2264 = vld [vmem:[%s5 + $0x40] sm:$0xff]
      %v2265 = vld [vmem:[%s5 + $0x48] sm:$0xff]
      %v2266 = vld [vmem:[%s5 + $0x50] sm:$0xff]
      %v2267 = vld [vmem:[%s5 + $0x58] sm:$0xff]
      %v2268 = vld [vmem:[%s5 + $0x60] sm:$0xff]
      %v2269 = vld [vmem:[%s5 + $0x68] sm:$0xff]
      %v2270 = vld [vmem:[%s5 + $0x70] sm:$0xff]
      %v2271 = vld [vmem:[%s5 + $0x78] sm:$0xff]
      %v2272 = vld [vmem:[%s5 + $0x80] sm:$0xff]
      %v2273 = vld [vmem:[%s5 + $0x88] sm:$0xff]
      %v2274 = vld [vmem:[%s5 + $0x90] sm:$0xff]
      %v2275 = vld [vmem:[%s5 + $0x98] sm:$0xff]
      %v2276 = vld [vmem:[%s5 + $0xa0] sm:$0xff]
      %v2277 = vld [vmem:[%s5 + $0xa8] sm:$0xff]
      %v2278 = vld [vmem:[%s5 + $0xb0] sm:$0xff]
      %v2279 = vld [vmem:[%s5 + $0xb8] sm:$0xff]
      %v2280 = vld [vmem:[%s5 + $0xc0] sm:$0xff]
      %v2281 = vld [vmem:[%s5 + $0xc8] sm:$0xff]
      %v2282 = vld [vmem:[%s5 + $0xd0] sm:$0xff]
      %v2283 = vld [vmem:[%s5 + $0xd8] sm:$0xff]
      %v2284 = vld [vmem:[%s5 + $0xe0] sm:$0xff]
      %v2285 = vld [vmem:[%s5 + $0xe8] sm:$0xff]
      %v2286 = vld [vmem:[%s5 + $0xf0] sm:$0xff]
      %v2287 = vld [vmem:[%s5 + $0xf8] sm:$0xff]
      %v2288 = vld [vmem:[%s5 + $0x100] sm:$0xff]
      %v2289 = vld [vmem:[%s5 + $0x108] sm:$0xff]
      %v2290 = vld [vmem:[%s5 + $0x110] sm:$0xff]
      %v2291 = vld [vmem:[%s5 + $0x118] sm:$0xff]
      %v2292 = vld [vmem:[%s5 + $0x120] sm:$0xff]
      %v2293 = vld [vmem:[%s5 + $0x128] sm:$0xff]
      %v2294 = vld [vmem:[%s5 + $0x130] sm:$0xff]
      %v2295 = vld [vmem:[%s5 + $0x138] sm:$0xff]
      %v2296 = vld [vmem:[%s5 + $0x140] sm:$0xff]
      %v2297 = vld [vmem:[%s5 + $0x148] sm:$0xff]
      %v2298 = vld [vmem:[%s5 + $0x150] sm:$0xff]
      %v2299 = vld [vmem:[%s5 + $0x158] sm:$0xff]
      %v2300 = vld [vmem:[%s5 + $0x160] sm:$0xff]
      %v2301 = vld [vmem:[%s5 + $0x168] sm:$0xff]
      %v2302 = vld [vmem:[%s5 + $0x170] sm:$0xff]
      %v2303 = vld [vmem:[%s5 + $0x178] sm:$0xff]
      %v2304 = vld [vmem:[%s5 + $0x180] sm:$0xff]
      %v2305 = vld [vmem:[%s5 + $0x188] sm:$0xff]
      %v2306 = vld [vmem:[%s5 + $0x190] sm:$0xff]
      %v2307 = vld [vmem:[%s5 + $0x198] sm:$0xff]
      %v2308 = vld [vmem:[%s5 + $0x1a0] sm:$0xff]
      %v2309 = vld [vmem:[%s5 + $0x1a8] sm:$0xff]
      %v2310 = vld [vmem:[%s5 + $0x1b0] sm:$0xff]
      %v2311 = vld [vmem:[%s5 + $0x1b8] sm:$0xff]
      %v2312 = vld [vmem:[%s5 + $0x1c0] sm:$0xff]
      %v2313 = vld [vmem:[%s5 + $0x1c8] sm:$0xff]
      %v2314 = vld [vmem:[%s5 + $0x1d0] sm:$0xff]
      %v2315 = vld [vmem:[%s5 + $0x1d8] sm:$0xff]
      %v2316 = vld [vmem:[%s5 + $0x1e0] sm:$0xff]
      %v2317 = vld [vmem:[%s5 + $0x1e8] sm:$0xff]
      %v2318 = vld [vmem:[%s5 + $0x1f0] sm:$0xff]
      %v2319 = vld [vmem:[%s5 + $0x1f8] sm:$0xff]
      %v2320 = vld [vmem:[%s5 + $0x200] sm:$0xff]
      %v2321 = vld [vmem:[%s5 + $0x208] sm:$0xff]
      %v2322 = vld [vmem:[%s5 + $0x210] sm:$0xff]
      %v2323 = vld [vmem:[%s5 + $0x218] sm:$0xff]
      %v2324 = vld [vmem:[%s5 + $0x220] sm:$0xff]
      %v2325 = vld [vmem:[%s5 + $0x228] sm:$0xff]
      %v2326 = vld [vmem:[%s5 + $0x230] sm:$0xff]
      %v2327 = vld [vmem:[%s5 + $0x238] sm:$0xff]
      %v2328 = vld [vmem:[%s5 + $0x240] sm:$0xff]
      %v2329 = vld [vmem:[%s5 + $0x248] sm:$0xff]
      %v2330 = vld [vmem:[%s5 + $0x250] sm:$0xff]
      %v2331 = vld [vmem:[%s5 + $0x258] sm:$0xff]
      %v2332 = vld [vmem:[%s5 + $0x260] sm:$0xff]
      %v2333 = vld [vmem:[%s5 + $0x268] sm:$0xff]
      %v2334 = vld [vmem:[%s5 + $0x270] sm:$0xff]
      %v2335 = vld [vmem:[%s5 + $0x278] sm:$0xff]
      %v2336 = vld [vmem:[%s5 + $0x280] sm:$0xff]
      %v2337 = vld [vmem:[%s5 + $0x288] sm:$0xff]
      %v2338 = vld [vmem:[%s5 + $0x290] sm:$0xff]
      %v2339 = vld [vmem:[%s5 + $0x298] sm:$0xff]
      %v2340 = vld [vmem:[%s5 + $0x2a0] sm:$0xff]
      %v2341 = vld [vmem:[%s5 + $0x2a8] sm:$0xff]
      %v2342 = vld [vmem:[%s5 + $0x2b0] sm:$0xff]
      %v2343 = vld [vmem:[%s5 + $0x2b8] sm:$0xff]
      %v2344 = vld [vmem:[%s5 + $0x2c0] sm:$0xff]
      %v2345 = vld [vmem:[%s5 + $0x2c8] sm:$0xff]
      %v2346 = vld [vmem:[%s5 + $0x2d0] sm:$0xff]
      %v2347 = vld [vmem:[%s5 + $0x2d8] sm:$0xff]
      %v2348 = vld [vmem:[%s5 + $0x2e0] sm:$0xff]
      %v2349 = vld [vmem:[%s5 + $0x2e8] sm:$0xff]
      %v2350 = vld [vmem:[%s5 + $0x2f0] sm:$0xff]
      %v2351 = vld [vmem:[%s5 + $0x2f8] sm:$0xff]
      %v2352 = vld [vmem:[%s5 + $0x300] sm:$0xff]
      %v2353 = vld [vmem:[%s5 + $0x308] sm:$0xff]
      %v2354 = vld [vmem:[%s5 + $0x310] sm:$0xff]
      %v2355 = vld [vmem:[%s5 + $0x318] sm:$0xff]
      %v2356 = vld [vmem:[%s5 + $0x320] sm:$0xff]
      %v2357 = vld [vmem:[%s5 + $0x328] sm:$0xff]
      %v2358 = vld [vmem:[%s5 + $0x330] sm:$0xff]
      %v2359 = vld [vmem:[%s5 + $0x338] sm:$0xff]
      %v2360 = vld [vmem:[%s5 + $0x340] sm:$0xff]
      %v2361 = vld [vmem:[%s5 + $0x348] sm:$0xff]
      %v2362 = vld [vmem:[%s5 + $0x350] sm:$0xff]
      %v2363 = vld [vmem:[%s5 + $0x358] sm:$0xff]
      %v2364 = vld [vmem:[%s5 + $0x360] sm:$0xff]
      %v2365 = vld [vmem:[%s5 + $0x368] sm:$0xff]
      %v2366 = vld [vmem:[%s5 + $0x370] sm:$0xff]
      %v2367 = vld [vmem:[%s5 + $0x378] sm:$0xff]
      %v2368 = vld [vmem:[%s5 + $0x380] sm:$0xff]
      %v2369 = vld [vmem:[%s5 + $0x388] sm:$0xff]
      %v2370 = vld [vmem:[%s5 + $0x390] sm:$0xff]
      %v2371 = vld [vmem:[%s5 + $0x398] sm:$0xff]
      %v2372 = vld [vmem:[%s5 + $0x3a0] sm:$0xff]
      %v2373 = vld [vmem:[%s5 + $0x3a8] sm:$0xff]
      %v2374 = vld [vmem:[%s5 + $0x3b0] sm:$0xff]
      %v2375 = vld [vmem:[%s5 + $0x3b8] sm:$0xff]
      %v2376 = vld [vmem:[%s6] sm:$0xff]
      %v2377 = vld [vmem:[%s6 + $0x8] sm:$0xff]
      %v2378 = vld [vmem:[%s6 + $0x10] sm:$0xff]
      %v2379 = vld [vmem:[%s6 + $0x18] sm:$0xff]
      %v2380 = vld [vmem:[%s6 + $0x20] sm:$0xff]
      %v2381 = vld [vmem:[%s6 + $0x28] sm:$0xff]
      %v2382 = vld [vmem:[%s6 + $0x30] sm:$0xff]
      %v2383 = vld [vmem:[%s6 + $0x38] sm:$0xff]
      %v2384 = vld [vmem:[%s6 + $0x40] sm:$0xff]
      %v2385 = vld [vmem:[%s6 + $0x48] sm:$0xff]
      %v2386 = vld [vmem:[%s6 + $0x50] sm:$0xff]
      %v2387 = vld [vmem:[%s6 + $0x58] sm:$0xff]
      %v2388 = vld [vmem:[%s6 + $0x60] sm:$0xff]
      %v2389 = vld [vmem:[%s6 + $0x68] sm:$0xff]
      %v2390 = vld [vmem:[%s6 + $0x70] sm:$0xff]
      %v2391 = vld [vmem:[%s6 + $0x78] sm:$0xff]
      %v2392 = vld [vmem:[%s6 + $0x80] sm:$0xff]
      %v2393 = vld [vmem:[%s6 + $0x88] sm:$0xff]
      %v2394 = vld [vmem:[%s6 + $0x90] sm:$0xff]
      %v2395 = vld [vmem:[%s6 + $0x98] sm:$0xff]
      %v2396 = vld [vmem:[%s6 + $0xa0] sm:$0xff]
      %v2397 = vld [vmem:[%s6 + $0xa8] sm:$0xff]
      %v2398 = vld [vmem:[%s6 + $0xb0] sm:$0xff]
      %v2399 = vld [vmem:[%s6 + $0xb8] sm:$0xff]
      %2401 = vset.pattern.permute.xlu0 0
      %2402 = vperm.xlu0 %2401, %v2376
      %v2403 = vpop.permute.xlu0 %2402
      %2406 = vset.pattern.permute.xlu0 0
      %2407 = vperm.xlu0 %2406, %v2377
      %v2408 = vpop.permute.xlu0 %2407
      %2411 = vset.pattern.permute.xlu0 0
      %2412 = vperm.xlu0 %2411, %v2378
      %v2413 = vpop.permute.xlu0 %2412
      %2416 = vset.pattern.permute.xlu0 0
      %2417 = vperm.xlu0 %2416, %v2379
      %v2418 = vpop.permute.xlu0 %2417
      %2421 = vset.pattern.permute.xlu0 0
      %2422 = vperm.xlu0 %2421, %v2380
      %v2423 = vpop.permute.xlu0 %2422
      %2426 = vset.pattern.permute.xlu0 0
      %2427 = vperm.xlu0 %2426, %v2381
      %v2428 = vpop.permute.xlu0 %2427
      %2431 = vset.pattern.permute.xlu0 0
      %2432 = vperm.xlu0 %2431, %v2382
      %v2433 = vpop.permute.xlu0 %2432
      %2436 = vset.pattern.permute.xlu0 0
      %2437 = vperm.xlu0 %2436, %v2383
      %v2438 = vpop.permute.xlu0 %2437
      %2441 = vset.pattern.permute.xlu0 0
      %2442 = vperm.xlu0 %2441, %v2384
      %v2443 = vpop.permute.xlu0 %2442
      %2446 = vset.pattern.permute.xlu0 0
      %2447 = vperm.xlu0 %2446, %v2385
      %v2448 = vpop.permute.xlu0 %2447
      %2451 = vset.pattern.permute.xlu0 0
      %2452 = vperm.xlu0 %2451, %v2386
      %v2453 = vpop.permute.xlu0 %2452
      %2456 = vset.pattern.permute.xlu0 0
      %2457 = vperm.xlu0 %2456, %v2387
      %v2458 = vpop.permute.xlu0 %2457
      %2461 = vset.pattern.permute.xlu0 0
      %2462 = vperm.xlu0 %2461, %v2388
      %v2463 = vpop.permute.xlu0 %2462
      %2466 = vset.pattern.permute.xlu0 0
      %2467 = vperm.xlu0 %2466, %v2389
      %v2468 = vpop.permute.xlu0 %2467
      %2471 = vset.pattern.permute.xlu0 0
      %2472 = vperm.xlu0 %2471, %v2390
      %v2473 = vpop.permute.xlu0 %2472
      %2476 = vset.pattern.permute.xlu0 0
      %2477 = vperm.xlu0 %2476, %v2391
      %v2478 = vpop.permute.xlu0 %2477
      %2481 = vset.pattern.permute.xlu0 0
      %2482 = vperm.xlu0 %2481, %v2392
      %v2483 = vpop.permute.xlu0 %2482
      %2486 = vset.pattern.permute.xlu0 0
      %2487 = vperm.xlu0 %2486, %v2393
      %v2488 = vpop.permute.xlu0 %2487
      %2491 = vset.pattern.permute.xlu0 0
      %2492 = vperm.xlu0 %2491, %v2394
      %v2493 = vpop.permute.xlu0 %2492
      %2496 = vset.pattern.permute.xlu0 0
      %2497 = vperm.xlu0 %2496, %v2395
      %v2498 = vpop.permute.xlu0 %2497
      %2501 = vset.pattern.permute.xlu0 0
      %2502 = vperm.xlu0 %2501, %v2396
      %v2503 = vpop.permute.xlu0 %2502
      %2506 = vset.pattern.permute.xlu0 0
      %2507 = vperm.xlu0 %2506, %v2397
      %v2508 = vpop.permute.xlu0 %2507
      %2511 = vset.pattern.permute.xlu0 0
      %2512 = vperm.xlu0 %2511, %v2398
      %v2513 = vpop.permute.xlu0 %2512
      %2516 = vset.pattern.permute.xlu0 0
      %2517 = vperm.xlu0 %2516, %v2399
      %v2518 = vpop.permute.xlu0 %2517
      %v2521 = vsel %vm1091, %v2260, 0
      %v2524 = vsel %vm1091, %v2265, 0
      %v2527 = vsel %vm1091, %v2270, 0
      %v2530 = vsel %vm1091, %v2275, 0
      %v2533 = vsel %vm1091, %v2280, 0
      %v2536 = vsel %vm1091, %v2285, 0
      %v2539 = vsel %vm1091, %v2290, 0
      %v2542 = vsel %vm1091, %v2295, 0
      %v2545 = vsel %vm1091, %v2300, 0
      %v2548 = vsel %vm1091, %v2305, 0
      %v2551 = vsel %vm1091, %v2310, 0
      %v2554 = vsel %vm1091, %v2315, 0
      %v2557 = vsel %vm1091, %v2320, 0
      %v2560 = vsel %vm1091, %v2325, 0
      %v2563 = vsel %vm1091, %v2330, 0
      %v2566 = vsel %vm1091, %v2335, 0
      %v2569 = vsel %vm1091, %v2340, 0
      %v2572 = vsel %vm1091, %v2345, 0
      %v2575 = vsel %vm1091, %v2350, 0
      %v2578 = vsel %vm1091, %v2355, 0
      %v2581 = vsel %vm1091, %v2360, 0
      %v2584 = vsel %vm1091, %v2365, 0
      %v2587 = vsel %vm1091, %v2370, 0
      %v2590 = vsel %vm1091, %v2375, 0
      %2592 = vmatprep.subr.mxu0 %v1793
      %2593 = vmatpush1.msra.mxu0 %v1792
      %2594 = vmatprep.subr.mxu0 %v1795
      %2595 = vmatpush1.msra.mxu0 %v1794
      %2596 = vmatprep.subr.mxu0 %v1797
      %2597 = vmatpush1.msra.mxu0 %v1796
      %2598 = vmatprep.subr.mxu0 %v1799
      %2599 = vmatpush1.msra.mxu0 %v1798
      %2600 = vmatprep.subr.mxu0 %v1801
      %2601 = vmatpush1.msra.mxu0 %v1800
      %2602 = vmatprep.subr.mxu0 %v1803
      %2603 = vmatpush1.msra.mxu0 %v1802
      %2604 = vmatprep.subr.mxu0 %v1805
      %2605 = vmatpush1.msra.mxu0 %v1804
      %2606 = vmatprep.subr.mxu0 %v1807
      %2607 = vmatpush1.msra.mxu0 %v1806
      %2608 = vmatprep.subr.mxu0 %v1857
      %2609 = vmatpush1.msra.mxu0 %v1856
      %2610 = vmatprep.subr.mxu0 %v1859
      %2611 = vmatpush1.msra.mxu0 %v1858
      %2612 = vmatprep.subr.mxu0 %v1861
      %2613 = vmatpush1.msra.mxu0 %v1860
      %2614 = vmatprep.subr.mxu0 %v1863
      %2615 = vmatpush1.msra.mxu0 %v1862
      %2616 = vmatprep.subr.mxu0 %v1865
      %2617 = vmatpush1.msra.mxu0 %v1864
      %2618 = vmatprep.subr.mxu0 %v1867
      %2619 = vmatpush1.msra.mxu0 %v1866
      %2620 = vmatprep.subr.mxu0 %v1869
      %2621 = vmatpush1.msra.mxu0 %v1868
      %2622 = vmatprep.subr.mxu0 %v1871
      %2623 = vmatpush1.msra.mxu0 %v1870
      %2624 = vmatprep.subr.mxu0 %v1921
      %2625 = vmatpush1.msra.mxu0 %v1920
      %2626 = vmatprep.subr.mxu0 %v1923
      %2627 = vmatpush1.msra.mxu0 %v1922
      %2628 = vmatprep.subr.mxu0 %v1925
      %2629 = vmatpush1.msra.mxu0 %v1924
      %2630 = vmatprep.subr.mxu0 %v1927
      %2631 = vmatpush1.msra.mxu0 %v1926
      %2632 = vmatprep.subr.mxu0 %v1929
      %2633 = vmatpush1.msra.mxu0 %v1928
      %2634 = vmatprep.subr.mxu0 %v1931
      %2635 = vmatpush1.msra.mxu0 %v1930
      %2636 = vmatprep.subr.mxu0 %v1933
      %2637 = vmatpush1.msra.mxu0 %v1932
      %2638 = vmatprep.subr.mxu0 %v1935
      %2639 = vmatpush1.msra.mxu0 %v1934
      %2640 = vmatprep.subr.mxu0 %v1985
      %2641 = vmatpush1.msra.mxu0 %v1984
      %2642 = vmatprep.subr.mxu0 %v1987
      %2643 = vmatpush1.msra.mxu0 %v1986
      %2644 = vmatprep.subr.mxu0 %v1989
      %2645 = vmatpush1.msra.mxu0 %v1988
      %2646 = vmatprep.subr.mxu0 %v1991
      %2647 = vmatpush1.msra.mxu0 %v1990
      %2648 = vmatprep.subr.mxu0 %v1993
      %2649 = vmatpush1.msra.mxu0 %v1992
      %2650 = vmatprep.subr.mxu0 %v1995
      %2651 = vmatpush1.msra.mxu0 %v1994
      %2652 = vmatprep.subr.mxu0 %v1997
      %2653 = vmatpush1.msra.mxu0 %v1996
      %2654 = vmatprep.subr.mxu0 %v1999
      %2655 = vmatpush1.msra.mxu0 %v1998
      %2656 = vmatprep.mubr.f32.mxu0 %v2257
      %2657 = vmatmul.mubr.f32.gmra.mrb[0].mxu0 %v2256
      %v2658 = vpop.f32.mrb[0].mxu0
      %v2659 = vadd.f32 %v2403, %v2658
      %v2660 = vpop.f32.mrb[0].mxu0
      %v2661 = vadd.f32 %v2403, %v2660
      %2662 = vmatprep.mubr.f32.mxu0 %v2262
      %2663 = vmatmul.mubr.f32.gmra.mrb[0].mxu0 %v2261
      %v2664 = vpop.f32.mrb[0].mxu0
      %v2665 = vadd.f32 %v2408, %v2664
      %v2666 = vpop.f32.mrb[0].mxu0
      %v2667 = vadd.f32 %v2408, %v2666
      %2668 = vmatprep.mubr.f32.mxu0 %v2267
      %2669 = vmatmul.mubr.f32.gmra.mrb[0].mxu0 %v2266
      %v2670 = vpop.f32.mrb[0].mxu0
      %v2671 = vadd.f32 %v2413, %v2670
      %v2672 = vpop.f32.mrb[0].mxu0
      %v2673 = vadd.f32 %v2413, %v2672
      %2674 = vmatprep.mubr.f32.mxu0 %v2272
      %2675 = vmatmul.mubr.f32.gmra.mrb[0].mxu0 %v2271
      %v2676 = vpop.f32.mrb[0].mxu0
      %v2677 = vadd.f32 %v2418, %v2676
      %v2678 = vpop.f32.mrb[0].mxu0
      %v2679 = vadd.f32 %v2418, %v2678
      %2680 = vmatprep.mubr.f32.mxu0 %v2277
      %2681 = vmatmul.mubr.f32.gmra.mrb[0].mxu0 %v2276
      %v2682 = vpop.f32.mrb[0].mxu0
      %v2683 = vadd.f32 %v2423, %v2682
      %v2684 = vpop.f32.mrb[0].mxu0
      %v2685 = vadd.f32 %v2423, %v2684
      %2686 = vmatprep.mubr.f32.mxu0 %v2282
      %2687 = vmatmul.mubr.f32.gmra.mrb[0].mxu0 %v2281
      %v2688 = vpop.f32.mrb[0].mxu0
      %v2689 = vadd.f32 %v2428, %v2688
      %v2690 = vpop.f32.mrb[0].mxu0
      %v2691 = vadd.f32 %v2428, %v2690
      %2692 = vmatprep.mubr.f32.mxu0 %v2287
      %2693 = vmatmul.mubr.f32.gmra.mrb[0].mxu0 %v2286
      %v2694 = vpop.f32.mrb[0].mxu0
      %v2695 = vadd.f32 %v2433, %v2694
      %v2696 = vpop.f32.mrb[0].mxu0
      %v2697 = vadd.f32 %v2433, %v2696
      %2698 = vmatprep.mubr.f32.mxu0 %v2292
      %2699 = vmatmul.mubr.f32.gmra.mrb[0].mxu0 %v2291
      %v2700 = vpop.f32.mrb[0].mxu0
      %v2701 = vadd.f32 %v2438, %v2700
      %v2702 = vpop.f32.mrb[0].mxu0
      %v2703 = vadd.f32 %v2438, %v2702
      %2704 = vmatprep.mubr.f32.mxu0 %v2297
      %2705 = vmatmul.mubr.f32.gmra.mrb[0].mxu0 %v2296
      %v2706 = vpop.f32.mrb[0].mxu0
      %v2707 = vadd.f32 %v2443, %v2706
      %v2708 = vpop.f32.mrb[0].mxu0
      %v2709 = vadd.f32 %v2443, %v2708
      %2710 = vmatprep.mubr.f32.mxu0 %v2302
      %2711 = vmatmul.mubr.f32.gmra.mrb[0].mxu0 %v2301
      %v2712 = vpop.f32.mrb[0].mxu0
      %v2713 = vadd.f32 %v2448, %v2712
      %v2714 = vpop.f32.mrb[0].mxu0
      %v2715 = vadd.f32 %v2448, %v2714
      %2716 = vmatprep.mubr.f32.mxu0 %v2307
      %2717 = vmatmul.mubr.f32.gmra.mrb[0].mxu0 %v2306
      %v2718 = vpop.f32.mrb[0].mxu0
      %v2719 = vadd.f32 %v2453, %v2718
      %v2720 = vpop.f32.mrb[0].mxu0
      %v2721 = vadd.f32 %v2453, %v2720
      %2722 = vmatprep.mubr.f32.mxu0 %v2312
      %2723 = vmatmul.mubr.f32.gmra.mrb[0].mxu0 %v2311
      %v2724 = vpop.f32.mrb[0].mxu0
      %v2725 = vadd.f32 %v2458, %v2724
      %v2726 = vpop.f32.mrb[0].mxu0
      %v2727 = vadd.f32 %v2458, %v2726
      %2728 = vmatprep.mubr.f32.mxu0 %v2317
      %2729 = vmatmul.mubr.f32.gmra.mrb[0].mxu0 %v2316
      %v2730 = vpop.f32.mrb[0].mxu0
      %v2731 = vadd.f32 %v2463, %v2730
      %v2732 = vpop.f32.mrb[0].mxu0
      %v2733 = vadd.f32 %v2463, %v2732
      %2734 = vmatprep.mubr.f32.mxu0 %v2322
      %2735 = vmatmul.mubr.f32.gmra.mrb[0].mxu0 %v2321
      %v2736 = vpop.f32.mrb[0].mxu0
      %v2737 = vadd.f32 %v2468, %v2736
      %v2738 = vpop.f32.mrb[0].mxu0
      %v2739 = vadd.f32 %v2468, %v2738
      %2740 = vmatprep.mubr.f32.mxu0 %v2327
      %2741 = vmatmul.mubr.f32.gmra.mrb[0].mxu0 %v2326
      %v2742 = vpop.f32.mrb[0].mxu0
      %v2743 = vadd.f32 %v2473, %v2742
      %v2744 = vpop.f32.mrb[0].mxu0
      %v2745 = vadd.f32 %v2473, %v2744
      %2746 = vmatprep.mubr.f32.mxu0 %v2332
      %2747 = vmatmul.mubr.f32.gmra.mrb[0].mxu0 %v2331
      %v2748 = vpop.f32.mrb[0].mxu0
      %v2749 = vadd.f32 %v2478, %v2748
      %v2750 = vpop.f32.mrb[0].mxu0
      %v2751 = vadd.f32 %v2478, %v2750
      %2752 = vmatprep.mubr.f32.mxu0 %v2337
      %2753 = vmatmul.mubr.f32.gmra.mrb[0].mxu0 %v2336
      %v2754 = vpop.f32.mrb[0].mxu0
      %v2755 = vadd.f32 %v2483, %v2754
      %v2756 = vpop.f32.mrb[0].mxu0
      %v2757 = vadd.f32 %v2483, %v2756
      %2758 = vmatprep.mubr.f32.mxu0 %v2342
      %2759 = vmatmul.mubr.f32.gmra.mrb[0].mxu0 %v2341
      %v2760 = vpop.f32.mrb[0].mxu0
      %v2761 = vadd.f32 %v2488, %v2760
      %v2762 = vpop.f32.mrb[0].mxu0
      %v2763 = vadd.f32 %v2488, %v2762
      %2764 = vmatprep.mubr.f32.mxu0 %v2347
      %2765 = vmatmul.mubr.f32.gmra.mrb[0].mxu0 %v2346
      %v2766 = vpop.f32.mrb[0].mxu0
      %v2767 = vadd.f32 %v2493, %v2766
      %v2768 = vpop.f32.mrb[0].mxu0
      %v2769 = vadd.f32 %v2493, %v2768
      %2770 = vmatprep.mubr.f32.mxu0 %v2352
      %2771 = vmatmul.mubr.f32.gmra.mrb[0].mxu0 %v2351
      %v2772 = vpop.f32.mrb[0].mxu0
      %v2773 = vadd.f32 %v2498, %v2772
      %v2774 = vpop.f32.mrb[0].mxu0
      %v2775 = vadd.f32 %v2498, %v2774
      %2776 = vmatprep.mubr.f32.mxu0 %v2357
      %2777 = vmatmul.mubr.f32.gmra.mrb[0].mxu0 %v2356
      %v2778 = vpop.f32.mrb[0].mxu0
      %v2779 = vadd.f32 %v2503, %v2778
      %v2780 = vpop.f32.mrb[0].mxu0
      %v2781 = vadd.f32 %v2503, %v2780
      %2782 = vmatprep.mubr.f32.mxu0 %v2362
      %2783 = vmatmul.mubr.f32.gmra.mrb[0].mxu0 %v2361
      %v2784 = vpop.f32.mrb[0].mxu0
      %v2785 = vadd.f32 %v2508, %v2784
      %v2786 = vpop.f32.mrb[0].mxu0
      %v2787 = vadd.f32 %v2508, %v2786
      %2788 = vmatprep.mubr.f32.mxu0 %v2367
      %2789 = vmatmul.mubr.f32.gmra.mrb[0].mxu0 %v2366
      %v2790 = vpop.f32.mrb[0].mxu0
      %v2791 = vadd.f32 %v2513, %v2790
      %v2792 = vpop.f32.mrb[0].mxu0
      %v2793 = vadd.f32 %v2513, %v2792
      %2794 = vmatprep.mubr.f32.mxu0 %v2372
      %2795 = vmatmul.mubr.f32.gmra.mrb[0].mxu0 %v2371
      %v2796 = vpop.f32.mrb[0].mxu0
      %v2797 = vadd.f32 %v2518, %v2796
      %v2798 = vpop.f32.mrb[0].mxu0
      %v2799 = vadd.f32 %v2518, %v2798
      %2800 = vdwg.mxu0
      %2801 = vmatprep.subr.mxu0 %v1729
      %2802 = vmatpush1.msra.mxu0 %v1728
      %2803 = vmatprep.subr.mxu0 %v1731
      %2804 = vmatpush1.msra.mxu0 %v1730
      %2805 = vmatprep.subr.mxu0 %v1733
      %2806 = vmatpush1.msra.mxu0 %v1732
      %2807 = vmatprep.subr.mxu0 %v1735
      %2808 = vmatpush1.msra.mxu0 %v1734
      %2809 = vmatprep.subr.mxu0 %v1737
      %2810 = vmatpush1.msra.mxu0 %v1736
      %2811 = vmatprep.subr.mxu0 %v1739
      %2812 = vmatpush1.msra.mxu0 %v1738
      %2813 = vmatprep.subr.mxu0 %v1741
      %2814 = vmatpush1.msra.mxu0 %v1740
      %2815 = vmatprep.subr.mxu0 %v1743
      %2816 = vmatpush1.msra.mxu0 %v1742
      %2817 = vmatprep.subr.mxu0 %v2049
      %2818 = vmatpush1.msra.mxu0 %v2048
      %2819 = vmatprep.subr.mxu0 %v2051
      %2820 = vmatpush1.msra.mxu0 %v2050
      %2821 = vmatprep.subr.mxu0 %v2053
      %2822 = vmatpush1.msra.mxu0 %v2052
      %2823 = vmatprep.subr.mxu0 %v2055
      %2824 = vmatpush1.msra.mxu0 %v2054
      %2825 = vmatprep.subr.mxu0 %v2057
      %2826 = vmatpush1.msra.mxu0 %v2056
      %2827 = vmatprep.subr.mxu0 %v2059
      %2828 = vmatpush1.msra.mxu0 %v2058
      %2829 = vmatprep.subr.mxu0 %v2061
      %2830 = vmatpush1.msra.mxu0 %v2060
      %2831 = vmatprep.subr.mxu0 %v2063
      %2832 = vmatpush1.msra.mxu0 %v2062
      %2833 = vmatprep.subr.mxu0 %v2113
      %2834 = vmatpush1.msra.mxu0 %v2112
      %2835 = vmatprep.subr.mxu0 %v2115
      %2836 = vmatpush1.msra.mxu0 %v2114
      %2837 = vmatprep.subr.mxu0 %v2117
      %2838 = vmatpush1.msra.mxu0 %v2116
      %2839 = vmatprep.subr.mxu0 %v2119
      %2840 = vmatpush1.msra.mxu0 %v2118
      %2841 = vmatprep.subr.mxu0 %v2121
      %2842 = vmatpush1.msra.mxu0 %v2120
      %2843 = vmatprep.subr.mxu0 %v2123
      %2844 = vmatpush1.msra.mxu0 %v2122
      %2845 = vmatprep.subr.mxu0 %v2125
      %2846 = vmatpush1.msra.mxu0 %v2124
      %2847 = vmatprep.subr.mxu0 %v2127
      %2848 = vmatpush1.msra.mxu0 %v2126
      %2849 = vmatprep.subr.mxu0 %v2177
      %2850 = vmatpush1.msra.mxu0 %v2176
      %2851 = vmatprep.subr.mxu0 %v2179
      %2852 = vmatpush1.msra.mxu0 %v2178
      %2853 = vmatprep.subr.mxu0 %v2181
      %2854 = vmatpush1.msra.mxu0 %v2180
      %2855 = vmatprep.subr.mxu0 %v2183
      %2856 = vmatpush1.msra.mxu0 %v2182
      %2857 = vmatprep.subr.mxu0 %v2185
      %2858 = vmatpush1.msra.mxu0 %v2184
      %2859 = vmatprep.subr.mxu0 %v2187
      %2860 = vmatpush1.msra.mxu0 %v2186
      %2861 = vmatprep.subr.mxu0 %v2189
      %2862 = vmatpush1.msra.mxu0 %v2188
      %2863 = vmatprep.subr.mxu0 %v2191
      %2864 = vmatpush1.msra.mxu0 %v2190
      %2865 = vmatprep.mubr.f32.mxu0 %v2259
      %2866 = vmatmul.mubr.f32.gmra.mrb[0].mxu0 %v2258
      %v2867 = vpop.f32.mrb[0].mxu0
      %v2868 = vadd.f32 %v2659, %v2867
      %v2869 = vpop.f32.mrb[0].mxu0
      %v2870 = vadd.f32 %v2661, %v2869
      %2871 = vmatprep.mubr.f32.mxu0 %v2264
      %2872 = vmatmul.mubr.f32.gmra.mrb[0].mxu0 %v2263
      %v2873 = vpop.f32.mrb[0].mxu0
      %v2874 = vadd.f32 %v2665, %v2873
      %v2875 = vpop.f32.mrb[0].mxu0
      %v2876 = vadd.f32 %v2667, %v2875
      %2877 = vmatprep.mubr.f32.mxu0 %v2269
      %2878 = vmatmul.mubr.f32.gmra.mrb[0].mxu0 %v2268
      %v2879 = vpop.f32.mrb[0].mxu0
      %v2880 = vadd.f32 %v2671, %v2879
      %v2881 = vpop.f32.mrb[0].mxu0
      %v2882 = vadd.f32 %v2673, %v2881
      %2883 = vmatprep.mubr.f32.mxu0 %v2274
      %2884 = vmatmul.mubr.f32.gmra.mrb[0].mxu0 %v2273
      %v2885 = vpop.f32.mrb[0].mxu0
      %v2886 = vadd.f32 %v2677, %v2885
      %v2887 = vpop.f32.mrb[0].mxu0
      %v2888 = vadd.f32 %v2679, %v2887
      %2889 = vmatprep.mubr.f32.mxu0 %v2279
      %2890 = vmatmul.mubr.f32.gmra.mrb[0].mxu0 %v2278
      %v2891 = vpop.f32.mrb[0].mxu0
      %v2892 = vadd.f32 %v2683, %v2891
      %v2893 = vpop.f32.mrb[0].mxu0
      %v2894 = vadd.f32 %v2685, %v2893
      %2895 = vmatprep.mubr.f32.mxu0 %v2284
      %2896 = vmatmul.mubr.f32.gmra.mrb[0].mxu0 %v2283
      %v2897 = vpop.f32.mrb[0].mxu0
      %v2898 = vadd.f32 %v2689, %v2897
      %v2899 = vpop.f32.mrb[0].mxu0
      %v2900 = vadd.f32 %v2691, %v2899
      %2901 = vmatprep.mubr.f32.mxu0 %v2289
      %2902 = vmatmul.mubr.f32.gmra.mrb[0].mxu0 %v2288
      %v2903 = vpop.f32.mrb[0].mxu0
      %v2904 = vadd.f32 %v2695, %v2903
      %v2905 = vpop.f32.mrb[0].mxu0
      %v2906 = vadd.f32 %v2697, %v2905
      %2907 = vmatprep.mubr.f32.mxu0 %v2294
      %2908 = vmatmul.mubr.f32.gmra.mrb[0].mxu0 %v2293
      %v2909 = vpop.f32.mrb[0].mxu0
      %v2910 = vadd.f32 %v2701, %v2909
      %v2911 = vpop.f32.mrb[0].mxu0
      %v2912 = vadd.f32 %v2703, %v2911
      %2913 = vmatprep.mubr.f32.mxu0 %v2299
      %2914 = vmatmul.mubr.f32.gmra.mrb[0].mxu0 %v2298
      %v2915 = vpop.f32.mrb[0].mxu0
      %v2916 = vadd.f32 %v2707, %v2915
      %v2917 = vpop.f32.mrb[0].mxu0
      %v2918 = vadd.f32 %v2709, %v2917
      %2919 = vmatprep.mubr.f32.mxu0 %v2304
      %2920 = vmatmul.mubr.f32.gmra.mrb[0].mxu0 %v2303
      %v2921 = vpop.f32.mrb[0].mxu0
      %v2922 = vadd.f32 %v2713, %v2921
      %v2923 = vpop.f32.mrb[0].mxu0
      %v2924 = vadd.f32 %v2715, %v2923
      %2925 = vmatprep.mubr.f32.mxu0 %v2309
      %2926 = vmatmul.mubr.f32.gmra.mrb[0].mxu0 %v2308
      %v2927 = vpop.f32.mrb[0].mxu0
      %v2928 = vadd.f32 %v2719, %v2927
      %v2929 = vpop.f32.mrb[0].mxu0
      %v2930 = vadd.f32 %v2721, %v2929
      %2931 = vmatprep.mubr.f32.mxu0 %v2314
      %2932 = vmatmul.mubr.f32.gmra.mrb[0].mxu0 %v2313
      %v2933 = vpop.f32.mrb[0].mxu0
      %v2934 = vadd.f32 %v2725, %v2933
      %v2935 = vpop.f32.mrb[0].mxu0
      %v2936 = vadd.f32 %v2727, %v2935
      %2937 = vmatprep.mubr.f32.mxu0 %v2319
      %2938 = vmatmul.mubr.f32.gmra.mrb[0].mxu0 %v2318
      %v2939 = vpop.f32.mrb[0].mxu0
      %v2940 = vadd.f32 %v2731, %v2939
      %v2941 = vpop.f32.mrb[0].mxu0
      %v2942 = vadd.f32 %v2733, %v2941
      %2943 = vmatprep.mubr.f32.mxu0 %v2324
      %2944 = vmatmul.mubr.f32.gmra.mrb[0].mxu0 %v2323
      %v2945 = vpop.f32.mrb[0].mxu0
      %v2946 = vadd.f32 %v2737, %v2945
      %v2947 = vpop.f32.mrb[0].mxu0
      %v2948 = vadd.f32 %v2739, %v2947
      %2949 = vmatprep.mubr.f32.mxu0 %v2329
      %2950 = vmatmul.mubr.f32.gmra.mrb[0].mxu0 %v2328
      %v2951 = vpop.f32.mrb[0].mxu0
      %v2952 = vadd.f32 %v2743, %v2951
      %v2953 = vpop.f32.mrb[0].mxu0
      %v2954 = vadd.f32 %v2745, %v2953
      %2955 = vmatprep.mubr.f32.mxu0 %v2334
      %2956 = vmatmul.mubr.f32.gmra.mrb[0].mxu0 %v2333
      %v2957 = vpop.f32.mrb[0].mxu0
      %v2958 = vadd.f32 %v2749, %v2957
      %v2959 = vpop.f32.mrb[0].mxu0
      %v2960 = vadd.f32 %v2751, %v2959
      %2961 = vmatprep.mubr.f32.mxu0 %v2339
      %2962 = vmatmul.mubr.f32.gmra.mrb[0].mxu0 %v2338
      %v2963 = vpop.f32.mrb[0].mxu0
      %v2964 = vadd.f32 %v2755, %v2963
      %v2965 = vpop.f32.mrb[0].mxu0
      %v2966 = vadd.f32 %v2757, %v2965
      %2967 = vmatprep.mubr.f32.mxu0 %v2344
      %2968 = vmatmul.mubr.f32.gmra.mrb[0].mxu0 %v2343
      %v2969 = vpop.f32.mrb[0].mxu0
      %v2970 = vadd.f32 %v2761, %v2969
      %v2971 = vpop.f32.mrb[0].mxu0
      %v2972 = vadd.f32 %v2763, %v2971
      %2973 = vmatprep.mubr.f32.mxu0 %v2349
      %2974 = vmatmul.mubr.f32.gmra.mrb[0].mxu0 %v2348
      %v2975 = vpop.f32.mrb[0].mxu0
      %v2976 = vadd.f32 %v2767, %v2975
      %v2977 = vpop.f32.mrb[0].mxu0
      %v2978 = vadd.f32 %v2769, %v2977
      %2979 = vmatprep.mubr.f32.mxu0 %v2354
      %2980 = vmatmul.mubr.f32.gmra.mrb[0].mxu0 %v2353
      %v2981 = vpop.f32.mrb[0].mxu0
      %v2982 = vadd.f32 %v2773, %v2981
      %v2983 = vpop.f32.mrb[0].mxu0
      %v2984 = vadd.f32 %v2775, %v2983
      %2985 = vmatprep.mubr.f32.mxu0 %v2359
      %2986 = vmatmul.mubr.f32.gmra.mrb[0].mxu0 %v2358
      %v2987 = vpop.f32.mrb[0].mxu0
      %v2988 = vadd.f32 %v2779, %v2987
      %v2989 = vpop.f32.mrb[0].mxu0
      %v2990 = vadd.f32 %v2781, %v2989
      %2991 = vmatprep.mubr.f32.mxu0 %v2364
      %2992 = vmatmul.mubr.f32.gmra.mrb[0].mxu0 %v2363
      %v2993 = vpop.f32.mrb[0].mxu0
      %v2994 = vadd.f32 %v2785, %v2993
      %v2995 = vpop.f32.mrb[0].mxu0
      %v2996 = vadd.f32 %v2787, %v2995
      %2997 = vmatprep.mubr.f32.mxu0 %v2369
      %2998 = vmatmul.mubr.f32.gmra.mrb[0].mxu0 %v2368
      %v2999 = vpop.f32.mrb[0].mxu0
      %v3000 = vadd.f32 %v2791, %v2999
      %v3001 = vpop.f32.mrb[0].mxu0
      %v3002 = vadd.f32 %v2793, %v3001
      %3003 = vmatprep.mubr.f32.mxu0 %v2374
      %3004 = vmatmul.mubr.f32.gmra.mrb[0].mxu0 %v2373
      %v3005 = vpop.f32.mrb[0].mxu0
      %v3006 = vadd.f32 %v2797, %v3005
      %v3007 = vpop.f32.mrb[0].mxu0
      %v3008 = vadd.f32 %v2799, %v3007
      %3009 = vdwg.mxu0
      %3010 = vmatprep.subr.mxu0 %v2241
      %3011 = vmatpush1.msra.mxu0 %v2240
      %3012 = vmatprep.subr.mxu0 %v2243
      %3013 = vmatpush1.msra.mxu0 %v2242
      %3014 = vmatprep.subr.mxu0 %v2245
      %3015 = vmatpush1.msra.mxu0 %v2244
      %3016 = vmatprep.subr.mxu0 %v2247
      %3017 = vmatpush1.msra.mxu0 %v2246
      %3018 = vmatprep.subr.mxu0 %v2249
      %3019 = vmatpush1.msra.mxu0 %v2248
      %3020 = vmatprep.subr.mxu0 %v2251
      %3021 = vmatpush1.msra.mxu0 %v2250
      %3022 = vmatprep.subr.mxu0 %v2253
      %3023 = vmatpush1.msra.mxu0 %v2252
      %3024 = vmatprep.subr.mxu0 %v2255
      %3025 = vmatpush1.msra.mxu0 %v2254
      %3026 = vmatprep.subr.mxu0 0.0
      %3027 = vmatpush1.msra.mxu0 0.0
      %3028 = vmatprep.subr.mxu0 0.0
      %3029 = vmatpush1.msra.mxu0 0.0
      %3030 = vmatprep.subr.mxu0 0.0
      %3031 = vmatpush1.msra.mxu0 0.0
      %3032 = vmatprep.subr.mxu0 0.0
      %3033 = vmatpush1.msra.mxu0 0.0
      %3034 = vmatprep.subr.mxu0 0.0
      %3035 = vmatpush1.msra.mxu0 0.0
      %3036 = vmatprep.subr.mxu0 0.0
      %3037 = vmatpush1.msra.mxu0 0.0
      %3038 = vmatprep.subr.mxu0 0.0
      %3039 = vmatpush1.msra.mxu0 0.0
      %3040 = vmatprep.subr.mxu0 0.0
      %3041 = vmatpush1.msra.mxu0 0.0
      %3042 = vmatprep.subr.mxu0 0.0
      %3043 = vmatpush1.msra.mxu0 0.0
      %3044 = vmatprep.subr.mxu0 0.0
      %3045 = vmatpush1.msra.mxu0 0.0
      %3046 = vmatprep.subr.mxu0 0.0
      %3047 = vmatpush1.msra.mxu0 0.0
      %3048 = vmatprep.subr.mxu0 0.0
      %3049 = vmatpush1.msra.mxu0 0.0
      %3050 = vmatprep.subr.mxu0 0.0
      %3051 = vmatpush1.msra.mxu0 0.0
      %3052 = vmatprep.subr.mxu0 0.0
      %3053 = vmatpush1.msra.mxu0 0.0
      %3054 = vmatprep.subr.mxu0 0.0
      %3055 = vmatpush1.msra.mxu0 0.0
      %3056 = vmatprep.subr.mxu0 0.0
      %3057 = vmatpush1.msra.mxu0 0.0
      %3058 = vmatprep.subr.mxu0 0.0
      %3059 = vmatpush1.msra.mxu0 0.0
      %3060 = vmatprep.subr.mxu0 0.0
      %3061 = vmatpush1.msra.mxu0 0.0
      %3062 = vmatprep.subr.mxu0 0.0
      %3063 = vmatpush1.msra.mxu0 0.0
      %3064 = vmatprep.subr.mxu0 0.0
      %3065 = vmatpush1.msra.mxu0 0.0
      %3066 = vmatprep.subr.mxu0 0.0
      %3067 = vmatpush1.msra.mxu0 0.0
      %3068 = vmatprep.subr.mxu0 0.0
      %3069 = vmatpush1.msra.mxu0 0.0
      %3070 = vmatprep.subr.mxu0 0.0
      %3071 = vmatpush1.msra.mxu0 0.0
      %3072 = vmatprep.subr.mxu0 0.0
      %3073 = vmatpush1.msra.mxu0 0.0
      %3074 = vmatprep.mubr.f32.mxu0 0.0
      %3075 = vmatmul.mubr.f32.gmra.mrb[0].mxu0 %v2521
      %v3076 = vpop.f32.mrb[0].mxu0
      %v3077 = vadd.f32 %v2868, %v3076
      %v3078 = vpop.f32.mrb[0].mxu0
      %v3079 = vadd.f32 %v2870, %v3078
      %3080 = vmatprep.mubr.f32.mxu0 0.0
      %3081 = vmatmul.mubr.f32.gmra.mrb[0].mxu0 %v2524
      %v3082 = vpop.f32.mrb[0].mxu0
      %v3083 = vadd.f32 %v2874, %v3082
      %v3084 = vpop.f32.mrb[0].mxu0
      %v3085 = vadd.f32 %v2876, %v3084
      %3086 = vmatprep.mubr.f32.mxu0 0.0
      %3087 = vmatmul.mubr.f32.gmra.mrb[0].mxu0 %v2527
      %v3088 = vpop.f32.mrb[0].mxu0
      %v3089 = vadd.f32 %v2880, %v3088
      %v3090 = vpop.f32.mrb[0].mxu0
      %v3091 = vadd.f32 %v2882, %v3090
      %3092 = vmatprep.mubr.f32.mxu0 0.0
      %3093 = vmatmul.mubr.f32.gmra.mrb[0].mxu0 %v2530
      %v3094 = vpop.f32.mrb[0].mxu0
      %v3095 = vadd.f32 %v2886, %v3094
      %v3096 = vpop.f32.mrb[0].mxu0
      %v3097 = vadd.f32 %v2888, %v3096
      %3098 = vmatprep.mubr.f32.mxu0 0.0
      %3099 = vmatmul.mubr.f32.gmra.mrb[0].mxu0 %v2533
      %v3100 = vpop.f32.mrb[0].mxu0
      %v3101 = vadd.f32 %v2892, %v3100
      %v3102 = vpop.f32.mrb[0].mxu0
      %v3103 = vadd.f32 %v2894, %v3102
      %3104 = vmatprep.mubr.f32.mxu0 0.0
      %3105 = vmatmul.mubr.f32.gmra.mrb[0].mxu0 %v2536
      %v3106 = vpop.f32.mrb[0].mxu0
      %v3107 = vadd.f32 %v2898, %v3106
      %v3108 = vpop.f32.mrb[0].mxu0
      %v3109 = vadd.f32 %v2900, %v3108
      %3110 = vmatprep.mubr.f32.mxu0 0.0
      %3111 = vmatmul.mubr.f32.gmra.mrb[0].mxu0 %v2539
      %v3112 = vpop.f32.mrb[0].mxu0
      %v3113 = vadd.f32 %v2904, %v3112
      %v3114 = vpop.f32.mrb[0].mxu0
      %v3115 = vadd.f32 %v2906, %v3114
      %3116 = vmatprep.mubr.f32.mxu0 0.0
      %3117 = vmatmul.mubr.f32.gmra.mrb[0].mxu0 %v2542
      %v3118 = vpop.f32.mrb[0].mxu0
      %v3119 = vadd.f32 %v2910, %v3118
      %v3120 = vpop.f32.mrb[0].mxu0
      %v3121 = vadd.f32 %v2912, %v3120
      %3122 = vmatprep.mubr.f32.mxu0 0.0
      %3123 = vmatmul.mubr.f32.gmra.mrb[0].mxu0 %v2545
      %v3124 = vpop.f32.mrb[0].mxu0
      %v3125 = vadd.f32 %v2916, %v3124
      %v3126 = vpop.f32.mrb[0].mxu0
      %v3127 = vadd.f32 %v2918, %v3126
      %3128 = vmatprep.mubr.f32.mxu0 0.0
      %3129 = vmatmul.mubr.f32.gmra.mrb[0].mxu0 %v2548
      %v3130 = vpop.f32.mrb[0].mxu0
      %v3131 = vadd.f32 %v2922, %v3130
      %v3132 = vpop.f32.mrb[0].mxu0
      %v3133 = vadd.f32 %v2924, %v3132
      %3134 = vmatprep.mubr.f32.mxu0 0.0
      %3135 = vmatmul.mubr.f32.gmra.mrb[0].mxu0 %v2551
      %v3136 = vpop.f32.mrb[0].mxu0
      %v3137 = vadd.f32 %v2928, %v3136
      %v3138 = vpop.f32.mrb[0].mxu0
      %v3139 = vadd.f32 %v2930, %v3138
      %3140 = vmatprep.mubr.f32.mxu0 0.0
      %3141 = vmatmul.mubr.f32.gmra.mrb[0].mxu0 %v2554
      %v3142 = vpop.f32.mrb[0].mxu0
      %v3143 = vadd.f32 %v2934, %v3142
      %v3144 = vpop.f32.mrb[0].mxu0
      %v3145 = vadd.f32 %v2936, %v3144
      %3146 = vmatprep.mubr.f32.mxu0 0.0
      %3147 = vmatmul.mubr.f32.gmra.mrb[0].mxu0 %v2557
      %v3148 = vpop.f32.mrb[0].mxu0
      %v3149 = vadd.f32 %v2940, %v3148
      %v3150 = vpop.f32.mrb[0].mxu0
      %v3151 = vadd.f32 %v2942, %v3150
      %3152 = vmatprep.mubr.f32.mxu0 0.0
      %3153 = vmatmul.mubr.f32.gmra.mrb[0].mxu0 %v2560
      %v3154 = vpop.f32.mrb[0].mxu0
      %v3155 = vadd.f32 %v2946, %v3154
      %v3156 = vpop.f32.mrb[0].mxu0
      %v3157 = vadd.f32 %v2948, %v3156
      %3158 = vmatprep.mubr.f32.mxu0 0.0
      %3159 = vmatmul.mubr.f32.gmra.mrb[0].mxu0 %v2563
      %v3160 = vpop.f32.mrb[0].mxu0
      %v3161 = vadd.f32 %v2952, %v3160
      %v3162 = vpop.f32.mrb[0].mxu0
      %v3163 = vadd.f32 %v2954, %v3162
      %3164 = vmatprep.mubr.f32.mxu0 0.0
      %3165 = vmatmul.mubr.f32.gmra.mrb[0].mxu0 %v2566
      %v3166 = vpop.f32.mrb[0].mxu0
      %v3167 = vadd.f32 %v2958, %v3166
      %v3168 = vpop.f32.mrb[0].mxu0
      %v3169 = vadd.f32 %v2960, %v3168
      %3170 = vmatprep.mubr.f32.mxu0 0.0
      %3171 = vmatmul.mubr.f32.gmra.mrb[0].mxu0 %v2569
      %v3172 = vpop.f32.mrb[0].mxu0
      %v3173 = vadd.f32 %v2964, %v3172
      %v3174 = vpop.f32.mrb[0].mxu0
      %v3175 = vadd.f32 %v2966, %v3174
      %3176 = vmatprep.mubr.f32.mxu0 0.0
      %3177 = vmatmul.mubr.f32.gmra.mrb[0].mxu0 %v2572
      %v3178 = vpop.f32.mrb[0].mxu0
      %v3179 = vadd.f32 %v2970, %v3178
      %v3180 = vpop.f32.mrb[0].mxu0
      %v3181 = vadd.f32 %v2972, %v3180
      %3182 = vmatprep.mubr.f32.mxu0 0.0
      %3183 = vmatmul.mubr.f32.gmra.mrb[0].mxu0 %v2575
      %v3184 = vpop.f32.mrb[0].mxu0
      %v3185 = vadd.f32 %v2976, %v3184
      %v3186 = vpop.f32.mrb[0].mxu0
      %v3187 = vadd.f32 %v2978, %v3186
      %3188 = vmatprep.mubr.f32.mxu0 0.0
      %3189 = vmatmul.mubr.f32.gmra.mrb[0].mxu0 %v2578
      %v3190 = vpop.f32.mrb[0].mxu0
      %v3191 = vadd.f32 %v2982, %v3190
      %v3192 = vpop.f32.mrb[0].mxu0
      %v3193 = vadd.f32 %v2984, %v3192
      %3194 = vmatprep.mubr.f32.mxu0 0.0
      %3195 = vmatmul.mubr.f32.gmra.mrb[0].mxu0 %v2581
      %v3196 = vpop.f32.mrb[0].mxu0
      %v3197 = vadd.f32 %v2988, %v3196
      %v3198 = vpop.f32.mrb[0].mxu0
      %v3199 = vadd.f32 %v2990, %v3198
      %3200 = vmatprep.mubr.f32.mxu0 0.0
      %3201 = vmatmul.mubr.f32.gmra.mrb[0].mxu0 %v2584
      %v3202 = vpop.f32.mrb[0].mxu0
      %v3203 = vadd.f32 %v2994, %v3202
      %v3204 = vpop.f32.mrb[0].mxu0
      %v3205 = vadd.f32 %v2996, %v3204
      %3206 = vmatprep.mubr.f32.mxu0 0.0
      %3207 = vmatmul.mubr.f32.gmra.mrb[0].mxu0 %v2587
      %v3208 = vpop.f32.mrb[0].mxu0
      %v3209 = vadd.f32 %v3000, %v3208
      %v3210 = vpop.f32.mrb[0].mxu0
      %v3211 = vadd.f32 %v3002, %v3210
      %3212 = vmatprep.mubr.f32.mxu0 0.0
      %3213 = vmatmul.mubr.f32.gmra.mrb[0].mxu0 %v2590
      %v3214 = vpop.f32.mrb[0].mxu0
      %v3215 = vadd.f32 %v3006, %v3214
      %v3216 = vpop.f32.mrb[0].mxu0
      %v3217 = vadd.f32 %v3008, %v3216
      %3218 = vdwg.mxu0
      %v3219 = vld [vmem:[%s10] sm:$0xff]
      %v3220 = vld [vmem:[%s10 + $0x8] sm:$0xff]
      %v3221 = vld [vmem:[%s10 + $0x10] sm:$0xff]
      %v3222 = vld [vmem:[%s10 + $0x18] sm:$0xff]
      %v3223 = vld [vmem:[%s10 + $0x20] sm:$0xff]
      %v3224 = vld [vmem:[%s10 + $0x28] sm:$0xff]
      %v3225 = vld [vmem:[%s10 + $0x30] sm:$0xff]
      %v3226 = vld [vmem:[%s10 + $0x38] sm:$0xff]
      %v3227 = vld [vmem:[%s10 + $0x40] sm:$0xff]
      %v3228 = vld [vmem:[%s10 + $0x48] sm:$0xff]
      %v3229 = vld [vmem:[%s10 + $0x50] sm:$0xff]
      %v3230 = vld [vmem:[%s10 + $0x58] sm:$0xff]
      %v3231 = vld [vmem:[%s10 + $0x60] sm:$0xff]
      %v3232 = vld [vmem:[%s10 + $0x68] sm:$0xff]
      %v3233 = vld [vmem:[%s10 + $0x70] sm:$0xff]
      %v3234 = vld [vmem:[%s10 + $0x78] sm:$0xff]
      %v3235 = vld [vmem:[%s10 + $0x80] sm:$0xff]
      %v3236 = vld [vmem:[%s10 + $0x88] sm:$0xff]
      %v3237 = vld [vmem:[%s10 + $0x90] sm:$0xff]
      %v3238 = vld [vmem:[%s10 + $0x98] sm:$0xff]
      %v3239 = vld [vmem:[%s10 + $0xa0] sm:$0xff]
      %v3240 = vld [vmem:[%s10 + $0xa8] sm:$0xff]
      %v3241 = vld [vmem:[%s10 + $0xb0] sm:$0xff]
      %v3242 = vld [vmem:[%s10 + $0xb8] sm:$0xff]
      %v3243 = vld [vmem:[%s10 + $0xc0] sm:$0xff]
      %v3244 = vld [vmem:[%s10 + $0xc8] sm:$0xff]
      %v3245 = vld [vmem:[%s10 + $0xd0] sm:$0xff]
      %v3246 = vld [vmem:[%s10 + $0xd8] sm:$0xff]
      %v3247 = vld [vmem:[%s10 + $0xe0] sm:$0xff]
      %v3248 = vld [vmem:[%s10 + $0xe8] sm:$0xff]
      %v3249 = vld [vmem:[%s10 + $0xf0] sm:$0xff]
      %v3250 = vld [vmem:[%s10 + $0xf8] sm:$0xff]
      %v3251 = vld [vmem:[%s10 + $0x100] sm:$0xff]
      %v3252 = vld [vmem:[%s10 + $0x108] sm:$0xff]
      %v3253 = vld [vmem:[%s10 + $0x110] sm:$0xff]
      %v3254 = vld [vmem:[%s10 + $0x118] sm:$0xff]
      %v3255 = vld [vmem:[%s10 + $0x120] sm:$0xff]
      %v3256 = vld [vmem:[%s10 + $0x128] sm:$0xff]
      %v3257 = vld [vmem:[%s10 + $0x130] sm:$0xff]
      %v3258 = vld [vmem:[%s10 + $0x138] sm:$0xff]
      %v3259 = vld [vmem:[%s10 + $0x140] sm:$0xff]
      %v3260 = vld [vmem:[%s10 + $0x148] sm:$0xff]
      %v3261 = vld [vmem:[%s10 + $0x150] sm:$0xff]
      %v3262 = vld [vmem:[%s10 + $0x158] sm:$0xff]
      %v3263 = vld [vmem:[%s10 + $0x160] sm:$0xff]
      %v3264 = vld [vmem:[%s10 + $0x168] sm:$0xff]
      %v3265 = vld [vmem:[%s10 + $0x170] sm:$0xff]
      %v3266 = vld [vmem:[%s10 + $0x178] sm:$0xff]
      %v3267 = vld [vmem:[%s10 + $0x180] sm:$0xff]
      %v3268 = vld [vmem:[%s10 + $0x188] sm:$0xff]
      %v3269 = vld [vmem:[%s10 + $0x190] sm:$0xff]
      %v3270 = vld [vmem:[%s10 + $0x198] sm:$0xff]
      %v3271 = vld [vmem:[%s10 + $0x1a0] sm:$0xff]
      %v3272 = vld [vmem:[%s10 + $0x1a8] sm:$0xff]
      %v3273 = vld [vmem:[%s10 + $0x1b0] sm:$0xff]
      %v3274 = vld [vmem:[%s10 + $0x1b8] sm:$0xff]
      %v3275 = vld [vmem:[%s10 + $0x1c0] sm:$0xff]
      %v3276 = vld [vmem:[%s10 + $0x1c8] sm:$0xff]
      %v3277 = vld [vmem:[%s10 + $0x1d0] sm:$0xff]
      %v3278 = vld [vmem:[%s10 + $0x1d8] sm:$0xff]
      %v3279 = vld [vmem:[%s10 + $0x1e0] sm:$0xff]
      %v3280 = vld [vmem:[%s10 + $0x1e8] sm:$0xff]
      %v3281 = vld [vmem:[%s10 + $0x1f0] sm:$0xff]
      %v3282 = vld [vmem:[%s10 + $0x1f8] sm:$0xff]
      %3283 = vmatprep.subr.mxu0 %v3220
      %3284 = vmatpush1.msra.mxu0 %v3219
      %3285 = vmatprep.subr.mxu0 %v3222
      %3286 = vmatpush1.msra.mxu0 %v3221
      %3287 = vmatprep.subr.mxu0 %v3224
      %3288 = vmatpush1.msra.mxu0 %v3223
      %3289 = vmatprep.subr.mxu0 %v3226
      %3290 = vmatpush1.msra.mxu0 %v3225
      %3291 = vmatprep.subr.mxu0 %v3228
      %3292 = vmatpush1.msra.mxu0 %v3227
      %3293 = vmatprep.subr.mxu0 %v3230
      %3294 = vmatpush1.msra.mxu0 %v3229
      %3295 = vmatprep.subr.mxu0 %v3232
      %3296 = vmatpush1.msra.mxu0 %v3231
      %3297 = vmatprep.subr.mxu0 %v3234
      %3298 = vmatpush1.msra.mxu0 %v3233
      %3299 = vmatprep.subr.mxu0 %v3236
      %3300 = vmatpush1.msra.mxu0 %v3235
      %3301 = vmatprep.subr.mxu0 %v3238
      %3302 = vmatpush1.msra.mxu0 %v3237
      %3303 = vmatprep.subr.mxu0 %v3240
      %3304 = vmatpush1.msra.mxu0 %v3239
      %3305 = vmatprep.subr.mxu0 %v3242
      %3306 = vmatpush1.msra.mxu0 %v3241
      %3307 = vmatprep.subr.mxu0 %v3244
      %3308 = vmatpush1.msra.mxu0 %v3243
      %3309 = vmatprep.subr.mxu0 %v3246
      %3310 = vmatpush1.msra.mxu0 %v3245
      %3311 = vmatprep.subr.mxu0 %v3248
      %3312 = vmatpush1.msra.mxu0 %v3247
      %3313 = vmatprep.subr.mxu0 %v3250
      %3314 = vmatpush1.msra.mxu0 %v3249
      %3315 = vmatprep.subr.mxu0 %v3252
      %3316 = vmatpush1.msra.mxu0 %v3251
      %3317 = vmatprep.subr.mxu0 %v3254
      %3318 = vmatpush1.msra.mxu0 %v3253
      %3319 = vmatprep.subr.mxu0 %v3256
      %3320 = vmatpush1.msra.mxu0 %v3255
      %3321 = vmatprep.subr.mxu0 %v3258
      %3322 = vmatpush1.msra.mxu0 %v3257
      %3323 = vmatprep.subr.mxu0 %v3260
      %3324 = vmatpush1.msra.mxu0 %v3259
      %3325 = vmatprep.subr.mxu0 %v3262
      %3326 = vmatpush1.msra.mxu0 %v3261
      %3327 = vmatprep.subr.mxu0 %v3264
      %3328 = vmatpush1.msra.mxu0 %v3263
      %3329 = vmatprep.subr.mxu0 %v3266
      %3330 = vmatpush1.msra.mxu0 %v3265
      %3331 = vmatprep.subr.mxu0 %v3268
      %3332 = vmatpush1.msra.mxu0 %v3267
      %3333 = vmatprep.subr.mxu0 %v3270
      %3334 = vmatpush1.msra.mxu0 %v3269
      %3335 = vmatprep.subr.mxu0 %v3272
      %3336 = vmatpush1.msra.mxu0 %v3271
      %3337 = vmatprep.subr.mxu0 %v3274
      %3338 = vmatpush1.msra.mxu0 %v3273
      %3339 = vmatprep.subr.mxu0 %v3276
      %3340 = vmatpush1.msra.mxu0 %v3275
      %3341 = vmatprep.subr.mxu0 %v3278
      %3342 = vmatpush1.msra.mxu0 %v3277
      %3343 = vmatprep.subr.mxu0 %v3280
      %3344 = vmatpush1.msra.mxu0 %v3279
      %3345 = vmatprep.subr.mxu0 %v3282
      %3346 = vmatpush1.msra.mxu0 %v3281
      %3347 = vmatprep.mubr.f32.mxu0 %v3127
      %3348 = vmatmul.mubr.f32.gmra.mrb[0].mxu0 %v3125
      %v3349 = vpop.f32.mrb[0].mxu0
      %v3350 = vadd.f32 0.0, %v3349
      %v3351 = vpop.f32.mrb[0].mxu0
      %v3352 = vadd.f32 0.0, %v3351
      %3353 = vmatprep.mubr.f32.mxu0 %v3133
      %3354 = vmatmul.mubr.f32.gmra.mrb[0].mxu0 %v3131
      %v3355 = vpop.f32.mrb[0].mxu0
      %v3356 = vadd.f32 0.0, %v3355
      %v3357 = vpop.f32.mrb[0].mxu0
      %v3358 = vadd.f32 0.0, %v3357
      %3359 = vmatprep.mubr.f32.mxu0 %v3139
      %3360 = vmatmul.mubr.f32.gmra.mrb[0].mxu0 %v3137
      %v3361 = vpop.f32.mrb[0].mxu0
      %v3362 = vadd.f32 0.0, %v3361
      %v3363 = vpop.f32.mrb[0].mxu0
      %v3364 = vadd.f32 0.0, %v3363
      %3365 = vmatprep.mubr.f32.mxu0 %v3145
      %3366 = vmatmul.mubr.f32.gmra.mrb[0].mxu0 %v3143
      %v3367 = vpop.f32.mrb[0].mxu0
      %v3368 = vadd.f32 0.0, %v3367
      %v3369 = vpop.f32.mrb[0].mxu0
      %v3370 = vadd.f32 0.0, %v3369
      %3371 = vmatprep.mubr.f32.mxu0 %v3151
      %3372 = vmatmul.mubr.f32.gmra.mrb[0].mxu0 %v3149
      %v3373 = vpop.f32.mrb[0].mxu0
      %v3374 = vadd.f32 0.0, %v3373
      %v3375 = vpop.f32.mrb[0].mxu0
      %v3376 = vadd.f32 0.0, %v3375
      %3377 = vmatprep.mubr.f32.mxu0 %v3157
      %3378 = vmatmul.mubr.f32.gmra.mrb[0].mxu0 %v3155
      %v3379 = vpop.f32.mrb[0].mxu0
      %v3380 = vadd.f32 0.0, %v3379
      %v3381 = vpop.f32.mrb[0].mxu0
      %v3382 = vadd.f32 0.0, %v3381
      %3383 = vmatprep.mubr.f32.mxu0 %v3163
      %3384 = vmatmul.mubr.f32.gmra.mrb[0].mxu0 %v3161
      %v3385 = vpop.f32.mrb[0].mxu0
      %v3386 = vadd.f32 0.0, %v3385
      %v3387 = vpop.f32.mrb[0].mxu0
      %v3388 = vadd.f32 0.0, %v3387
      %3389 = vmatprep.mubr.f32.mxu0 %v3169
      %3390 = vmatmul.mubr.f32.gmra.mrb[0].mxu0 %v3167
      %v3391 = vpop.f32.mrb[0].mxu0
      %v3392 = vadd.f32 0.0, %v3391
      %v3393 = vpop.f32.mrb[0].mxu0
      %v3394 = vadd.f32 0.0, %v3393
      %3395 = vdwg.mxu0
      %v3396 = vmul.f32 %v3077, %v3350
      %v3397 = vmul.f32 %v3079, %v3352
      %v3398 = vmul.f32 %v3083, %v3356
      %v3399 = vmul.f32 %v3085, %v3358
      %v3400 = vmul.f32 %v3089, %v3362
      %v3401 = vmul.f32 %v3091, %v3364
      %v3402 = vmul.f32 %v3095, %v3368
      %v3403 = vmul.f32 %v3097, %v3370
      %v3404 = vmul.f32 %v3101, %v3374
      %v3405 = vmul.f32 %v3103, %v3376
      %v3406 = vmul.f32 %v3107, %v3380
      %v3407 = vmul.f32 %v3109, %v3382
      %v3408 = vmul.f32 %v3113, %v3386
      %v3409 = vmul.f32 %v3115, %v3388
      %v3410 = vmul.f32 %v3119, %v3392
      %v3411 = vmul.f32 %v3121, %v3394
      %v3412 = vmul.f32 %v3396, 0.25
      %v3413 = vmul.f32 %v3397, 0.25
      %v3414 = vmul.f32 %v3398, 0.25
      %v3415 = vmul.f32 %v3399, 0.25
      %v3416 = vmul.f32 %v3400, 0.25
      %v3417 = vmul.f32 %v3401, 0.25
      %v3418 = vmul.f32 %v3402, 0.25
      %v3419 = vmul.f32 %v3403, 0.25
      %v3420 = vmul.f32 %v3404, 0.25
      %v3421 = vmul.f32 %v3405, 0.25
      %v3422 = vmul.f32 %v3406, 0.25
      %v3423 = vmul.f32 %v3407, 0.25
      %v3424 = vmul.f32 %v3408, 0.25
      %v3425 = vmul.f32 %v3409, 0.25
      %v3426 = vmul.f32 %v3410, 0.25
      %v3427 = vmul.f32 %v3411, 0.25
      %v3428 = vmax.f32 %v3412, %v3413
      %3429 = vmax.xlane.f32.xlu0 %v3428
      %v3430 = vpop.xlane.xlu0 %3429
      %v3431 = vmax.f32 %v3414, %v3415
      %3432 = vmax.xlane.f32.xlu0 %v3431
      %v3433 = vpop.xlane.xlu0 %3432
      %v3434 = vmax.f32 %v3416, %v3417
      %3435 = vmax.xlane.f32.xlu0 %v3434
      %v3436 = vpop.xlane.xlu0 %3435
      %v3437 = vmax.f32 %v3418, %v3419
      %3438 = vmax.xlane.f32.xlu0 %v3437
      %v3439 = vpop.xlane.xlu0 %3438
      %v3440 = vmax.f32 %v3420, %v3421
      %3441 = vmax.xlane.f32.xlu0 %v3440
      %v3442 = vpop.xlane.xlu0 %3441
      %v3443 = vmax.f32 %v3422, %v3423
      %3444 = vmax.xlane.f32.xlu0 %v3443
      %v3445 = vpop.xlane.xlu0 %3444
      %v3446 = vmax.f32 %v3424, %v3425
      %3447 = vmax.xlane.f32.xlu0 %v3446
      %v3448 = vpop.xlane.xlu0 %3447
      %v3449 = vmax.f32 %v3426, %v3427
      %3450 = vmax.xlane.f32.xlu0 %v3449
      %v3451 = vpop.xlane.xlu0 %3450
      %v3452 = vsub.f32 %v3412, %v3430
      %v3453 = vsub.f32 %v3413, %v3430
      %v3454 = vsub.f32 %v3414, %v3433
      %v3455 = vsub.f32 %v3415, %v3433
      %v3456 = vsub.f32 %v3416, %v3436
      %v3457 = vsub.f32 %v3417, %v3436
      %v3458 = vsub.f32 %v3418, %v3439
      %v3459 = vsub.f32 %v3419, %v3439
      %v3460 = vsub.f32 %v3420, %v3442
      %v3461 = vsub.f32 %v3421, %v3442
      %v3462 = vsub.f32 %v3422, %v3445
      %v3463 = vsub.f32 %v3423, %v3445
      %v3464 = vsub.f32 %v3424, %v3448
      %v3465 = vsub.f32 %v3425, %v3448
      %v3466 = vsub.f32 %v3426, %v3451
      %v3467 = vsub.f32 %v3427, %v3451
      %v3468 = vmul.f32 %v3452, 1.442695
      %v3469 = vpow.pop %v3468
      %v3470 = vmul.f32 %v3453, 1.442695
      %v3471 = vpow.pop %v3470
      %v3472 = vmul.f32 %v3454, 1.442695
      %v3473 = vpow.pop %v3472
      %v3474 = vmul.f32 %v3455, 1.442695
      %v3475 = vpow.pop %v3474
      %v3476 = vmul.f32 %v3456, 1.442695
      %v3477 = vpow.pop %v3476
      %v3478 = vmul.f32 %v3457, 1.442695
      %v3479 = vpow.pop %v3478
      %v3480 = vmul.f32 %v3458, 1.442695
      %v3481 = vpow.pop %v3480
      %v3482 = vmul.f32 %v3459, 1.442695
      %v3483 = vpow.pop %v3482
      %v3484 = vmul.f32 %v3460, 1.442695
      %v3485 = vpow.pop %v3484
      %v3486 = vmul.f32 %v3461, 1.442695
      %v3487 = vpow.pop %v3486
      %v3488 = vmul.f32 %v3462, 1.442695
      %v3489 = vpow.pop %v3488
      %v3490 = vmul.f32 %v3463, 1.442695
      %v3491 = vpow.pop %v3490
      %v3492 = vmul.f32 %v3464, 1.442695
      %v3493 = vpow.pop %v3492
      %v3494 = vmul.f32 %v3465, 1.442695
      %v3495 = vpow.pop %v3494
      %v3496 = vmul.f32 %v3466, 1.442695
      %v3497 = vpow.pop %v3496
      %v3498 = vmul.f32 %v3467, 1.442695
      %v3499 = vpow.pop %v3498
      %v3500 = vld [vmem:[%s11] sm:$0xff]
      %v3501 = vld [vmem:[%s11 + $0x8] sm:$0xff]
      %v3502 = vld [vmem:[%s11 + $0x10] sm:$0xff]
      %v3503 = vld [vmem:[%s11 + $0x18] sm:$0xff]
      %v3504 = vld [vmem:[%s11 + $0x20] sm:$0xff]
      %v3505 = vld [vmem:[%s11 + $0x28] sm:$0xff]
      %v3506 = vld [vmem:[%s11 + $0x30] sm:$0xff]
      %v3507 = vld [vmem:[%s11 + $0x38] sm:$0xff]
      %v3508 = vld [vmem:[%s11 + $0x40] sm:$0xff]
      %v3509 = vld [vmem:[%s11 + $0x48] sm:$0xff]
      %v3510 = vld [vmem:[%s11 + $0x50] sm:$0xff]
      %v3511 = vld [vmem:[%s11 + $0x58] sm:$0xff]
      %v3512 = vld [vmem:[%s11 + $0x60] sm:$0xff]
      %v3513 = vld [vmem:[%s11 + $0x68] sm:$0xff]
      %v3514 = vld [vmem:[%s11 + $0x70] sm:$0xff]
      %v3515 = vld [vmem:[%s11 + $0x78] sm:$0xff]
      %v3516 = vld [vmem:[%s11 + $0x80] sm:$0xff]
      %v3517 = vld [vmem:[%s11 + $0x88] sm:$0xff]
      %v3518 = vld [vmem:[%s11 + $0x90] sm:$0xff]
      %v3519 = vld [vmem:[%s11 + $0x98] sm:$0xff]
      %v3520 = vld [vmem:[%s11 + $0xa0] sm:$0xff]
      %v3521 = vld [vmem:[%s11 + $0xa8] sm:$0xff]
      %v3522 = vld [vmem:[%s11 + $0xb0] sm:$0xff]
      %v3523 = vld [vmem:[%s11 + $0xb8] sm:$0xff]
      %v3524 = vld [vmem:[%s11 + $0xc0] sm:$0xff]
      %v3525 = vld [vmem:[%s11 + $0xc8] sm:$0xff]
      %v3526 = vld [vmem:[%s11 + $0xd0] sm:$0xff]
      %v3527 = vld [vmem:[%s11 + $0xd8] sm:$0xff]
      %v3528 = vld [vmem:[%s11 + $0xe0] sm:$0xff]
      %v3529 = vld [vmem:[%s11 + $0xe8] sm:$0xff]
      %v3530 = vld [vmem:[%s11 + $0xf0] sm:$0xff]
      %v3531 = vld [vmem:[%s11 + $0xf8] sm:$0xff]
      %v3532 = vld [vmem:[%s11 + $0x100] sm:$0xff]
      %v3533 = vld [vmem:[%s11 + $0x108] sm:$0xff]
      %v3534 = vld [vmem:[%s11 + $0x110] sm:$0xff]
      %v3535 = vld [vmem:[%s11 + $0x118] sm:$0xff]
      %v3536 = vld [vmem:[%s11 + $0x120] sm:$0xff]
      %v3537 = vld [vmem:[%s11 + $0x128] sm:$0xff]
      %v3538 = vld [vmem:[%s11 + $0x130] sm:$0xff]
      %v3539 = vld [vmem:[%s11 + $0x138] sm:$0xff]
      %v3540 = vld [vmem:[%s11 + $0x140] sm:$0xff]
      %v3541 = vld [vmem:[%s11 + $0x148] sm:$0xff]
      %v3542 = vld [vmem:[%s11 + $0x150] sm:$0xff]
      %v3543 = vld [vmem:[%s11 + $0x158] sm:$0xff]
      %v3544 = vld [vmem:[%s11 + $0x160] sm:$0xff]
      %v3545 = vld [vmem:[%s11 + $0x168] sm:$0xff]
      %v3546 = vld [vmem:[%s11 + $0x170] sm:$0xff]
      %v3547 = vld [vmem:[%s11 + $0x178] sm:$0xff]
      %v3548 = vld [vmem:[%s11 + $0x180] sm:$0xff]
      %v3549 = vld [vmem:[%s11 + $0x188] sm:$0xff]
      %v3550 = vld [vmem:[%s11 + $0x190] sm:$0xff]
      %v3551 = vld [vmem:[%s11 + $0x198] sm:$0xff]
      %v3552 = vld [vmem:[%s11 + $0x1a0] sm:$0xff]
      %v3553 = vld [vmem:[%s11 + $0x1a8] sm:$0xff]
      %v3554 = vld [vmem:[%s11 + $0x1b0] sm:$0xff]
      %v3555 = vld [vmem:[%s11 + $0x1b8] sm:$0xff]
      %v3556 = vld [vmem:[%s11 + $0x1c0] sm:$0xff]
      %v3557 = vld [vmem:[%s11 + $0x1c8] sm:$0xff]
      %v3558 = vld [vmem:[%s11 + $0x1d0] sm:$0xff]
      %v3559 = vld [vmem:[%s11 + $0x1d8] sm:$0xff]
      %v3560 = vld [vmem:[%s11 + $0x1e0] sm:$0xff]
      %v3561 = vld [vmem:[%s11 + $0x1e8] sm:$0xff]
      %v3562 = vld [vmem:[%s11 + $0x1f0] sm:$0xff]
      %v3563 = vld [vmem:[%s11 + $0x1f8] sm:$0xff]
      %3564 = vmatprep.subr.mxu0 %v3501
      %3565 = vmatpush1.msra.mxu0 %v3500
      %3566 = vmatprep.subr.mxu0 %v3503
      %3567 = vmatpush1.msra.mxu0 %v3502
      %3568 = vmatprep.subr.mxu0 %v3505
      %3569 = vmatpush1.msra.mxu0 %v3504
      %3570 = vmatprep.subr.mxu0 %v3507
      %3571 = vmatpush1.msra.mxu0 %v3506
      %3572 = vmatprep.subr.mxu0 %v3509
      %3573 = vmatpush1.msra.mxu0 %v3508
      %3574 = vmatprep.subr.mxu0 %v3511
      %3575 = vmatpush1.msra.mxu0 %v3510
      %3576 = vmatprep.subr.mxu0 %v3513
      %3577 = vmatpush1.msra.mxu0 %v3512
      %3578 = vmatprep.subr.mxu0 %v3515
      %3579 = vmatpush1.msra.mxu0 %v3514
      %3580 = vmatprep.subr.mxu0 %v3517
      %3581 = vmatpush1.msra.mxu0 %v3516
      %3582 = vmatprep.subr.mxu0 %v3519
      %3583 = vmatpush1.msra.mxu0 %v3518
      %3584 = vmatprep.subr.mxu0 %v3521
      %3585 = vmatpush1.msra.mxu0 %v3520
      %3586 = vmatprep.subr.mxu0 %v3523
      %3587 = vmatpush1.msra.mxu0 %v3522
      %3588 = vmatprep.subr.mxu0 %v3525
      %3589 = vmatpush1.msra.mxu0 %v3524
      %3590 = vmatprep.subr.mxu0 %v3527
      %3591 = vmatpush1.msra.mxu0 %v3526
      %3592 = vmatprep.subr.mxu0 %v3529
      %3593 = vmatpush1.msra.mxu0 %v3528
      %3594 = vmatprep.subr.mxu0 %v3531
      %3595 = vmatpush1.msra.mxu0 %v3530
      %3596 = vmatprep.subr.mxu0 %v3533
      %3597 = vmatpush1.msra.mxu0 %v3532
      %3598 = vmatprep.subr.mxu0 %v3535
      %3599 = vmatpush1.msra.mxu0 %v3534
      %3600 = vmatprep.subr.mxu0 %v3537
      %3601 = vmatpush1.msra.mxu0 %v3536
      %3602 = vmatprep.subr.mxu0 %v3539
      %3603 = vmatpush1.msra.mxu0 %v3538
      %3604 = vmatprep.subr.mxu0 %v3541
      %3605 = vmatpush1.msra.mxu0 %v3540
      %3606 = vmatprep.subr.mxu0 %v3543
      %3607 = vmatpush1.msra.mxu0 %v3542
      %3608 = vmatprep.subr.mxu0 %v3545
      %3609 = vmatpush1.msra.mxu0 %v3544
      %3610 = vmatprep.subr.mxu0 %v3547
      %3611 = vmatpush1.msra.mxu0 %v3546
      %3612 = vmatprep.subr.mxu0 %v3549
      %3613 = vmatpush1.msra.mxu0 %v3548
      %3614 = vmatprep.subr.mxu0 %v3551
      %3615 = vmatpush1.msra.mxu0 %v3550
      %3616 = vmatprep.subr.mxu0 %v3553
      %3617 = vmatpush1.msra.mxu0 %v3552
      %3618 = vmatprep.subr.mxu0 %v3555
      %3619 = vmatpush1.msra.mxu0 %v3554
      %3620 = vmatprep.subr.mxu0 %v3557
      %3621 = vmatpush1.msra.mxu0 %v3556
      %3622 = vmatprep.subr.mxu0 %v3559
      %3623 = vmatpush1.msra.mxu0 %v3558
      %3624 = vmatprep.subr.mxu0 %v3561
      %3625 = vmatpush1.msra.mxu0 %v3560
      %3626 = vmatprep.subr.mxu0 %v3563
      %3627 = vmatpush1.msra.mxu0 %v3562
      %3628 = vmatprep.mubr.f32.mxu0 %v3471
      %3629 = vmatmul.mubr.f32.gmra.mrb[0].mxu0 %v3469
      %v3630 = vpop.f32.mrb[0].mxu0
      %v3631 = vadd.f32 0.0, %v3630
      %v3632 = vpop.f32.mrb[0].mxu0
      %v3633 = vadd.f32 0.0, %v3632
      %3634 = vmatprep.mubr.f32.mxu0 %v3475
      %3635 = vmatmul.mubr.f32.gmra.mrb[0].mxu0 %v3473
      %v3636 = vpop.f32.mrb[0].mxu0
      %v3637 = vadd.f32 0.0, %v3636
      %v3638 = vpop.f32.mrb[0].mxu0
      %v3639 = vadd.f32 0.0, %v3638
      %3640 = vmatprep.mubr.f32.mxu0 %v3479
      %3641 = vmatmul.mubr.f32.gmra.mrb[0].mxu0 %v3477
      %v3642 = vpop.f32.mrb[0].mxu0
      %v3643 = vadd.f32 0.0, %v3642
      %v3644 = vpop.f32.mrb[0].mxu0
      %v3645 = vadd.f32 0.0, %v3644
      %3646 = vmatprep.mubr.f32.mxu0 %v3483
      %3647 = vmatmul.mubr.f32.gmra.mrb[0].mxu0 %v3481
      %v3648 = vpop.f32.mrb[0].mxu0
      %v3649 = vadd.f32 0.0, %v3648
      %v3650 = vpop.f32.mrb[0].mxu0
      %v3651 = vadd.f32 0.0, %v3650
      %3652 = vmatprep.mubr.f32.mxu0 %v3487
      %3653 = vmatmul.mubr.f32.gmra.mrb[0].mxu0 %v3485
      %v3654 = vpop.f32.mrb[0].mxu0
      %v3655 = vadd.f32 0.0, %v3654
      %v3656 = vpop.f32.mrb[0].mxu0
      %v3657 = vadd.f32 0.0, %v3656
      %3658 = vmatprep.mubr.f32.mxu0 %v3491
      %3659 = vmatmul.mubr.f32.gmra.mrb[0].mxu0 %v3489
      %v3660 = vpop.f32.mrb[0].mxu0
      %v3661 = vadd.f32 0.0, %v3660
      %v3662 = vpop.f32.mrb[0].mxu0
      %v3663 = vadd.f32 0.0, %v3662
      %3664 = vmatprep.mubr.f32.mxu0 %v3495
      %3665 = vmatmul.mubr.f32.gmra.mrb[0].mxu0 %v3493
      %v3666 = vpop.f32.mrb[0].mxu0
      %v3667 = vadd.f32 0.0, %v3666
      %v3668 = vpop.f32.mrb[0].mxu0
      %v3669 = vadd.f32 0.0, %v3668
      %3670 = vmatprep.mubr.f32.mxu0 %v3499
      %3671 = vmatmul.mubr.f32.gmra.mrb[0].mxu0 %v3497
      %v3672 = vpop.f32.mrb[0].mxu0
      %v3673 = vadd.f32 0.0, %v3672
      %v3674 = vpop.f32.mrb[0].mxu0
      %v3675 = vadd.f32 0.0, %v3674
      %3676 = vdwg.mxu0
      %v3677 = vrcp.pop %v3631
      %v3678 = vrcp.pop %v3633
      %v3679 = vrcp.pop %v3637
      %v3680 = vrcp.pop %v3639
      %v3681 = vrcp.pop %v3643
      %v3682 = vrcp.pop %v3645
      %v3683 = vrcp.pop %v3649
      %v3684 = vrcp.pop %v3651
      %v3685 = vrcp.pop %v3655
      %v3686 = vrcp.pop %v3657
      %v3687 = vrcp.pop %v3661
      %v3688 = vrcp.pop %v3663
      %v3689 = vrcp.pop %v3667
      %v3690 = vrcp.pop %v3669
      %v3691 = vrcp.pop %v3673
      %v3692 = vrcp.pop %v3675
      %v3693 = vmul.f32 %v3469, %v3677
      %v3694 = vmul.f32 %v3471, %v3678
      %v3695 = vmul.f32 %v3473, %v3679
      %v3696 = vmul.f32 %v3475, %v3680
      %v3697 = vmul.f32 %v3477, %v3681
      %v3698 = vmul.f32 %v3479, %v3682
      %v3699 = vmul.f32 %v3481, %v3683
      %v3700 = vmul.f32 %v3483, %v3684
      %v3701 = vmul.f32 %v3485, %v3685
      %v3702 = vmul.f32 %v3487, %v3686
      %v3703 = vmul.f32 %v3489, %v3687
      %v3704 = vmul.f32 %v3491, %v3688
      %v3705 = vmul.f32 %v3493, %v3689
      %v3706 = vmul.f32 %v3495, %v3690
      %v3707 = vmul.f32 %v3497, %v3691
      %v3708 = vmul.f32 %v3499, %v3692
      %v3709 = vmul.f32 %v3693, %v3173
      %v3710 = vmul.f32 %v3694, %v3175
      %v3711 = vmul.f32 %v3695, %v3179
      %v3712 = vmul.f32 %v3696, %v3181
      %v3713 = vmul.f32 %v3697, %v3185
      %v3714 = vmul.f32 %v3698, %v3187
      %v3715 = vmul.f32 %v3699, %v3191
      %v3716 = vmul.f32 %v3700, %v3193
      %v3717 = vmul.f32 %v3701, %v3197
      %v3718 = vmul.f32 %v3702, %v3199
      %v3719 = vmul.f32 %v3703, %v3203
      %v3720 = vmul.f32 %v3704, %v3205
      %v3721 = vmul.f32 %v3705, %v3209
      %v3722 = vmul.f32 %v3706, %v3211
      %v3723 = vmul.f32 %v3707, %v3215
      %v3724 = vmul.f32 %v3708, %v3217
      %3725 = vrot.lane.b32.xlu0 %v3709, 17
      %v3726 = vpop.permute.xlu0 %3725
      %3727 = vrot.lane.b32.xlu0 %v3711, 17
      %v3728 = vpop.permute.xlu0 %3727
      %3729 = vrot.lane.b32.xlu0 %v3713, 17
      %v3730 = vpop.permute.xlu0 %3729
      %3731 = vrot.lane.b32.xlu0 %v3715, 17
      %v3732 = vpop.permute.xlu0 %3731
      %3733 = vrot.lane.b32.xlu0 %v3717, 17
      %v3734 = vpop.permute.xlu0 %3733
      %3735 = vrot.lane.b32.xlu0 %v3719, 17
      %v3736 = vpop.permute.xlu0 %3735
      %3737 = vrot.lane.b32.xlu0 %v3721, 17
      %v3738 = vpop.permute.xlu0 %3737
      %3739 = vrot.lane.b32.xlu0 %v3723, 17
      %v3740 = vpop.permute.xlu0 %3739
      %3741 = vrot.lane.b32.xlu0 %v3710, 17
      %v3742 = vpop.permute.xlu0 %3741
      %3743 = vrot.lane.b32.xlu0 %v3712, 17
      %v3744 = vpop.permute.xlu0 %3743
      %3745 = vrot.lane.b32.xlu0 %v3714, 17
      %v3746 = vpop.permute.xlu0 %3745
      %3747 = vrot.lane.b32.xlu0 %v3716, 17
      %v3748 = vpop.permute.xlu0 %3747
      %3749 = vrot.lane.b32.xlu0 %v3718, 17
      %v3750 = vpop.permute.xlu0 %3749
      %3751 = vrot.lane.b32.xlu0 %v3720, 17
      %v3752 = vpop.permute.xlu0 %3751
      %3753 = vrot.lane.b32.xlu0 %v3722, 17
      %v3754 = vpop.permute.xlu0 %3753
      %3755 = vrot.lane.b32.xlu0 %v3724, 17
      %v3756 = vpop.permute.xlu0 %3755
      %v3757 = vsel %vm483, %v3726, %v3742
      %v3758 = vsel %vm483, %v3728, %v3744
      %v3759 = vsel %vm483, %v3730, %v3746
      %v3760 = vsel %vm483, %v3732, %v3748
      %v3761 = vsel %vm483, %v3734, %v3750
      %v3762 = vsel %vm483, %v3736, %v3752
      %v3763 = vsel %vm483, %v3738, %v3754
      %v3764 = vsel %vm483, %v3740, %v3756
      %v3765 = vsel %vm483, %v3742, %v3726
      %v3766 = vsel %vm483, %v3744, %v3728
      %v3767 = vsel %vm483, %v3746, %v3730
      %v3768 = vsel %vm483, %v3748, %v3732
      %v3769 = vsel %vm483, %v3750, %v3734
      %v3770 = vsel %vm483, %v3752, %v3736
      %v3771 = vsel %vm483, %v3754, %v3738
      %v3772 = vsel %vm483, %v3756, %v3740
      %v3773 = vsel %vm502, %v3765, 0.0
      %v3774 = vsel %vm503, %v3757, 0.0
      %v3775 = vsel %vm502, %v3766, 0.0
      %v3776 = vsel %vm503, %v3758, 0.0
      %v3777 = vsel %vm502, %v3767, 0.0
      %v3778 = vsel %vm503, %v3759, 0.0
      %v3779 = vsel %vm502, %v3768, 0.0
      %v3780 = vsel %vm503, %v3760, 0.0
      %v3781 = vsel %vm502, %v3769, 0.0
      %v3782 = vsel %vm503, %v3761, 0.0
      %v3783 = vsel %vm502, %v3770, 0.0
      %v3784 = vsel %vm503, %v3762, 0.0
      %v3785 = vsel %vm502, %v3771, 0.0
      %v3786 = vsel %vm503, %v3763, 0.0
      %v3787 = vsel %vm502, %v3772, 0.0
      %v3788 = vsel %vm503, %v3764, 0.0
      %3789 = vrot.lane.b32.xlu0 %v3709, 16
      %v3790 = vpop.permute.xlu0 %3789
      %3791 = vrot.lane.b32.xlu0 %v3711, 16
      %v3792 = vpop.permute.xlu0 %3791
      %3793 = vrot.lane.b32.xlu0 %v3713, 16
      %v3794 = vpop.permute.xlu0 %3793
      %3795 = vrot.lane.b32.xlu0 %v3715, 16
      %v3796 = vpop.permute.xlu0 %3795
      %3797 = vrot.lane.b32.xlu0 %v3717, 16
      %v3798 = vpop.permute.xlu0 %3797
      %3799 = vrot.lane.b32.xlu0 %v3719, 16
      %v3800 = vpop.permute.xlu0 %3799
      %3801 = vrot.lane.b32.xlu0 %v3721, 16
      %v3802 = vpop.permute.xlu0 %3801
      %3803 = vrot.lane.b32.xlu0 %v3723, 16
      %v3804 = vpop.permute.xlu0 %3803
      %3805 = vrot.lane.b32.xlu0 %v3710, 16
      %v3806 = vpop.permute.xlu0 %3805
      %3807 = vrot.lane.b32.xlu0 %v3712, 16
      %v3808 = vpop.permute.xlu0 %3807
      %3809 = vrot.lane.b32.xlu0 %v3714, 16
      %v3810 = vpop.permute.xlu0 %3809
      %3811 = vrot.lane.b32.xlu0 %v3716, 16
      %v3812 = vpop.permute.xlu0 %3811
      %3813 = vrot.lane.b32.xlu0 %v3718, 16
      %v3814 = vpop.permute.xlu0 %3813
      %3815 = vrot.lane.b32.xlu0 %v3720, 16
      %v3816 = vpop.permute.xlu0 %3815
      %3817 = vrot.lane.b32.xlu0 %v3722, 16
      %v3818 = vpop.permute.xlu0 %3817
      %3819 = vrot.lane.b32.xlu0 %v3724, 16
      %v3820 = vpop.permute.xlu0 %3819
      %v3821 = vsel %vm552, %v3790, %v3806
      %v3822 = vsel %vm552, %v3792, %v3808
      %v3823 = vsel %vm552, %v3794, %v3810
      %v3824 = vsel %vm552, %v3796, %v3812
      %v3825 = vsel %vm552, %v3798, %v3814
      %v3826 = vsel %vm552, %v3800, %v3816
      %v3827 = vsel %vm552, %v3802, %v3818
      %v3828 = vsel %vm552, %v3804, %v3820
      %v3829 = vsel %vm552, %v3806, %v3790
      %v3830 = vsel %vm552, %v3808, %v3792
      %v3831 = vsel %vm552, %v3810, %v3794
      %v3832 = vsel %vm552, %v3812, %v3796
      %v3833 = vsel %vm552, %v3814, %v3798
      %v3834 = vsel %vm552, %v3816, %v3800
      %v3835 = vsel %vm552, %v3818, %v3802
      %v3836 = vsel %vm552, %v3820, %v3804
      %v3837 = vsel %vm571, %v3829, 0.0
      %v3838 = vsel %vm572, %v3821, 0.0
      %v3839 = vsel %vm571, %v3830, 0.0
      %v3840 = vsel %vm572, %v3822, 0.0
      %v3841 = vsel %vm571, %v3831, 0.0
      %v3842 = vsel %vm572, %v3823, 0.0
      %v3843 = vsel %vm571, %v3832, 0.0
      %v3844 = vsel %vm572, %v3824, 0.0
      %v3845 = vsel %vm571, %v3833, 0.0
      %v3846 = vsel %vm572, %v3825, 0.0
      %v3847 = vsel %vm571, %v3834, 0.0
      %v3848 = vsel %vm572, %v3826, 0.0
      %v3849 = vsel %vm571, %v3835, 0.0
      %v3850 = vsel %vm572, %v3827, 0.0
      %v3851 = vsel %vm571, %v3836, 0.0
      %v3852 = vsel %vm572, %v3828, 0.0
      %3853 = vrot.lane.b32.xlu0 %v3709, 15
      %v3854 = vpop.permute.xlu0 %3853
      %3855 = vrot.lane.b32.xlu0 %v3711, 15
      %v3856 = vpop.permute.xlu0 %3855
      %3857 = vrot.lane.b32.xlu0 %v3713, 15
      %v3858 = vpop.permute.xlu0 %3857
      %3859 = vrot.lane.b32.xlu0 %v3715, 15
      %v3860 = vpop.permute.xlu0 %3859
      %3861 = vrot.lane.b32.xlu0 %v3717, 15
      %v3862 = vpop.permute.xlu0 %3861
      %3863 = vrot.lane.b32.xlu0 %v3719, 15
      %v3864 = vpop.permute.xlu0 %3863
      %3865 = vrot.lane.b32.xlu0 %v3721, 15
      %v3866 = vpop.permute.xlu0 %3865
      %3867 = vrot.lane.b32.xlu0 %v3723, 15
      %v3868 = vpop.permute.xlu0 %3867
      %3869 = vrot.lane.b32.xlu0 %v3710, 15
      %v3870 = vpop.permute.xlu0 %3869
      %3871 = vrot.lane.b32.xlu0 %v3712, 15
      %v3872 = vpop.permute.xlu0 %3871
      %3873 = vrot.lane.b32.xlu0 %v3714, 15
      %v3874 = vpop.permute.xlu0 %3873
      %3875 = vrot.lane.b32.xlu0 %v3716, 15
      %v3876 = vpop.permute.xlu0 %3875
      %3877 = vrot.lane.b32.xlu0 %v3718, 15
      %v3878 = vpop.permute.xlu0 %3877
      %3879 = vrot.lane.b32.xlu0 %v3720, 15
      %v3880 = vpop.permute.xlu0 %3879
      %3881 = vrot.lane.b32.xlu0 %v3722, 15
      %v3882 = vpop.permute.xlu0 %3881
      %3883 = vrot.lane.b32.xlu0 %v3724, 15
      %v3884 = vpop.permute.xlu0 %3883
      %v3885 = vsel %vm621, %v3854, %v3870
      %v3886 = vsel %vm621, %v3856, %v3872
      %v3887 = vsel %vm621, %v3858, %v3874
      %v3888 = vsel %vm621, %v3860, %v3876
      %v3889 = vsel %vm621, %v3862, %v3878
      %v3890 = vsel %vm621, %v3864, %v3880
      %v3891 = vsel %vm621, %v3866, %v3882
      %v3892 = vsel %vm621, %v3868, %v3884
      %v3893 = vsel %vm621, %v3870, %v3854
      %v3894 = vsel %vm621, %v3872, %v3856
      %v3895 = vsel %vm621, %v3874, %v3858
      %v3896 = vsel %vm621, %v3876, %v3860
      %v3897 = vsel %vm621, %v3878, %v3862
      %v3898 = vsel %vm621, %v3880, %v3864
      %v3899 = vsel %vm621, %v3882, %v3866
      %v3900 = vsel %vm621, %v3884, %v3868
      %v3901 = vsel %vm640, %v3893, 0.0
      %v3902 = vsel %vm641, %v3885, 0.0
      %v3903 = vsel %vm640, %v3894, 0.0
      %v3904 = vsel %vm641, %v3886, 0.0
      %v3905 = vsel %vm640, %v3895, 0.0
      %v3906 = vsel %vm641, %v3887, 0.0
      %v3907 = vsel %vm640, %v3896, 0.0
      %v3908 = vsel %vm641, %v3888, 0.0
      %v3909 = vsel %vm640, %v3897, 0.0
      %v3910 = vsel %vm641, %v3889, 0.0
      %v3911 = vsel %vm640, %v3898, 0.0
      %v3912 = vsel %vm641, %v3890, 0.0
      %v3913 = vsel %vm640, %v3899, 0.0
      %v3914 = vsel %vm641, %v3891, 0.0
      %v3915 = vsel %vm640, %v3900, 0.0
      %v3916 = vsel %vm641, %v3892, 0.0
      %3917 = vrot.lane.b32.xlu0 %v3709, 1
      %v3918 = vpop.permute.xlu0 %3917
      %3919 = vrot.lane.b32.xlu0 %v3711, 1
      %v3920 = vpop.permute.xlu0 %3919
      %3921 = vrot.lane.b32.xlu0 %v3713, 1
      %v3922 = vpop.permute.xlu0 %3921
      %3923 = vrot.lane.b32.xlu0 %v3715, 1
      %v3924 = vpop.permute.xlu0 %3923
      %3925 = vrot.lane.b32.xlu0 %v3717, 1
      %v3926 = vpop.permute.xlu0 %3925
      %3927 = vrot.lane.b32.xlu0 %v3719, 1
      %v3928 = vpop.permute.xlu0 %3927
      %3929 = vrot.lane.b32.xlu0 %v3721, 1
      %v3930 = vpop.permute.xlu0 %3929
      %3931 = vrot.lane.b32.xlu0 %v3723, 1
      %v3932 = vpop.permute.xlu0 %3931
      %3933 = vrot.lane.b32.xlu0 %v3710, 1
      %v3934 = vpop.permute.xlu0 %3933
      %3935 = vrot.lane.b32.xlu0 %v3712, 1
      %v3936 = vpop.permute.xlu0 %3935
      %3937 = vrot.lane.b32.xlu0 %v3714, 1
      %v3938 = vpop.permute.xlu0 %3937
      %3939 = vrot.lane.b32.xlu0 %v3716, 1
      %v3940 = vpop.permute.xlu0 %3939
      %3941 = vrot.lane.b32.xlu0 %v3718, 1
      %v3942 = vpop.permute.xlu0 %3941
      %3943 = vrot.lane.b32.xlu0 %v3720, 1
      %v3944 = vpop.permute.xlu0 %3943
      %3945 = vrot.lane.b32.xlu0 %v3722, 1
      %v3946 = vpop.permute.xlu0 %3945
      %3947 = vrot.lane.b32.xlu0 %v3724, 1
      %v3948 = vpop.permute.xlu0 %3947
      %v3949 = vsel %vm690, %v3918, %v3934
      %v3950 = vsel %vm690, %v3920, %v3936
      %v3951 = vsel %vm690, %v3922, %v3938
      %v3952 = vsel %vm690, %v3924, %v3940
      %v3953 = vsel %vm690, %v3926, %v3942
      %v3954 = vsel %vm690, %v3928, %v3944
      %v3955 = vsel %vm690, %v3930, %v3946
      %v3956 = vsel %vm690, %v3932, %v3948
      %v3957 = vsel %vm690, %v3934, %v3918
      %v3958 = vsel %vm690, %v3936, %v3920
      %v3959 = vsel %vm690, %v3938, %v3922
      %v3960 = vsel %vm690, %v3940, %v3924
      %v3961 = vsel %vm690, %v3942, %v3926
      %v3962 = vsel %vm690, %v3944, %v3928
      %v3963 = vsel %vm690, %v3946, %v3930
      %v3964 = vsel %vm690, %v3948, %v3932
      %v3965 = vsel %vm709, %v3957, 0.0
      %v3966 = vsel %vm710, %v3949, 0.0
      %v3967 = vsel %vm709, %v3958, 0.0
      %v3968 = vsel %vm710, %v3950, 0.0
      %v3969 = vsel %vm709, %v3959, 0.0
      %v3970 = vsel %vm710, %v3951, 0.0
      %v3971 = vsel %vm709, %v3960, 0.0
      %v3972 = vsel %vm710, %v3952, 0.0
      %v3973 = vsel %vm709, %v3961, 0.0
      %v3974 = vsel %vm710, %v3953, 0.0
      %v3975 = vsel %vm709, %v3962, 0.0
      %v3976 = vsel %vm710, %v3954, 0.0
      %v3977 = vsel %vm709, %v3963, 0.0
      %v3978 = vsel %vm710, %v3955, 0.0
      %v3979 = vsel %vm709, %v3964, 0.0
      %v3980 = vsel %vm710, %v3956, 0.0
      %3981 = vrot.lane.b32.xlu0 %v3709, 127
      %v3982 = vpop.permute.xlu0 %3981
      %3983 = vrot.lane.b32.xlu0 %v3711, 127
      %v3984 = vpop.permute.xlu0 %3983
      %3985 = vrot.lane.b32.xlu0 %v3713, 127
      %v3986 = vpop.permute.xlu0 %3985
      %3987 = vrot.lane.b32.xlu0 %v3715, 127
      %v3988 = vpop.permute.xlu0 %3987
      %3989 = vrot.lane.b32.xlu0 %v3717, 127
      %v3990 = vpop.permute.xlu0 %3989
      %3991 = vrot.lane.b32.xlu0 %v3719, 127
      %v3992 = vpop.permute.xlu0 %3991
      %3993 = vrot.lane.b32.xlu0 %v3721, 127
      %v3994 = vpop.permute.xlu0 %3993
      %3995 = vrot.lane.b32.xlu0 %v3723, 127
      %v3996 = vpop.permute.xlu0 %3995
      %3997 = vrot.lane.b32.xlu0 %v3710, 127
      %v3998 = vpop.permute.xlu0 %3997
      %3999 = vrot.lane.b32.xlu0 %v3712, 127
      %v4000 = vpop.permute.xlu0 %3999
      %4001 = vrot.lane.b32.xlu0 %v3714, 127
      %v4002 = vpop.permute.xlu0 %4001
      %4003 = vrot.lane.b32.xlu0 %v3716, 127
      %v4004 = vpop.permute.xlu0 %4003
      %4005 = vrot.lane.b32.xlu0 %v3718, 127
      %v4006 = vpop.permute.xlu0 %4005
      %4007 = vrot.lane.b32.xlu0 %v3720, 127
      %v4008 = vpop.permute.xlu0 %4007
      %4009 = vrot.lane.b32.xlu0 %v3722, 127
      %v4010 = vpop.permute.xlu0 %4009
      %4011 = vrot.lane.b32.xlu0 %v3724, 127
      %v4012 = vpop.permute.xlu0 %4011
      %v4013 = vsel %vm759, %v3982, %v3998
      %v4014 = vsel %vm759, %v3984, %v4000
      %v4015 = vsel %vm759, %v3986, %v4002
      %v4016 = vsel %vm759, %v3988, %v4004
      %v4017 = vsel %vm759, %v3990, %v4006
      %v4018 = vsel %vm759, %v3992, %v4008
      %v4019 = vsel %vm759, %v3994, %v4010
      %v4020 = vsel %vm759, %v3996, %v4012
      %v4021 = vsel %vm759, %v3998, %v3982
      %v4022 = vsel %vm759, %v4000, %v3984
      %v4023 = vsel %vm759, %v4002, %v3986
      %v4024 = vsel %vm759, %v4004, %v3988
      %v4025 = vsel %vm759, %v4006, %v3990
      %v4026 = vsel %vm759, %v4008, %v3992
      %v4027 = vsel %vm759, %v4010, %v3994
      %v4028 = vsel %vm759, %v4012, %v3996
      %v4029 = vsel %vm778, %v4013, 0.0
      %v4030 = vsel %vm779, %v4021, 0.0
      %v4031 = vsel %vm778, %v4014, 0.0
      %v4032 = vsel %vm779, %v4022, 0.0
      %v4033 = vsel %vm778, %v4015, 0.0
      %v4034 = vsel %vm779, %v4023, 0.0
      %v4035 = vsel %vm778, %v4016, 0.0
      %v4036 = vsel %vm779, %v4024, 0.0
      %v4037 = vsel %vm778, %v4017, 0.0
      %v4038 = vsel %vm779, %v4025, 0.0
      %v4039 = vsel %vm778, %v4018, 0.0
      %v4040 = vsel %vm779, %v4026, 0.0
      %v4041 = vsel %vm778, %v4019, 0.0
      %v4042 = vsel %vm779, %v4027, 0.0
      %v4043 = vsel %vm778, %v4020, 0.0
      %v4044 = vsel %vm779, %v4028, 0.0
      %4045 = vrot.lane.b32.xlu0 %v3709, 113
      %v4046 = vpop.permute.xlu0 %4045
      %4047 = vrot.lane.b32.xlu0 %v3711, 113
      %v4048 = vpop.permute.xlu0 %4047
      %4049 = vrot.lane.b32.xlu0 %v3713, 113
      %v4050 = vpop.permute.xlu0 %4049
      %4051 = vrot.lane.b32.xlu0 %v3715, 113
      %v4052 = vpop.permute.xlu0 %4051
      %4053 = vrot.lane.b32.xlu0 %v3717, 113
      %v4054 = vpop.permute.xlu0 %4053
      %4055 = vrot.lane.b32.xlu0 %v3719, 113
      %v4056 = vpop.permute.xlu0 %4055
      %4057 = vrot.lane.b32.xlu0 %v3721, 113
      %v4058 = vpop.permute.xlu0 %4057
      %4059 = vrot.lane.b32.xlu0 %v3723, 113
      %v4060 = vpop.permute.xlu0 %4059
      %4061 = vrot.lane.b32.xlu0 %v3710, 113
      %v4062 = vpop.permute.xlu0 %4061
      %4063 = vrot.lane.b32.xlu0 %v3712, 113
      %v4064 = vpop.permute.xlu0 %4063
      %4065 = vrot.lane.b32.xlu0 %v3714, 113
      %v4066 = vpop.permute.xlu0 %4065
      %4067 = vrot.lane.b32.xlu0 %v3716, 113
      %v4068 = vpop.permute.xlu0 %4067
      %4069 = vrot.lane.b32.xlu0 %v3718, 113
      %v4070 = vpop.permute.xlu0 %4069
      %4071 = vrot.lane.b32.xlu0 %v3720, 113
      %v4072 = vpop.permute.xlu0 %4071
      %4073 = vrot.lane.b32.xlu0 %v3722, 113
      %v4074 = vpop.permute.xlu0 %4073
      %4075 = vrot.lane.b32.xlu0 %v3724, 113
      %v4076 = vpop.permute.xlu0 %4075
      %v4077 = vsel %vm828, %v4046, %v4062
      %v4078 = vsel %vm828, %v4048, %v4064
      %v4079 = vsel %vm828, %v4050, %v4066
      %v4080 = vsel %vm828, %v4052, %v4068
      %v4081 = vsel %vm828, %v4054, %v4070
      %v4082 = vsel %vm828, %v4056, %v4072
      %v4083 = vsel %vm828, %v4058, %v4074
      %v4084 = vsel %vm828, %v4060, %v4076
      %v4085 = vsel %vm828, %v4062, %v4046
      %v4086 = vsel %vm828, %v4064, %v4048
      %v4087 = vsel %vm828, %v4066, %v4050
      %v4088 = vsel %vm828, %v4068, %v4052
      %v4089 = vsel %vm828, %v4070, %v4054
      %v4090 = vsel %vm828, %v4072, %v4056
      %v4091 = vsel %vm828, %v4074, %v4058
      %v4092 = vsel %vm828, %v4076, %v4060
      %v4093 = vsel %vm847, %v4077, 0.0
      %v4094 = vsel %vm848, %v4085, 0.0
      %v4095 = vsel %vm847, %v4078, 0.0
      %v4096 = vsel %vm848, %v4086, 0.0
      %v4097 = vsel %vm847, %v4079, 0.0
      %v4098 = vsel %vm848, %v4087, 0.0
      %v4099 = vsel %vm847, %v4080, 0.0
      %v4100 = vsel %vm848, %v4088, 0.0
      %v4101 = vsel %vm847, %v4081, 0.0
      %v4102 = vsel %vm848, %v4089, 0.0
      %v4103 = vsel %vm847, %v4082, 0.0
      %v4104 = vsel %vm848, %v4090, 0.0
      %v4105 = vsel %vm847, %v4083, 0.0
      %v4106 = vsel %vm848, %v4091, 0.0
      %v4107 = vsel %vm847, %v4084, 0.0
      %v4108 = vsel %vm848, %v4092, 0.0
      %4109 = vrot.lane.b32.xlu0 %v3709, 112
      %v4110 = vpop.permute.xlu0 %4109
      %4111 = vrot.lane.b32.xlu0 %v3711, 112
      %v4112 = vpop.permute.xlu0 %4111
      %4113 = vrot.lane.b32.xlu0 %v3713, 112
      %v4114 = vpop.permute.xlu0 %4113
      %4115 = vrot.lane.b32.xlu0 %v3715, 112
      %v4116 = vpop.permute.xlu0 %4115
      %4117 = vrot.lane.b32.xlu0 %v3717, 112
      %v4118 = vpop.permute.xlu0 %4117
      %4119 = vrot.lane.b32.xlu0 %v3719, 112
      %v4120 = vpop.permute.xlu0 %4119
      %4121 = vrot.lane.b32.xlu0 %v3721, 112
      %v4122 = vpop.permute.xlu0 %4121
      %4123 = vrot.lane.b32.xlu0 %v3723, 112
      %v4124 = vpop.permute.xlu0 %4123
      %4125 = vrot.lane.b32.xlu0 %v3710, 112
      %v4126 = vpop.permute.xlu0 %4125
      %4127 = vrot.lane.b32.xlu0 %v3712, 112
      %v4128 = vpop.permute.xlu0 %4127
      %4129 = vrot.lane.b32.xlu0 %v3714, 112
      %v4130 = vpop.permute.xlu0 %4129
      %4131 = vrot.lane.b32.xlu0 %v3716, 112
      %v4132 = vpop.permute.xlu0 %4131
      %4133 = vrot.lane.b32.xlu0 %v3718, 112
      %v4134 = vpop.permute.xlu0 %4133
      %4135 = vrot.lane.b32.xlu0 %v3720, 112
      %v4136 = vpop.permute.xlu0 %4135
      %4137 = vrot.lane.b32.xlu0 %v3722, 112
      %v4138 = vpop.permute.xlu0 %4137
      %4139 = vrot.lane.b32.xlu0 %v3724, 112
      %v4140 = vpop.permute.xlu0 %4139
      %v4141 = vsel %vm897, %v4110, %v4126
      %v4142 = vsel %vm897, %v4112, %v4128
      %v4143 = vsel %vm897, %v4114, %v4130
      %v4144 = vsel %vm897, %v4116, %v4132
      %v4145 = vsel %vm897, %v4118, %v4134
      %v4146 = vsel %vm897, %v4120, %v4136
      %v4147 = vsel %vm897, %v4122, %v4138
      %v4148 = vsel %vm897, %v4124, %v4140
      %v4149 = vsel %vm897, %v4126, %v4110
      %v4150 = vsel %vm897, %v4128, %v4112
      %v4151 = vsel %vm897, %v4130, %v4114
      %v4152 = vsel %vm897, %v4132, %v4116
      %v4153 = vsel %vm897, %v4134, %v4118
      %v4154 = vsel %vm897, %v4136, %v4120
      %v4155 = vsel %vm897, %v4138, %v4122
      %v4156 = vsel %vm897, %v4140, %v4124
      %v4157 = vsel %vm916, %v4141, 0.0
      %v4158 = vsel %vm917, %v4149, 0.0
      %v4159 = vsel %vm916, %v4142, 0.0
      %v4160 = vsel %vm917, %v4150, 0.0
      %v4161 = vsel %vm916, %v4143, 0.0
      %v4162 = vsel %vm917, %v4151, 0.0
      %v4163 = vsel %vm916, %v4144, 0.0
      %v4164 = vsel %vm917, %v4152, 0.0
      %v4165 = vsel %vm916, %v4145, 0.0
      %v4166 = vsel %vm917, %v4153, 0.0
      %v4167 = vsel %vm916, %v4146, 0.0
      %v4168 = vsel %vm917, %v4154, 0.0
      %v4169 = vsel %vm916, %v4147, 0.0
      %v4170 = vsel %vm917, %v4155, 0.0
      %v4171 = vsel %vm916, %v4148, 0.0
      %v4172 = vsel %vm917, %v4156, 0.0
      %4173 = vrot.lane.b32.xlu0 %v3709, 111
      %v4174 = vpop.permute.xlu0 %4173
      %4175 = vrot.lane.b32.xlu0 %v3711, 111
      %v4176 = vpop.permute.xlu0 %4175
      %4177 = vrot.lane.b32.xlu0 %v3713, 111
      %v4178 = vpop.permute.xlu0 %4177
      %4179 = vrot.lane.b32.xlu0 %v3715, 111
      %v4180 = vpop.permute.xlu0 %4179
      %4181 = vrot.lane.b32.xlu0 %v3717, 111
      %v4182 = vpop.permute.xlu0 %4181
      %4183 = vrot.lane.b32.xlu0 %v3719, 111
      %v4184 = vpop.permute.xlu0 %4183
      %4185 = vrot.lane.b32.xlu0 %v3721, 111
      %v4186 = vpop.permute.xlu0 %4185
      %4187 = vrot.lane.b32.xlu0 %v3723, 111
      %v4188 = vpop.permute.xlu0 %4187
      %4189 = vrot.lane.b32.xlu0 %v3710, 111
      %v4190 = vpop.permute.xlu0 %4189
      %4191 = vrot.lane.b32.xlu0 %v3712, 111
      %v4192 = vpop.permute.xlu0 %4191
      %4193 = vrot.lane.b32.xlu0 %v3714, 111
      %v4194 = vpop.permute.xlu0 %4193
      %4195 = vrot.lane.b32.xlu0 %v3716, 111
      %v4196 = vpop.permute.xlu0 %4195
      %4197 = vrot.lane.b32.xlu0 %v3718, 111
      %v4198 = vpop.permute.xlu0 %4197
      %4199 = vrot.lane.b32.xlu0 %v3720, 111
      %v4200 = vpop.permute.xlu0 %4199
      %4201 = vrot.lane.b32.xlu0 %v3722, 111
      %v4202 = vpop.permute.xlu0 %4201
      %4203 = vrot.lane.b32.xlu0 %v3724, 111
      %v4204 = vpop.permute.xlu0 %4203
      %v4205 = vsel %vm966, %v4174, %v4190
      %v4206 = vsel %vm966, %v4176, %v4192
      %v4207 = vsel %vm966, %v4178, %v4194
      %v4208 = vsel %vm966, %v4180, %v4196
      %v4209 = vsel %vm966, %v4182, %v4198
      %v4210 = vsel %vm966, %v4184, %v4200
      %v4211 = vsel %vm966, %v4186, %v4202
      %v4212 = vsel %vm966, %v4188, %v4204
      %v4213 = vsel %vm966, %v4190, %v4174
      %v4214 = vsel %vm966, %v4192, %v4176
      %v4215 = vsel %vm966, %v4194, %v4178
      %v4216 = vsel %vm966, %v4196, %v4180
      %v4217 = vsel %vm966, %v4198, %v4182
      %v4218 = vsel %vm966, %v4200, %v4184
      %v4219 = vsel %vm966, %v4202, %v4186
      %v4220 = vsel %vm966, %v4204, %v4188
      %v4221 = vsel %vm985, %v4205, 0.0
      %v4222 = vsel %vm986, %v4213, 0.0
      %v4223 = vsel %vm985, %v4206, 0.0
      %v4224 = vsel %vm986, %v4214, 0.0
      %v4225 = vsel %vm985, %v4207, 0.0
      %v4226 = vsel %vm986, %v4215, 0.0
      %v4227 = vsel %vm985, %v4208, 0.0
      %v4228 = vsel %vm986, %v4216, 0.0
      %v4229 = vsel %vm985, %v4209, 0.0
      %v4230 = vsel %vm986, %v4217, 0.0
      %v4231 = vsel %vm985, %v4210, 0.0
      %v4232 = vsel %vm986, %v4218, 0.0
      %v4233 = vsel %vm985, %v4211, 0.0
      %v4234 = vsel %vm986, %v4219, 0.0
      %v4235 = vsel %vm985, %v4212, 0.0
      %v4236 = vsel %vm986, %v4220, 0.0
      %v4237 = vld [vmem:[%s7] sm:$0xff]
      %v4238 = vld [vmem:[%s7 + $0x8] sm:$0xff]
      %v4239 = vld [vmem:[%s7 + $0x10] sm:$0xff]
      %v4240 = vld [vmem:[%s7 + $0x18] sm:$0xff]
      %v4241 = vld [vmem:[%s7 + $0x20] sm:$0xff]
      %v4242 = vld [vmem:[%s7 + $0x28] sm:$0xff]
      %v4243 = vld [vmem:[%s7 + $0x30] sm:$0xff]
      %v4244 = vld [vmem:[%s7 + $0x38] sm:$0xff]
      %v4245 = vld [vmem:[%s7 + $0x40] sm:$0xff]
      %v4246 = vld [vmem:[%s7 + $0x48] sm:$0xff]
      %v4247 = vld [vmem:[%s7 + $0x50] sm:$0xff]
      %v4248 = vld [vmem:[%s7 + $0x58] sm:$0xff]
      %v4249 = vld [vmem:[%s7 + $0x60] sm:$0xff]
      %v4250 = vld [vmem:[%s7 + $0x68] sm:$0xff]
      %v4251 = vld [vmem:[%s7 + $0x70] sm:$0xff]
      %v4252 = vld [vmem:[%s7 + $0x78] sm:$0xff]
      %v4253 = vld [vmem:[%s7 + $0x80] sm:$0xff]
      %v4254 = vld [vmem:[%s7 + $0x88] sm:$0xff]
      %v4255 = vld [vmem:[%s7 + $0x90] sm:$0xff]
      %v4256 = vld [vmem:[%s7 + $0x98] sm:$0xff]
      %v4257 = vld [vmem:[%s7 + $0xa0] sm:$0xff]
      %v4258 = vld [vmem:[%s7 + $0xa8] sm:$0xff]
      %v4259 = vld [vmem:[%s7 + $0xb0] sm:$0xff]
      %v4260 = vld [vmem:[%s7 + $0xb8] sm:$0xff]
      %v4261 = vld [vmem:[%s7 + $0xc0] sm:$0xff]
      %v4262 = vld [vmem:[%s7 + $0xc8] sm:$0xff]
      %v4263 = vld [vmem:[%s7 + $0xd0] sm:$0xff]
      %v4264 = vld [vmem:[%s7 + $0xd8] sm:$0xff]
      %v4265 = vld [vmem:[%s7 + $0xe0] sm:$0xff]
      %v4266 = vld [vmem:[%s7 + $0xe8] sm:$0xff]
      %v4267 = vld [vmem:[%s7 + $0xf0] sm:$0xff]
      %v4268 = vld [vmem:[%s7 + $0xf8] sm:$0xff]
      %v4269 = vld [vmem:[%s7 + $0x100] sm:$0xff]
      %v4270 = vld [vmem:[%s7 + $0x108] sm:$0xff]
      %v4271 = vld [vmem:[%s7 + $0x110] sm:$0xff]
      %v4272 = vld [vmem:[%s7 + $0x118] sm:$0xff]
      %v4273 = vld [vmem:[%s7 + $0x120] sm:$0xff]
      %v4274 = vld [vmem:[%s7 + $0x128] sm:$0xff]
      %v4275 = vld [vmem:[%s7 + $0x130] sm:$0xff]
      %v4276 = vld [vmem:[%s7 + $0x138] sm:$0xff]
      %v4278 = vsel %vm1091, %v4241, 0
      %v4281 = vsel %vm1091, %v4246, 0
      %v4284 = vsel %vm1091, %v4251, 0
      %v4287 = vsel %vm1091, %v4256, 0
      %v4290 = vsel %vm1091, %v4261, 0
      %v4293 = vsel %vm1091, %v4266, 0
      %v4296 = vsel %vm1091, %v4271, 0
      %v4299 = vsel %vm1091, %v4276, 0
      %4301 = vmatprep.subr.mxu0 %v3774
      %4302 = vmatpush1.msra.mxu0 %v3773
      %4303 = vmatprep.subr.mxu0 %v3776
      %4304 = vmatpush1.msra.mxu0 %v3775
      %4305 = vmatprep.subr.mxu0 %v3778
      %4306 = vmatpush1.msra.mxu0 %v3777
      %4307 = vmatprep.subr.mxu0 %v3780
      %4308 = vmatpush1.msra.mxu0 %v3779
      %4309 = vmatprep.subr.mxu0 %v3782
      %4310 = vmatpush1.msra.mxu0 %v3781
      %4311 = vmatprep.subr.mxu0 %v3784
      %4312 = vmatpush1.msra.mxu0 %v3783
      %4313 = vmatprep.subr.mxu0 %v3786
      %4314 = vmatpush1.msra.mxu0 %v3785
      %4315 = vmatprep.subr.mxu0 %v3788
      %4316 = vmatpush1.msra.mxu0 %v3787
      %4317 = vmatprep.subr.mxu0 %v3838
      %4318 = vmatpush1.msra.mxu0 %v3837
      %4319 = vmatprep.subr.mxu0 %v3840
      %4320 = vmatpush1.msra.mxu0 %v3839
      %4321 = vmatprep.subr.mxu0 %v3842
      %4322 = vmatpush1.msra.mxu0 %v3841
      %4323 = vmatprep.subr.mxu0 %v3844
      %4324 = vmatpush1.msra.mxu0 %v3843
      %4325 = vmatprep.subr.mxu0 %v3846
      %4326 = vmatpush1.msra.mxu0 %v3845
      %4327 = vmatprep.subr.mxu0 %v3848
      %4328 = vmatpush1.msra.mxu0 %v3847
      %4329 = vmatprep.subr.mxu0 %v3850
      %4330 = vmatpush1.msra.mxu0 %v3849
      %4331 = vmatprep.subr.mxu0 %v3852
      %4332 = vmatpush1.msra.mxu0 %v3851
      %4333 = vmatprep.subr.mxu0 %v3902
      %4334 = vmatpush1.msra.mxu0 %v3901
      %4335 = vmatprep.subr.mxu0 %v3904
      %4336 = vmatpush1.msra.mxu0 %v3903
      %4337 = vmatprep.subr.mxu0 %v3906
      %4338 = vmatpush1.msra.mxu0 %v3905
      %4339 = vmatprep.subr.mxu0 %v3908
      %4340 = vmatpush1.msra.mxu0 %v3907
      %4341 = vmatprep.subr.mxu0 %v3910
      %4342 = vmatpush1.msra.mxu0 %v3909
      %4343 = vmatprep.subr.mxu0 %v3912
      %4344 = vmatpush1.msra.mxu0 %v3911
      %4345 = vmatprep.subr.mxu0 %v3914
      %4346 = vmatpush1.msra.mxu0 %v3913
      %4347 = vmatprep.subr.mxu0 %v3916
      %4348 = vmatpush1.msra.mxu0 %v3915
      %4349 = vmatprep.subr.mxu0 %v3966
      %4350 = vmatpush1.msra.mxu0 %v3965
      %4351 = vmatprep.subr.mxu0 %v3968
      %4352 = vmatpush1.msra.mxu0 %v3967
      %4353 = vmatprep.subr.mxu0 %v3970
      %4354 = vmatpush1.msra.mxu0 %v3969
      %4355 = vmatprep.subr.mxu0 %v3972
      %4356 = vmatpush1.msra.mxu0 %v3971
      %4357 = vmatprep.subr.mxu0 %v3974
      %4358 = vmatpush1.msra.mxu0 %v3973
      %4359 = vmatprep.subr.mxu0 %v3976
      %4360 = vmatpush1.msra.mxu0 %v3975
      %4361 = vmatprep.subr.mxu0 %v3978
      %4362 = vmatpush1.msra.mxu0 %v3977
      %4363 = vmatprep.subr.mxu0 %v3980
      %4364 = vmatpush1.msra.mxu0 %v3979
      %4365 = vmatprep.mubr.f32.mxu0 %v4238
      %4366 = vmatmul.mubr.f32.gmra.mrb[0].mxu0 %v4237
      %v4367 = vpop.f32.mrb[0].mxu0
      %v4368 = vadd.f32 0.0, %v4367
      %v4369 = vpop.f32.mrb[0].mxu0
      %v4370 = vadd.f32 0.0, %v4369
      %4371 = vmatprep.mubr.f32.mxu0 %v4243
      %4372 = vmatmul.mubr.f32.gmra.mrb[0].mxu0 %v4242
      %v4373 = vpop.f32.mrb[0].mxu0
      %v4374 = vadd.f32 0.0, %v4373
      %v4375 = vpop.f32.mrb[0].mxu0
      %v4376 = vadd.f32 0.0, %v4375
      %4377 = vmatprep.mubr.f32.mxu0 %v4248
      %4378 = vmatmul.mubr.f32.gmra.mrb[0].mxu0 %v4247
      %v4379 = vpop.f32.mrb[0].mxu0
      %v4380 = vadd.f32 0.0, %v4379
      %v4381 = vpop.f32.mrb[0].mxu0
      %v4382 = vadd.f32 0.0, %v4381
      %4383 = vmatprep.mubr.f32.mxu0 %v4253
      %4384 = vmatmul.mubr.f32.gmra.mrb[0].mxu0 %v4252
      %v4385 = vpop.f32.mrb[0].mxu0
      %v4386 = vadd.f32 0.0, %v4385
      %v4387 = vpop.f32.mrb[0].mxu0
      %v4388 = vadd.f32 0.0, %v4387
      %4389 = vmatprep.mubr.f32.mxu0 %v4258
      %4390 = vmatmul.mubr.f32.gmra.mrb[0].mxu0 %v4257
      %v4391 = vpop.f32.mrb[0].mxu0
      %v4392 = vadd.f32 0.0, %v4391
      %v4393 = vpop.f32.mrb[0].mxu0
      %v4394 = vadd.f32 0.0, %v4393
      %4395 = vmatprep.mubr.f32.mxu0 %v4263
      %4396 = vmatmul.mubr.f32.gmra.mrb[0].mxu0 %v4262
      %v4397 = vpop.f32.mrb[0].mxu0
      %v4398 = vadd.f32 0.0, %v4397
      %v4399 = vpop.f32.mrb[0].mxu0
      %v4400 = vadd.f32 0.0, %v4399
      %4401 = vmatprep.mubr.f32.mxu0 %v4268
      %4402 = vmatmul.mubr.f32.gmra.mrb[0].mxu0 %v4267
      %v4403 = vpop.f32.mrb[0].mxu0
      %v4404 = vadd.f32 0.0, %v4403
      %v4405 = vpop.f32.mrb[0].mxu0
      %v4406 = vadd.f32 0.0, %v4405
      %4407 = vmatprep.mubr.f32.mxu0 %v4273
      %4408 = vmatmul.mubr.f32.gmra.mrb[0].mxu0 %v4272
      %v4409 = vpop.f32.mrb[0].mxu0
      %v4410 = vadd.f32 0.0, %v4409
      %v4411 = vpop.f32.mrb[0].mxu0
      %v4412 = vadd.f32 0.0, %v4411
      %4413 = vdwg.mxu0
      %4414 = vmatprep.subr.mxu0 %v3710
      %4415 = vmatpush1.msra.mxu0 %v3709
      %4416 = vmatprep.subr.mxu0 %v3712
      %4417 = vmatpush1.msra.mxu0 %v3711
      %4418 = vmatprep.subr.mxu0 %v3714
      %4419 = vmatpush1.msra.mxu0 %v3713
      %4420 = vmatprep.subr.mxu0 %v3716
      %4421 = vmatpush1.msra.mxu0 %v3715
      %4422 = vmatprep.subr.mxu0 %v3718
      %4423 = vmatpush1.msra.mxu0 %v3717
      %4424 = vmatprep.subr.mxu0 %v3720
      %4425 = vmatpush1.msra.mxu0 %v3719
      %4426 = vmatprep.subr.mxu0 %v3722
      %4427 = vmatpush1.msra.mxu0 %v3721
      %4428 = vmatprep.subr.mxu0 %v3724
      %4429 = vmatpush1.msra.mxu0 %v3723
      %4430 = vmatprep.subr.mxu0 %v4030
      %4431 = vmatpush1.msra.mxu0 %v4029
      %4432 = vmatprep.subr.mxu0 %v4032
      %4433 = vmatpush1.msra.mxu0 %v4031
      %4434 = vmatprep.subr.mxu0 %v4034
      %4435 = vmatpush1.msra.mxu0 %v4033
      %4436 = vmatprep.subr.mxu0 %v4036
      %4437 = vmatpush1.msra.mxu0 %v4035
      %4438 = vmatprep.subr.mxu0 %v4038
      %4439 = vmatpush1.msra.mxu0 %v4037
      %4440 = vmatprep.subr.mxu0 %v4040
      %4441 = vmatpush1.msra.mxu0 %v4039
      %4442 = vmatprep.subr.mxu0 %v4042
      %4443 = vmatpush1.msra.mxu0 %v4041
      %4444 = vmatprep.subr.mxu0 %v4044
      %4445 = vmatpush1.msra.mxu0 %v4043
      %4446 = vmatprep.subr.mxu0 %v4094
      %4447 = vmatpush1.msra.mxu0 %v4093
      %4448 = vmatprep.subr.mxu0 %v4096
      %4449 = vmatpush1.msra.mxu0 %v4095
      %4450 = vmatprep.subr.mxu0 %v4098
      %4451 = vmatpush1.msra.mxu0 %v4097
      %4452 = vmatprep.subr.mxu0 %v4100
      %4453 = vmatpush1.msra.mxu0 %v4099
      %4454 = vmatprep.subr.mxu0 %v4102
      %4455 = vmatpush1.msra.mxu0 %v4101
      %4456 = vmatprep.subr.mxu0 %v4104
      %4457 = vmatpush1.msra.mxu0 %v4103
      %4458 = vmatprep.subr.mxu0 %v4106
      %4459 = vmatpush1.msra.mxu0 %v4105
      %4460 = vmatprep.subr.mxu0 %v4108
      %4461 = vmatpush1.msra.mxu0 %v4107
      %4462 = vmatprep.subr.mxu0 %v4158
      %4463 = vmatpush1.msra.mxu0 %v4157
      %4464 = vmatprep.subr.mxu0 %v4160
      %4465 = vmatpush1.msra.mxu0 %v4159
      %4466 = vmatprep.subr.mxu0 %v4162
      %4467 = vmatpush1.msra.mxu0 %v4161
      %4468 = vmatprep.subr.mxu0 %v4164
      %4469 = vmatpush1.msra.mxu0 %v4163
      %4470 = vmatprep.subr.mxu0 %v4166
      %4471 = vmatpush1.msra.mxu0 %v4165
      %4472 = vmatprep.subr.mxu0 %v4168
      %4473 = vmatpush1.msra.mxu0 %v4167
      %4474 = vmatprep.subr.mxu0 %v4170
      %4475 = vmatpush1.msra.mxu0 %v4169
      %4476 = vmatprep.subr.mxu0 %v4172
      %4477 = vmatpush1.msra.mxu0 %v4171
      %4478 = vmatprep.mubr.f32.mxu0 %v4240
      %4479 = vmatmul.mubr.f32.gmra.mrb[0].mxu0 %v4239
      %v4480 = vpop.f32.mrb[0].mxu0
      %v4481 = vadd.f32 %v4368, %v4480
      %v4482 = vpop.f32.mrb[0].mxu0
      %v4483 = vadd.f32 %v4370, %v4482
      %4484 = vmatprep.mubr.f32.mxu0 %v4245
      %4485 = vmatmul.mubr.f32.gmra.mrb[0].mxu0 %v4244
      %v4486 = vpop.f32.mrb[0].mxu0
      %v4487 = vadd.f32 %v4374, %v4486
      %v4488 = vpop.f32.mrb[0].mxu0
      %v4489 = vadd.f32 %v4376, %v4488
      %4490 = vmatprep.mubr.f32.mxu0 %v4250
      %4491 = vmatmul.mubr.f32.gmra.mrb[0].mxu0 %v4249
      %v4492 = vpop.f32.mrb[0].mxu0
      %v4493 = vadd.f32 %v4380, %v4492
      %v4494 = vpop.f32.mrb[0].mxu0
      %v4495 = vadd.f32 %v4382, %v4494
      %4496 = vmatprep.mubr.f32.mxu0 %v4255
      %4497 = vmatmul.mubr.f32.gmra.mrb[0].mxu0 %v4254
      %v4498 = vpop.f32.mrb[0].mxu0
      %v4499 = vadd.f32 %v4386, %v4498
      %v4500 = vpop.f32.mrb[0].mxu0
      %v4501 = vadd.f32 %v4388, %v4500
      %4502 = vmatprep.mubr.f32.mxu0 %v4260
      %4503 = vmatmul.mubr.f32.gmra.mrb[0].mxu0 %v4259
      %v4504 = vpop.f32.mrb[0].mxu0
      %v4505 = vadd.f32 %v4392, %v4504
      %v4506 = vpop.f32.mrb[0].mxu0
      %v4507 = vadd.f32 %v4394, %v4506
      %4508 = vmatprep.mubr.f32.mxu0 %v4265
      %4509 = vmatmul.mubr.f32.gmra.mrb[0].mxu0 %v4264
      %v4510 = vpop.f32.mrb[0].mxu0
      %v4511 = vadd.f32 %v4398, %v4510
      %v4512 = vpop.f32.mrb[0].mxu0
      %v4513 = vadd.f32 %v4400, %v4512
      %4514 = vmatprep.mubr.f32.mxu0 %v4270
      %4515 = vmatmul.mubr.f32.gmra.mrb[0].mxu0 %v4269
      %v4516 = vpop.f32.mrb[0].mxu0
      %v4517 = vadd.f32 %v4404, %v4516
      %v4518 = vpop.f32.mrb[0].mxu0
      %v4519 = vadd.f32 %v4406, %v4518
      %4520 = vmatprep.mubr.f32.mxu0 %v4275
      %4521 = vmatmul.mubr.f32.gmra.mrb[0].mxu0 %v4274
      %v4522 = vpop.f32.mrb[0].mxu0
      %v4523 = vadd.f32 %v4410, %v4522
      %v4524 = vpop.f32.mrb[0].mxu0
      %v4525 = vadd.f32 %v4412, %v4524
      %4526 = vdwg.mxu0
      %4527 = vmatprep.subr.mxu0 %v4222
      %4528 = vmatpush1.msra.mxu0 %v4221
      %4529 = vmatprep.subr.mxu0 %v4224
      %4530 = vmatpush1.msra.mxu0 %v4223
      %4531 = vmatprep.subr.mxu0 %v4226
      %4532 = vmatpush1.msra.mxu0 %v4225
      %4533 = vmatprep.subr.mxu0 %v4228
      %4534 = vmatpush1.msra.mxu0 %v4227
      %4535 = vmatprep.subr.mxu0 %v4230
      %4536 = vmatpush1.msra.mxu0 %v4229
      %4537 = vmatprep.subr.mxu0 %v4232
      %4538 = vmatpush1.msra.mxu0 %v4231
      %4539 = vmatprep.subr.mxu0 %v4234
      %4540 = vmatpush1.msra.mxu0 %v4233
      %4541 = vmatprep.subr.mxu0 %v4236
      %4542 = vmatpush1.msra.mxu0 %v4235
      %4543 = vmatprep.subr.mxu0 0.0
      %4544 = vmatpush1.msra.mxu0 0.0
      %4545 = vmatprep.subr.mxu0 0.0
      %4546 = vmatpush1.msra.mxu0 0.0
      %4547 = vmatprep.subr.mxu0 0.0
      %4548 = vmatpush1.msra.mxu0 0.0
      %4549 = vmatprep.subr.mxu0 0.0
      %4550 = vmatpush1.msra.mxu0 0.0
      %4551 = vmatprep.subr.mxu0 0.0
      %4552 = vmatpush1.msra.mxu0 0.0
      %4553 = vmatprep.subr.mxu0 0.0
      %4554 = vmatpush1.msra.mxu0 0.0
      %4555 = vmatprep.subr.mxu0 0.0
      %4556 = vmatpush1.msra.mxu0 0.0
      %4557 = vmatprep.subr.mxu0 0.0
      %4558 = vmatpush1.msra.mxu0 0.0
      %4559 = vmatprep.subr.mxu0 0.0
      %4560 = vmatpush1.msra.mxu0 0.0
      %4561 = vmatprep.subr.mxu0 0.0
      %4562 = vmatpush1.msra.mxu0 0.0
      %4563 = vmatprep.subr.mxu0 0.0
      %4564 = vmatpush1.msra.mxu0 0.0
      %4565 = vmatprep.subr.mxu0 0.0
      %4566 = vmatpush1.msra.mxu0 0.0
      %4567 = vmatprep.subr.mxu0 0.0
      %4568 = vmatpush1.msra.mxu0 0.0
      %4569 = vmatprep.subr.mxu0 0.0
      %4570 = vmatpush1.msra.mxu0 0.0
      %4571 = vmatprep.subr.mxu0 0.0
      %4572 = vmatpush1.msra.mxu0 0.0
      %4573 = vmatprep.subr.mxu0 0.0
      %4574 = vmatpush1.msra.mxu0 0.0
      %4575 = vmatprep.subr.mxu0 0.0
      %4576 = vmatpush1.msra.mxu0 0.0
      %4577 = vmatprep.subr.mxu0 0.0
      %4578 = vmatpush1.msra.mxu0 0.0
      %4579 = vmatprep.subr.mxu0 0.0
      %4580 = vmatpush1.msra.mxu0 0.0
      %4581 = vmatprep.subr.mxu0 0.0
      %4582 = vmatpush1.msra.mxu0 0.0
      %4583 = vmatprep.subr.mxu0 0.0
      %4584 = vmatpush1.msra.mxu0 0.0
      %4585 = vmatprep.subr.mxu0 0.0
      %4586 = vmatpush1.msra.mxu0 0.0
      %4587 = vmatprep.subr.mxu0 0.0
      %4588 = vmatpush1.msra.mxu0 0.0
      %4589 = vmatprep.subr.mxu0 0.0
      %4590 = vmatpush1.msra.mxu0 0.0
      %4591 = vmatprep.mubr.f32.mxu0 0.0
      %4592 = vmatmul.mubr.f32.gmra.mrb[0].mxu0 %v4278
      %v4593 = vpop.f32.mrb[0].mxu0
      %v4594 = vadd.f32 %v4481, %v4593
      %v4595 = vpop.f32.mrb[0].mxu0
      %v4596 = vadd.f32 %v4483, %v4595
      %4597 = vmatprep.mubr.f32.mxu0 0.0
      %4598 = vmatmul.mubr.f32.gmra.mrb[0].mxu0 %v4281
      %v4599 = vpop.f32.mrb[0].mxu0
      %v4600 = vadd.f32 %v4487, %v4599
      %v4601 = vpop.f32.mrb[0].mxu0
      %v4602 = vadd.f32 %v4489, %v4601
      %4603 = vmatprep.mubr.f32.mxu0 0.0
      %4604 = vmatmul.mubr.f32.gmra.mrb[0].mxu0 %v4284
      %v4605 = vpop.f32.mrb[0].mxu0
      %v4606 = vadd.f32 %v4493, %v4605
      %v4607 = vpop.f32.mrb[0].mxu0
      %v4608 = vadd.f32 %v4495, %v4607
      %4609 = vmatprep.mubr.f32.mxu0 0.0
      %4610 = vmatmul.mubr.f32.gmra.mrb[0].mxu0 %v4287
      %v4611 = vpop.f32.mrb[0].mxu0
      %v4612 = vadd.f32 %v4499, %v4611
      %v4613 = vpop.f32.mrb[0].mxu0
      %v4614 = vadd.f32 %v4501, %v4613
      %4615 = vmatprep.mubr.f32.mxu0 0.0
      %4616 = vmatmul.mubr.f32.gmra.mrb[0].mxu0 %v4290
      %v4617 = vpop.f32.mrb[0].mxu0
      %v4618 = vadd.f32 %v4505, %v4617
      %v4619 = vpop.f32.mrb[0].mxu0
      %v4620 = vadd.f32 %v4507, %v4619
      %4621 = vmatprep.mubr.f32.mxu0 0.0
      %4622 = vmatmul.mubr.f32.gmra.mrb[0].mxu0 %v4293
      %v4623 = vpop.f32.mrb[0].mxu0
      %v4624 = vadd.f32 %v4511, %v4623
      %v4625 = vpop.f32.mrb[0].mxu0
      %v4626 = vadd.f32 %v4513, %v4625
      %4627 = vmatprep.mubr.f32.mxu0 0.0
      %4628 = vmatmul.mubr.f32.gmra.mrb[0].mxu0 %v4296
      %v4629 = vpop.f32.mrb[0].mxu0
      %v4630 = vadd.f32 %v4517, %v4629
      %v4631 = vpop.f32.mrb[0].mxu0
      %v4632 = vadd.f32 %v4519, %v4631
      %4633 = vmatprep.mubr.f32.mxu0 0.0
      %4634 = vmatmul.mubr.f32.gmra.mrb[0].mxu0 %v4299
      %v4635 = vpop.f32.mrb[0].mxu0
      %v4636 = vadd.f32 %v4523, %v4635
      %v4637 = vpop.f32.mrb[0].mxu0
      %v4638 = vadd.f32 %v4525, %v4637
      %4639 = vdwg.mxu0
      %v4640 = vmul.f32 %v4594, 0.5
      %v4641 = vmul.f32 %v4596, 0.5
      %v4642 = vmul.f32 %v4600, 0.5
      %v4643 = vmul.f32 %v4602, 0.5
      %v4644 = vmul.f32 %v4606, 0.5
      %v4645 = vmul.f32 %v4608, 0.5
      %v4646 = vmul.f32 %v4612, 0.5
      %v4647 = vmul.f32 %v4614, 0.5
      %v4648 = vmul.f32 %v4618, 0.5
      %v4649 = vmul.f32 %v4620, 0.5
      %v4650 = vmul.f32 %v4624, 0.5
      %v4651 = vmul.f32 %v4626, 0.5
      %v4652 = vmul.f32 %v4630, 0.5
      %v4653 = vmul.f32 %v4632, 0.5
      %v4654 = vmul.f32 %v4636, 0.5
      %v4655 = vmul.f32 %v4638, 0.5
      %v4656 = vmul.f32 %v4594, 0.70710677
      %v4657 = vmul.f32 %v4596, 0.70710677
      %v4658 = vmul.f32 %v4600, 0.70710677
      %v4659 = vmul.f32 %v4602, 0.70710677
      %v4660 = vmul.f32 %v4606, 0.70710677
      %v4661 = vmul.f32 %v4608, 0.70710677
      %v4662 = vmul.f32 %v4612, 0.70710677
      %v4663 = vmul.f32 %v4614, 0.70710677
      %v4664 = vmul.f32 %v4618, 0.70710677
      %v4665 = vmul.f32 %v4620, 0.70710677
      %v4666 = vmul.f32 %v4624, 0.70710677
      %v4667 = vmul.f32 %v4626, 0.70710677
      %v4668 = vmul.f32 %v4630, 0.70710677
      %v4669 = vmul.f32 %v4632, 0.70710677
      %v4670 = vmul.f32 %v4636, 0.70710677
      %v4671 = vmul.f32 %v4638, 0.70710677
      %v4672 = verf.f32.pop %v4656
      %v4673 = verf.f32.pop %v4657
      %v4674 = verf.f32.pop %v4658
      %v4675 = verf.f32.pop %v4659
      %v4676 = verf.f32.pop %v4660
      %v4677 = verf.f32.pop %v4661
      %v4678 = verf.f32.pop %v4662
      %v4679 = verf.f32.pop %v4663
      %v4680 = verf.f32.pop %v4664
      %v4681 = verf.f32.pop %v4665
      %v4682 = verf.f32.pop %v4666
      %v4683 = verf.f32.pop %v4667
      %v4684 = verf.f32.pop %v4668
      %v4685 = verf.f32.pop %v4669
      %v4686 = verf.f32.pop %v4670
      %v4687 = verf.f32.pop %v4671
      %v4688 = vadd.f32 %v4672, 1.0
      %v4689 = vadd.f32 %v4673, 1.0
      %v4690 = vadd.f32 %v4674, 1.0
      %v4691 = vadd.f32 %v4675, 1.0
      %v4692 = vadd.f32 %v4676, 1.0
      %v4693 = vadd.f32 %v4677, 1.0
      %v4694 = vadd.f32 %v4678, 1.0
      %v4695 = vadd.f32 %v4679, 1.0
      %v4696 = vadd.f32 %v4680, 1.0
      %v4697 = vadd.f32 %v4681, 1.0
      %v4698 = vadd.f32 %v4682, 1.0
      %v4699 = vadd.f32 %v4683, 1.0
      %v4700 = vadd.f32 %v4684, 1.0
      %v4701 = vadd.f32 %v4685, 1.0
      %v4702 = vadd.f32 %v4686, 1.0
      %v4703 = vadd.f32 %v4687, 1.0
      %v4704 = vmul.f32 %v4640, %v4688
      %v4705 = vmul.f32 %v4641, %v4689
      %v4706 = vmul.f32 %v4642, %v4690
      %v4707 = vmul.f32 %v4643, %v4691
      %v4708 = vmul.f32 %v4644, %v4692
      %v4709 = vmul.f32 %v4645, %v4693
      %v4710 = vmul.f32 %v4646, %v4694
      %v4711 = vmul.f32 %v4647, %v4695
      %v4712 = vmul.f32 %v4648, %v4696
      %v4713 = vmul.f32 %v4649, %v4697
      %v4714 = vmul.f32 %v4650, %v4698
      %v4715 = vmul.f32 %v4651, %v4699
      %v4716 = vmul.f32 %v4652, %v4700
      %v4717 = vmul.f32 %v4653, %v4701
      %v4718 = vmul.f32 %v4654, %v4702
      %v4719 = vmul.f32 %v4655, %v4703
      %v4720 = vld [vmem:[%s8] sm:$0xff]
      %v4721 = vld [vmem:[%s8 + $0x8] sm:$0xff]
      %v4722 = vld [vmem:[%s8 + $0x10] sm:$0xff]
      %v4723 = vld [vmem:[%s8 + $0x18] sm:$0xff]
      %v4724 = vld [vmem:[%s8 + $0x20] sm:$0xff]
      %v4725 = vld [vmem:[%s8 + $0x28] sm:$0xff]
      %v4726 = vld [vmem:[%s8 + $0x30] sm:$0xff]
      %v4727 = vld [vmem:[%s8 + $0x38] sm:$0xff]
      %4729 = vset.pattern.permute.xlu0 0
      %4730 = vperm.xlu0 %4729, %v4720
      %v4731 = vpop.permute.xlu0 %4730
      %4734 = vset.pattern.permute.xlu0 0
      %4735 = vperm.xlu0 %4734, %v4721
      %v4736 = vpop.permute.xlu0 %4735
      %4739 = vset.pattern.permute.xlu0 0
      %4740 = vperm.xlu0 %4739, %v4722
      %v4741 = vpop.permute.xlu0 %4740
      %4744 = vset.pattern.permute.xlu0 0
      %4745 = vperm.xlu0 %4744, %v4723
      %v4746 = vpop.permute.xlu0 %4745
      %4749 = vset.pattern.permute.xlu0 0
      %4750 = vperm.xlu0 %4749, %v4724
      %v4751 = vpop.permute.xlu0 %4750
      %4754 = vset.pattern.permute.xlu0 0
      %4755 = vperm.xlu0 %4754, %v4725
      %v4756 = vpop.permute.xlu0 %4755
      %4759 = vset.pattern.permute.xlu0 0
      %4760 = vperm.xlu0 %4759, %v4726
      %v4761 = vpop.permute.xlu0 %4760
      %4764 = vset.pattern.permute.xlu0 0
      %4765 = vperm.xlu0 %4764, %v4727
      %v4766 = vpop.permute.xlu0 %4765
      %v4768 = vmul.f32 %v4704, %v4731
      %v4769 = vmul.f32 %v4705, %v4731
      %v4770 = vmul.f32 %v4706, %v4736
      %v4771 = vmul.f32 %v4707, %v4736
      %v4772 = vmul.f32 %v4708, %v4741
      %v4773 = vmul.f32 %v4709, %v4741
      %v4774 = vmul.f32 %v4710, %v4746
      %v4775 = vmul.f32 %v4711, %v4746
      %v4776 = vmul.f32 %v4712, %v4751
      %v4777 = vmul.f32 %v4713, %v4751
      %v4778 = vmul.f32 %v4714, %v4756
      %v4779 = vmul.f32 %v4715, %v4756
      %v4780 = vmul.f32 %v4716, %v4761
      %v4781 = vmul.f32 %v4717, %v4761
      %v4782 = vmul.f32 %v4718, %v4766
      %v4783 = vmul.f32 %v4719, %v4766
      %v4784 = vld [vmem:[%s9] sm:$0xff]
      %v4785 = vld [vmem:[%s9 + $0x8] sm:$0xff]
      %v4786 = vld [vmem:[%s9 + $0x10] sm:$0xff]
      %v4787 = vld [vmem:[%s9 + $0x18] sm:$0xff]
      %v4788 = vld [vmem:[%s9 + $0x20] sm:$0xff]
      %v4789 = vld [vmem:[%s9 + $0x28] sm:$0xff]
      %v4790 = vld [vmem:[%s9 + $0x30] sm:$0xff]
      %v4791 = vld [vmem:[%s9 + $0x38] sm:$0xff]
      %4793 = vset.pattern.permute.xlu0 0
      %4794 = vperm.xlu0 %4793, %v4784
      %v4795 = vpop.permute.xlu0 %4794
      %4798 = vset.pattern.permute.xlu0 0
      %4799 = vperm.xlu0 %4798, %v4785
      %v4800 = vpop.permute.xlu0 %4799
      %4803 = vset.pattern.permute.xlu0 0
      %4804 = vperm.xlu0 %4803, %v4786
      %v4805 = vpop.permute.xlu0 %4804
      %4808 = vset.pattern.permute.xlu0 0
      %4809 = vperm.xlu0 %4808, %v4787
      %v4810 = vpop.permute.xlu0 %4809
      %4813 = vset.pattern.permute.xlu0 0
      %4814 = vperm.xlu0 %4813, %v4788
      %v4815 = vpop.permute.xlu0 %4814
      %4818 = vset.pattern.permute.xlu0 0
      %4819 = vperm.xlu0 %4818, %v4789
      %v4820 = vpop.permute.xlu0 %4819
      %4823 = vset.pattern.permute.xlu0 0
      %4824 = vperm.xlu0 %4823, %v4790
      %v4825 = vpop.permute.xlu0 %4824
      %4828 = vset.pattern.permute.xlu0 0
      %4829 = vperm.xlu0 %4828, %v4791
      %v4830 = vpop.permute.xlu0 %4829
      %v4832 = vadd.f32 %v4768, %v4795
      %v4833 = vadd.f32 %v4769, %v4795
      %v4834 = vadd.f32 %v4770, %v4800
      %v4835 = vadd.f32 %v4771, %v4800
      %v4836 = vadd.f32 %v4772, %v4805
      %v4837 = vadd.f32 %v4773, %v4805
      %v4838 = vadd.f32 %v4774, %v4810
      %v4839 = vadd.f32 %v4775, %v4810
      %v4840 = vadd.f32 %v4776, %v4815
      %v4841 = vadd.f32 %v4777, %v4815
      %v4842 = vadd.f32 %v4778, %v4820
      %v4843 = vadd.f32 %v4779, %v4820
      %v4844 = vadd.f32 %v4780, %v4825
      %v4845 = vadd.f32 %v4781, %v4825
      %v4846 = vadd.f32 %v4782, %v4830
      %v4847 = vadd.f32 %v4783, %v4830
      %v4848 = vadd.f32 %v4832, %v1728
      %v4849 = vadd.f32 %v4833, %v1729
      %v4850 = vadd.f32 %v4834, %v1730
      %v4851 = vadd.f32 %v4835, %v1731
      %v4852 = vadd.f32 %v4836, %v1732
      %v4853 = vadd.f32 %v4837, %v1733
      %v4854 = vadd.f32 %v4838, %v1734
      %v4855 = vadd.f32 %v4839, %v1735
      %v4856 = vadd.f32 %v4840, %v1736
      %v4857 = vadd.f32 %v4841, %v1737
      %v4858 = vadd.f32 %v4842, %v1738
      %v4859 = vadd.f32 %v4843, %v1739
      %v4860 = vadd.f32 %v4844, %v1740
      %v4861 = vadd.f32 %v4845, %v1741
      %v4862 = vadd.f32 %v4846, %v1742
      %v4863 = vadd.f32 %v4847, %v1743
      %4864 = vst [vmem:[%s413] sm:$0xff] %v4848
      %4865 = vst [vmem:[%s413 + $0x8] sm:$0xff] %v4849
      %4866 = vst [vmem:[%s413 + $0x10] sm:$0xff] %v4850
      %4867 = vst [vmem:[%s413 + $0x18] sm:$0xff] %v4851
      %4868 = vst [vmem:[%s413 + $0x20] sm:$0xff] %v4852
      %4869 = vst [vmem:[%s413 + $0x28] sm:$0xff] %v4853
      %4870 = vst [vmem:[%s413 + $0x30] sm:$0xff] %v4854
      %4871 = vst [vmem:[%s413 + $0x38] sm:$0xff] %v4855
      %4872 = vst [vmem:[%s413 + $0x40] sm:$0xff] %v4856
      %4873 = vst [vmem:[%s413 + $0x48] sm:$0xff] %v4857
      %4874 = vst [vmem:[%s413 + $0x50] sm:$0xff] %v4858
      %4875 = vst [vmem:[%s413 + $0x58] sm:$0xff] %v4859
      %4876 = vst [vmem:[%s413 + $0x60] sm:$0xff] %v4860
      %4877 = vst [vmem:[%s413 + $0x68] sm:$0xff] %v4861
      %4878 = vst [vmem:[%s413 + $0x70] sm:$0xff] %v4862
      %4879 = vst [vmem:[%s413 + $0x78] sm:$0xff] %v4863
      %p4880 = scmp.lt.s32.totalorder %s23, 1
      %s4881 = scalar_select %p4880, %s23, 1
      %s4882 = smul.addr %s4881, 16
      %s4883 = smul.addr %s4882, 8
      %s4884 = scalar_lea.vmem %s12, %s4883
      // Predicated region
      $region69: #{attn_ffn_forward.1} parent=67 // pred_check
        %p4885 = pneg %p298
      $region70: #{attn_ffn_forward.1} parent=67 // pred_check_branch
        %4887 = sbr.rel (%p4885) target = $region72
      $region71: #{attn_ffn_forward.1} parent=67 // pred_region
        _
      $region72: #{attn_ffn_forward.1} parent=67 // pred_fallthru
        _
    $region68: #{attn_ffn_forward.1} parent=5 // pred_fallthru
      _
    %p4888 = scmp.le.s32.totalorder 2, %s18
    // Predicated region
    $region73: #{attn_ffn_forward.1} parent=5 // pred_check
      %p4889 = pneg %p4888
    $region74: #{attn_ffn_forward.1} parent=5 // pred_check_branch
      %4891 = sbr.rel (%p4889) target = $region76
    $region75: #{attn_ffn_forward.1} parent=5 // pred_region
      %s4892 = ssub.s32 %s18, 2
      // Predicated region
      $region77: #{attn_ffn_forward.1} parent=75 // pred_check
        %p4893 = pneg %p304
      $region78: #{attn_ffn_forward.1} parent=75 // pred_check_branch
        %4895 = sbr.rel (%p4893) target = $region80
      $region79: #{attn_ffn_forward.1} parent=75 // pred_region
        %p4896 = scmp.lt.s32.totalorder %s24, 1
        %s4897 = scalar_select %p4896, %s24, 1
        %s4898 = smul.addr %s4897, 16
        %s4899 = smul.addr %s4898, 8
        %s4900 = scalar_lea.vmem %s12, %s4899
      $region80: #{attn_ffn_forward.1} parent=75 // pred_fallthru
        _
    $region76: #{attn_ffn_forward.1} parent=5 // pred_fallthru
      _
  $region6: #{attn_ffn_forward.1} parent=0 // loop_footer
    %s22 = sadd.s32 1, %s18
  $region7: #{attn_ffn_forward.1} parent=0 // loop_footer_branch
    %17 = sbr.rel target = $region3
  $region8: #{attn_ffn_forward.1} parent=0 // loop_exit
    _

</llo_original>
